<compile_context>
chip_gen: v7x
topology: tpu7x:2x2x1
jax: 0.10.0
libtpu: 0.0.40
codegen_flags: <defaults>
</compile_context>

<pallas_src>
import jax
import jax.numpy as jnp
from jax.experimental import pallas as pl
from jax.experimental.pallas import tpu as pltpu


# ----------------------------------------------------------------------------
# Fused kernel: conv1+pool+relu, conv2+pool+relu, fc1+relu, fc2, log_softmax.
# Single program (no grid), all operands resident in VMEM, no scratch.
# ----------------------------------------------------------------------------
def _net_kernel(x_ref, s1_ref, s2_ref, k1_ref, k2_ref, wfc_ref, bias_ref, o_ref):
    f32, bf16 = jnp.float32, jnp.bfloat16
    B = o_ref.shape[0]
    bias = bias_ref[...]                                    # (4, 128) f32

    # ---- stage 1: conv1(5x5) + 2x2 max-pool + relu, all on the MXU ----------
    # One selection matmul gathers, for every (kh, pool-height-offset p) pair,
    # the input rows 2*oh1 + p + kh of every image -> 10 groups of B*12 rows.
    x1 = x_ref[...].astype(bf16)                            # (B*28, 28)
    y1 = jnp.dot(s1_ref[...], x1, preferred_element_type=f32)   # (10*B*12, 28)
    n1 = B * 12
    z1 = [jnp.zeros((n1, 256), f32), jnp.zeros((n1, 256), f32)]
    for kh in range(5):
        k1_kh = k1_ref[kh]                                  # (28, 256) bf16
        for p in range(2):
            g = 2 * kh + p
            lhs = y1[g * n1:(g + 1) * n1, :].astype(bf16)   # 8-sublane-aligned slice
            z1[p] = z1[p] + jnp.dot(lhs, k1_kh, preferred_element_type=f32)
    # 2x2 pool = max over the height offset p and over the even/odd output
    # column halves (lane blocks 0:128 / 128:256); pad lanes stay exactly 0.
    zp1 = jnp.maximum(jnp.maximum(z1[0][:, :128], z1[0][:, 128:]),
                      jnp.maximum(z1[1][:, :128], z1[1][:, 128:]))
    a1 = jnp.maximum(zp1 + bias[0:1, :], 0.0)               # (B*12,128) rows=(b,h1) lanes=(c1,w1)

    # ---- stage 2: conv2(5x5) + 2x2 max-pool + relu --------------------------
    # TODO(synk): nn.Dropout2d after conv2 is identity (eval mode); stochastic
    # training-mode dropout is not implemented.
    # The selection also re-orders pooled output rows into 8-row h2 groups
    # (rows h2*8 + b, zero rows past b=B) so the fc1 stage needs no flatten.
    y2 = jnp.dot(s2_ref[...], a1.astype(bf16),
                 preferred_element_type=f32)                # (10*32, 128)
    z2 = [jnp.zeros((32, 256), f32), jnp.zeros((32, 256), f32)]
    for kh in range(5):
        k2_kh = k2_ref[kh]                                  # (128, 256) bf16
        for p in range(2):
            g = 2 * kh + p
            lhs = y2[g * 32:(g + 1) * 32, :].astype(bf16)
            z2[p] = z2[p] + jnp.dot(lhs, k2_kh, preferred_element_type=f32)
    zp2 = jnp.maximum(jnp.maximum(z2[0][:, :128], z2[0][:, 128:]),
                      jnp.maximum(z2[1][:, :128], z2[1][:, 128:]))
    a2 = jnp.maximum(zp2 + bias[1:2, :], 0.0)               # (32,128) rows=h2*8+b lanes=(c2,w2)

    # ---- stage 3: flatten(320) -> fc1 -> relu -> fc2 -> log_softmax ---------
    # torch's x.view(-1, 320) == sum over the 4 pooled rows h2 of per-h2 fc1
    # weight blocks; a2's rows are already grouped by h2 (8-row aligned).
    h = jnp.zeros((8, 128), f32)
    for h2 in range(4):
        h = h + jnp.dot(a2[h2 * 8:(h2 + 1) * 8, :].astype(bf16), wfc_ref[h2],
                        preferred_element_type=f32)
    h = jnp.maximum(h + bias[2:3, :], 0.0)                  # (8,128); rows >= B unused
    # TODO(synk): F.dropout before fc2 is identity (eval mode).
    logits = (jnp.dot(h.astype(bf16), wfc_ref[4], preferred_element_type=f32)
              + bias[3:4, :])[0:B, 0:10]                    # (B, 10)
    m = jnp.max(logits, axis=-1, keepdims=True)
    lse = m + jnp.log(jnp.sum(jnp.exp(logits - m), axis=-1, keepdims=True))
    o_ref[...] = logits - lse                               # log_softmax(dim=1)


# ----------------------------------------------------------------------------
# One-time parameter preparation (hoisted out of the forward pass).
# ----------------------------------------------------------------------------
def prepare_params(params, batch_size):
    f32, bf16 = jnp.float32, jnp.bfloat16
    B = batch_size
    assert 1 <= B <= 8, "this single-program variant packs the batch into 8-row groups"

    # conv1 -> per-kh Toeplitz blocks, even/odd pooled output columns fused:
    #   k1[kh, w, co*12+ow1]     = conv1_w[co,0,kh, w - 2*ow1]        (even)
    #   k1[kh, w, 128+co*12+ow1] = conv1_w[co,0,kh, w - (2*ow1 + 1)]  (odd)
    w_i = jnp.arange(28)[:, None]
    ow1 = jnp.arange(12)[None, :]
    wc1 = params["conv1_w"][:, 0]                            # (10, 5, 5)

    def toeplitz1(off):
        kw = w_i - (2 * ow1 + off)                           # (28, 12)
        t = wc1[:, :, jnp.clip(kw, 0, 4)] * ((kw >= 0) & (kw <= 4))[None, None]
        t = t.transpose(1, 2, 0, 3).reshape(5, 28, 120)      # (kh, w, co*12+ow1)
        return jnp.pad(t, ((0, 0), (0, 0), (0, 8)))          # 120 -> 128 lanes
    k1 = jnp.concatenate([toeplitz1(0), toeplitz1(1)], axis=-1).astype(bf16)   # (5,28,256)

    # conv2 -> per-kh Toeplitz blocks over the (ci, w1) lane layout:
    #   k2[kh, ci*12+w1, co*4+ow2 (+128 odd)] = conv2_w[co,ci,kh, w1-(2*ow2+off)]
    w1_i = jnp.arange(12)[:, None]
    ow2 = jnp.arange(4)[None, :]
    wc2 = params["conv2_w"]                                  # (20, 10, 5, 5)

    def toeplitz2(off):
        kw = w1_i - (2 * ow2 + off)                          # (12, 4)
        t = wc2[:, :, :, jnp.clip(kw, 0, 4)] * ((kw >= 0) & (kw <= 4))[None, None, None]
        t = t.transpose(2, 1, 3, 0, 4).reshape(5, 120, 80)   # (kh, ci*12+w1, co*4+ow2)
        return jnp.pad(t, ((0, 0), (0, 8), (0, 48)))         # (5, 128, 128)
    k2 = jnp.concatenate([toeplitz2(0), toeplitz2(1)], axis=-1).astype(bf16)   # (5,128,256)

    # 0/1 row-selection matrices (exact in bf16).
    # s1: group g = 2*kh + p; row g*(B*12) + b*12 + oh1 selects image-stack
    #     row b*28 + 2*oh1 + p + kh.
    r = jnp.arange(10 * B * 12)
    g, rr = r // (B * 12), r % (B * 12)
    cols = (rr // 12) * 28 + 2 * (rr % 12) + (g % 2) + (g // 2)
    s1 = (jnp.arange(B * 28)[None, :] == cols[:, None]).astype(bf16)   # (10*B*12, B*28)

    # s2: row g*32 + h2*8 + b selects a1 row b*12 + 2*h2 + p + kh (zero row for
    #     b >= B) -- the 8-row h2 grouping feeds the flatten-free fc1 stage.
    r = jnp.arange(10 * 32)
    g, rr = r // 32, r % 32
    h2_i, b_i = rr // 8, rr % 8
    cols = jnp.where(b_i < B, b_i * 12 + 2 * h2_i + (g % 2) + (g // 2), -1)
    s2 = (jnp.arange(B * 12)[None, :] == cols[:, None]).astype(bf16)   # (320, B*12)

    # fc weights: per-h2 fc1 blocks + padded fc2, stacked into one array.
    #   wfc[h2, c2*4+w2, j] = fc1_w[j, c2*16 + h2*4 + w2];  wfc[4] = fc2_w.T (padded)
    w1 = params["fc1_w"].reshape(50, 20, 4, 4).transpose(2, 1, 3, 0).reshape(4, 80, 50)
    w1 = jnp.pad(w1, ((0, 0), (0, 48), (0, 78)))             # (4, 128, 128)
    w2 = jnp.pad(params["fc2_w"].T, ((0, 78), (0, 118)))[None]   # (1, 128, 128)
    wfc = jnp.concatenate([w1, w2], axis=0).astype(bf16)     # (5, 128, 128)

    # Biases, broadcast over the pooled width and lane-padded, stacked.
    bias = jnp.stack([
        jnp.pad(jnp.repeat(params["conv1_b"], 12), (0, 8)),
        jnp.pad(jnp.repeat(params["conv2_b"], 4), (0, 48)),
        jnp.pad(params["fc1_b"], (0, 78)),
        jnp.pad(params["fc2_b"], (0, 118)),
    ]).astype(f32)                                           # (4, 128)

    return dict(s1=s1, s2=s2, k1=k1, k2=k2, wfc=wfc, bias=bias)


# ----------------------------------------------------------------------------
# Forward wrapper: single fused pallas_call, 7 input DMAs, no grid/scratch.
# ----------------------------------------------------------------------------
def _net_forward_impl(x_nchw, prep):
    B = x_nchw.shape[0]
    assert x_nchw.shape[1:] == (1, 28, 28)   # forced by .view(-1, 320)
    x2d = x_nchw.reshape(B * 28, 28)         # pure layout plumbing outside the kernel
    vmem = pl.BlockSpec(memory_space=pltpu.MemorySpace.VMEM)
    return pl.pallas_call(
        _net_kernel,
        out_shape=jax.ShapeDtypeStruct((B, 10), jnp.float32),
        in_specs=[vmem] * 7,
        out_specs=vmem,
    )(x2d, prep["s1"], prep["s2"], prep["k1"], prep["k2"], prep["wfc"], prep["bias"])


net_forward = jax.jit(_net_forward_impl)


# ----------------------------------------------------------------------------
# Deterministic parameters (same shapes as the PyTorch module).
# ----------------------------------------------------------------------------
def init_params(key):
    ks = jax.random.split(key, 8)
    s = 0.1
    return {
        "conv1_w": s * jax.random.normal(ks[0], (10, 1, 5, 5), jnp.float32),
        "conv1_b": s * jax.random.normal(ks[1], (10,), jnp.float32),
        "conv2_w": s * jax.random.normal(ks[2], (20, 10, 5, 5), jnp.float32),
        "conv2_b": s * jax.random.normal(ks[3], (20,), jnp.float32),
        "fc1_w":   s * jax.random.normal(ks[4], (50, 320), jnp.float32),
        "fc1_b":   s * jax.random.normal(ks[5], (50,), jnp.float32),
        "fc2_w":   s * jax.random.normal(ks[6], (10, 50), jnp.float32),
        "fc2_b":   s * jax.random.normal(ks[7], (10,), jnp.float32),
    }


# Pure-JAX reference (eval mode), used only to validate the kernel output.
def reference_forward(x, params):
    hi = jax.lax.Precision.HIGHEST
    y = jax.lax.conv_general_dilated(
        x, params["conv1_w"], (1, 1), "VALID",
        dimension_numbers=("NCHW", "OIHW", "NCHW"), precision=hi)
    y = y + params["conv1_b"][None, :, None, None]
    y = jax.lax.reduce_window(y, -jnp.inf, jax.lax.max,
                              (1, 1, 2, 2), (1, 1, 2, 2), "VALID")
    y = jnp.maximum(y, 0.0)
    y = jax.lax.conv_general_dilated(
        y, params["conv2_w"], (1, 1), "VALID",
        dimension_numbers=("NCHW", "OIHW", "NCHW"), precision=hi)
    y = y + params["conv2_b"][None, :, None, None]
    y = jax.lax.reduce_window(y, -jnp.inf, jax.lax.max,
                              (1, 1, 2, 2), (1, 1, 2, 2), "VALID")
    y = jnp.maximum(y, 0.0)
    feat = y.reshape(y.shape[0], 320)
    h = jnp.maximum(jnp.dot(feat, params["fc1_w"].T, precision=hi)
                    + params["fc1_b"], 0.0)
    logits = jnp.dot(h, params["fc2_w"].T, precision=hi) + params["fc2_b"]
    return jax.nn.log_softmax(logits, axis=-1)


if __name__ == "__main__":
    key = jax.random.PRNGKey(0)
    k_x, k_p = jax.random.split(key)
    x = jax.random.normal(k_x, (2, 1, 28, 28), jnp.float32)    # batch = 2
    params = init_params(k_p)
    prep = prepare_params(params, batch_size=2)                # one-time prep

    out = jax.block_until_ready(net_forward(x, prep))

    assert out.shape == (2, 10)
    # log_softmax rows must exponentiate-sum to ~1
    assert bool(jnp.all(jnp.abs(jnp.sum(jnp.exp(out), axis=-1) - 1.0) < 1e-4))
    # parity with a pure-JAX f32 reference (kernel uses bf16 MXU operands with
    # f32 accumulation, so allow a small absolute tolerance on the log-probs)
    ref = jax.jit(reference_forward)(x, params)
    assert bool(jnp.max(jnp.abs(out - ref)) < 2e-2)
    print("KERNEL_OK")
</pallas_src>

<mosaic_0001>
module attributes {stable_mosaic.version = 11 : i64} {
  func.func @_net_kernel(%arg0: memref<56x28xf32, #tpu.memory_space<vmem>>, %arg1: memref<240x56xbf16, #tpu.memory_space<vmem>>, %arg2: memref<320x24xbf16, #tpu.memory_space<vmem>>, %arg3: memref<5x28x256xbf16, #tpu.memory_space<vmem>>, %arg4: memref<5x128x256xbf16, #tpu.memory_space<vmem>>, %arg5: memref<5x128x128xbf16, #tpu.memory_space<vmem>>, %arg6: memref<4x128xf32, #tpu.memory_space<vmem>>, %arg7: memref<2x10xf32, #tpu.memory_space<vmem>>) attributes {dimension_semantics = [], scalar_prefetch = 0 : i64, scratch_operands = 0 : i64, tpu.core_type = #tpu.core_type<tc>} {
    %c0 = arith.constant 0 : index
    %c0_0 = arith.constant 0 : index
    %0 = vector.load %arg6[%c0, %c0_0] : memref<4x128xf32, #tpu.memory_space<vmem>>, vector<4x128xf32>
    %c0_1 = arith.constant 0 : index
    %c0_2 = arith.constant 0 : index
    %1 = vector.load %arg0[%c0_1, %c0_2] : memref<56x28xf32, #tpu.memory_space<vmem>>, vector<56x28xf32>
    %2 = arith.truncf %1 : vector<56x28xf32> to vector<56x28xbf16>
    %c0_3 = arith.constant 0 : index
    %c0_4 = arith.constant 0 : index
    %3 = vector.load %arg1[%c0_3, %c0_4] : memref<240x56xbf16, #tpu.memory_space<vmem>>, vector<240x56xbf16>
    %cst = arith.constant dense<0.000000e+00> : vector<240x28xf32>
    %4 = tpu.matmul %3, %2, %cst {dimension_numbers = #tpu.dot_dimension_numbers<[1], [0], [0], [1], [0, 0, 1, 1], [], []>} : vector<240x56xbf16>, vector<56x28xbf16>, vector<240x28xf32> -> vector<240x28xf32>
    %cst_5 = arith.constant 0.000000e+00 : f32
    %5 = vector.broadcast %cst_5 : f32 to vector<24x256xf32>
    %cst_6 = arith.constant 0.000000e+00 : f32
    %6 = vector.broadcast %cst_6 : f32 to vector<24x256xf32>
    %c0_7 = arith.constant 0 : index
    %c0_8 = arith.constant 0 : index
    %c0_9 = arith.constant 0 : index
    %7 = vector.load %arg3[%c0_7, %c0_8, %c0_9] : memref<5x28x256xbf16, #tpu.memory_space<vmem>>, vector<1x28x256xbf16>
    %8 = vector.shape_cast %7 : vector<1x28x256xbf16> to vector<28x256xbf16>
    %9 = vector.extract_strided_slice %4 {offsets = [0, 0], sizes = [24, 28], strides = [1, 1]} : vector<240x28xf32> to vector<24x28xf32>
    %10 = arith.truncf %9 : vector<24x28xf32> to vector<24x28xbf16>
    %cst_10 = arith.constant dense<0.000000e+00> : vector<24x256xf32>
    %11 = tpu.matmul %10, %8, %cst_10 {dimension_numbers = #tpu.dot_dimension_numbers<[1], [0], [0], [1], [0, 0, 1, 1], [], []>} : vector<24x28xbf16>, vector<28x256xbf16>, vector<24x256xf32> -> vector<24x256xf32>
    %12 = arith.addf %5, %11 : vector<24x256xf32>
    %13 = vector.extract_strided_slice %4 {offsets = [24, 0], sizes = [24, 28], strides = [1, 1]} : vector<240x28xf32> to vector<24x28xf32>
    %14 = arith.truncf %13 : vector<24x28xf32> to vector<24x28xbf16>
    %cst_11 = arith.constant dense<0.000000e+00> : vector<24x256xf32>
    %15 = tpu.matmul %14, %8, %cst_11 {dimension_numbers = #tpu.dot_dimension_numbers<[1], [0], [0], [1], [0, 0, 1, 1], [], []>} : vector<24x28xbf16>, vector<28x256xbf16>, vector<24x256xf32> -> vector<24x256xf32>
    %16 = arith.addf %6, %15 : vector<24x256xf32>
    %c1 = arith.constant 1 : index
    %c0_12 = arith.constant 0 : index
    %c0_13 = arith.constant 0 : index
    %17 = vector.load %arg3[%c1, %c0_12, %c0_13] : memref<5x28x256xbf16, #tpu.memory_space<vmem>>, vector<1x28x256xbf16>
    %18 = vector.shape_cast %17 : vector<1x28x256xbf16> to vector<28x256xbf16>
    %19 = vector.extract_strided_slice %4 {offsets = [48, 0], sizes = [24, 28], strides = [1, 1]} : vector<240x28xf32> to vector<24x28xf32>
    %20 = arith.truncf %19 : vector<24x28xf32> to vector<24x28xbf16>
    %cst_14 = arith.constant dense<0.000000e+00> : vector<24x256xf32>
    %21 = tpu.matmul %20, %18, %cst_14 {dimension_numbers = #tpu.dot_dimension_numbers<[1], [0], [0], [1], [0, 0, 1, 1], [], []>} : vector<24x28xbf16>, vector<28x256xbf16>, vector<24x256xf32> -> vector<24x256xf32>
    %22 = arith.addf %12, %21 : vector<24x256xf32>
    %23 = vector.extract_strided_slice %4 {offsets = [72, 0], sizes = [24, 28], strides = [1, 1]} : vector<240x28xf32> to vector<24x28xf32>
    %24 = arith.truncf %23 : vector<24x28xf32> to vector<24x28xbf16>
    %cst_15 = arith.constant dense<0.000000e+00> : vector<24x256xf32>
    %25 = tpu.matmul %24, %18, %cst_15 {dimension_numbers = #tpu.dot_dimension_numbers<[1], [0], [0], [1], [0, 0, 1, 1], [], []>} : vector<24x28xbf16>, vector<28x256xbf16>, vector<24x256xf32> -> vector<24x256xf32>
    %26 = arith.addf %16, %25 : vector<24x256xf32>
    %c2 = arith.constant 2 : index
    %c0_16 = arith.constant 0 : index
    %c0_17 = arith.constant 0 : index
    %27 = vector.load %arg3[%c2, %c0_16, %c0_17] : memref<5x28x256xbf16, #tpu.memory_space<vmem>>, vector<1x28x256xbf16>
    %28 = vector.shape_cast %27 : vector<1x28x256xbf16> to vector<28x256xbf16>
    %29 = vector.extract_strided_slice %4 {offsets = [96, 0], sizes = [24, 28], strides = [1, 1]} : vector<240x28xf32> to vector<24x28xf32>
    %30 = arith.truncf %29 : vector<24x28xf32> to vector<24x28xbf16>
    %cst_18 = arith.constant dense<0.000000e+00> : vector<24x256xf32>
    %31 = tpu.matmul %30, %28, %cst_18 {dimension_numbers = #tpu.dot_dimension_numbers<[1], [0], [0], [1], [0, 0, 1, 1], [], []>} : vector<24x28xbf16>, vector<28x256xbf16>, vector<24x256xf32> -> vector<24x256xf32>
    %32 = arith.addf %22, %31 : vector<24x256xf32>
    %33 = vector.extract_strided_slice %4 {offsets = [120, 0], sizes = [24, 28], strides = [1, 1]} : vector<240x28xf32> to vector<24x28xf32>
    %34 = arith.truncf %33 : vector<24x28xf32> to vector<24x28xbf16>
    %cst_19 = arith.constant dense<0.000000e+00> : vector<24x256xf32>
    %35 = tpu.matmul %34, %28, %cst_19 {dimension_numbers = #tpu.dot_dimension_numbers<[1], [0], [0], [1], [0, 0, 1, 1], [], []>} : vector<24x28xbf16>, vector<28x256xbf16>, vector<24x256xf32> -> vector<24x256xf32>
    %36 = arith.addf %26, %35 : vector<24x256xf32>
    %c3 = arith.constant 3 : index
    %c0_20 = arith.constant 0 : index
    %c0_21 = arith.constant 0 : index
    %37 = vector.load %arg3[%c3, %c0_20, %c0_21] : memref<5x28x256xbf16, #tpu.memory_space<vmem>>, vector<1x28x256xbf16>
    %38 = vector.shape_cast %37 : vector<1x28x256xbf16> to vector<28x256xbf16>
    %39 = vector.extract_strided_slice %4 {offsets = [144, 0], sizes = [24, 28], strides = [1, 1]} : vector<240x28xf32> to vector<24x28xf32>
    %40 = arith.truncf %39 : vector<24x28xf32> to vector<24x28xbf16>
    %cst_22 = arith.constant dense<0.000000e+00> : vector<24x256xf32>
    %41 = tpu.matmul %40, %38, %cst_22 {dimension_numbers = #tpu.dot_dimension_numbers<[1], [0], [0], [1], [0, 0, 1, 1], [], []>} : vector<24x28xbf16>, vector<28x256xbf16>, vector<24x256xf32> -> vector<24x256xf32>
    %42 = arith.addf %32, %41 : vector<24x256xf32>
    %43 = vector.extract_strided_slice %4 {offsets = [168, 0], sizes = [24, 28], strides = [1, 1]} : vector<240x28xf32> to vector<24x28xf32>
    %44 = arith.truncf %43 : vector<24x28xf32> to vector<24x28xbf16>
    %cst_23 = arith.constant dense<0.000000e+00> : vector<24x256xf32>
    %45 = tpu.matmul %44, %38, %cst_23 {dimension_numbers = #tpu.dot_dimension_numbers<[1], [0], [0], [1], [0, 0, 1, 1], [], []>} : vector<24x28xbf16>, vector<28x256xbf16>, vector<24x256xf32> -> vector<24x256xf32>
    %46 = arith.addf %36, %45 : vector<24x256xf32>
    %c4 = arith.constant 4 : index
    %c0_24 = arith.constant 0 : index
    %c0_25 = arith.constant 0 : index
    %47 = vector.load %arg3[%c4, %c0_24, %c0_25] : memref<5x28x256xbf16, #tpu.memory_space<vmem>>, vector<1x28x256xbf16>
    %48 = vector.shape_cast %47 : vector<1x28x256xbf16> to vector<28x256xbf16>
    %49 = vector.extract_strided_slice %4 {offsets = [192, 0], sizes = [24, 28], strides = [1, 1]} : vector<240x28xf32> to vector<24x28xf32>
    %50 = arith.truncf %49 : vector<24x28xf32> to vector<24x28xbf16>
    %cst_26 = arith.constant dense<0.000000e+00> : vector<24x256xf32>
    %51 = tpu.matmul %50, %48, %cst_26 {dimension_numbers = #tpu.dot_dimension_numbers<[1], [0], [0], [1], [0, 0, 1, 1], [], []>} : vector<24x28xbf16>, vector<28x256xbf16>, vector<24x256xf32> -> vector<24x256xf32>
    %52 = arith.addf %42, %51 : vector<24x256xf32>
    %53 = vector.extract_strided_slice %4 {offsets = [216, 0], sizes = [24, 28], strides = [1, 1]} : vector<240x28xf32> to vector<24x28xf32>
    %54 = arith.truncf %53 : vector<24x28xf32> to vector<24x28xbf16>
    %cst_27 = arith.constant dense<0.000000e+00> : vector<24x256xf32>
    %55 = tpu.matmul %54, %48, %cst_27 {dimension_numbers = #tpu.dot_dimension_numbers<[1], [0], [0], [1], [0, 0, 1, 1], [], []>} : vector<24x28xbf16>, vector<28x256xbf16>, vector<24x256xf32> -> vector<24x256xf32>
    %56 = arith.addf %46, %55 : vector<24x256xf32>
    %57 = vector.extract_strided_slice %52 {offsets = [0, 0], sizes = [24, 128], strides = [1, 1]} : vector<24x256xf32> to vector<24x128xf32>
    %58 = vector.extract_strided_slice %52 {offsets = [0, 128], sizes = [24, 128], strides = [1, 1]} : vector<24x256xf32> to vector<24x128xf32>
    %59 = arith.maximumf %57, %58 : vector<24x128xf32>
    %60 = vector.extract_strided_slice %56 {offsets = [0, 0], sizes = [24, 128], strides = [1, 1]} : vector<24x256xf32> to vector<24x128xf32>
    %61 = vector.extract_strided_slice %56 {offsets = [0, 128], sizes = [24, 128], strides = [1, 1]} : vector<24x256xf32> to vector<24x128xf32>
    %62 = arith.maximumf %60, %61 : vector<24x128xf32>
    %63 = arith.maximumf %59, %62 : vector<24x128xf32>
    %64 = vector.extract_strided_slice %0 {offsets = [0, 0], sizes = [1, 128], strides = [1, 1]} : vector<4x128xf32> to vector<1x128xf32>
    %65 = vector.broadcast %64 : vector<1x128xf32> to vector<24x128xf32>
    %66 = arith.addf %63, %65 : vector<24x128xf32>
    %cst_28 = arith.constant 0.000000e+00 : f32
    %67 = vector.broadcast %cst_28 : f32 to vector<24x128xf32>
    %68 = arith.maximumf %66, %67 : vector<24x128xf32>
    %c0_29 = arith.constant 0 : index
    %c0_30 = arith.constant 0 : index
    %69 = vector.load %arg2[%c0_29, %c0_30] : memref<320x24xbf16, #tpu.memory_space<vmem>>, vector<320x24xbf16>
    %70 = arith.truncf %68 : vector<24x128xf32> to vector<24x128xbf16>
    %cst_31 = arith.constant dense<0.000000e+00> : vector<320x128xf32>
    %71 = tpu.matmul %69, %70, %cst_31 {dimension_numbers = #tpu.dot_dimension_numbers<[1], [0], [0], [1], [0, 0, 1, 1], [], []>} : vector<320x24xbf16>, vector<24x128xbf16>, vector<320x128xf32> -> vector<320x128xf32>
    %cst_32 = arith.constant 0.000000e+00 : f32
    %72 = vector.broadcast %cst_32 : f32 to vector<32x256xf32>
    %cst_33 = arith.constant 0.000000e+00 : f32
    %73 = vector.broadcast %cst_33 : f32 to vector<32x256xf32>
    %c0_34 = arith.constant 0 : index
    %c0_35 = arith.constant 0 : index
    %c0_36 = arith.constant 0 : index
    %74 = vector.load %arg4[%c0_34, %c0_35, %c0_36] : memref<5x128x256xbf16, #tpu.memory_space<vmem>>, vector<1x128x256xbf16>
    %75 = vector.shape_cast %74 : vector<1x128x256xbf16> to vector<128x256xbf16>
    %76 = vector.extract_strided_slice %71 {offsets = [0, 0], sizes = [32, 128], strides = [1, 1]} : vector<320x128xf32> to vector<32x128xf32>
    %77 = arith.truncf %76 : vector<32x128xf32> to vector<32x128xbf16>
    %cst_37 = arith.constant dense<0.000000e+00> : vector<32x256xf32>
    %78 = tpu.matmul %77, %75, %cst_37 {dimension_numbers = #tpu.dot_dimension_numbers<[1], [0], [0], [1], [0, 0, 1, 1], [], []>} : vector<32x128xbf16>, vector<128x256xbf16>, vector<32x256xf32> -> vector<32x256xf32>
    %79 = arith.addf %72, %78 : vector<32x256xf32>
    %80 = vector.extract_strided_slice %71 {offsets = [32, 0], sizes = [32, 128], strides = [1, 1]} : vector<320x128xf32> to vector<32x128xf32>
    %81 = arith.truncf %80 : vector<32x128xf32> to vector<32x128xbf16>
    %cst_38 = arith.constant dense<0.000000e+00> : vector<32x256xf32>
    %82 = tpu.matmul %81, %75, %cst_38 {dimension_numbers = #tpu.dot_dimension_numbers<[1], [0], [0], [1], [0, 0, 1, 1], [], []>} : vector<32x128xbf16>, vector<128x256xbf16>, vector<32x256xf32> -> vector<32x256xf32>
    %83 = arith.addf %73, %82 : vector<32x256xf32>
    %c1_39 = arith.constant 1 : index
    %c0_40 = arith.constant 0 : index
    %c0_41 = arith.constant 0 : index
    %84 = vector.load %arg4[%c1_39, %c0_40, %c0_41] : memref<5x128x256xbf16, #tpu.memory_space<vmem>>, vector<1x128x256xbf16>
    %85 = vector.shape_cast %84 : vector<1x128x256xbf16> to vector<128x256xbf16>
    %86 = vector.extract_strided_slice %71 {offsets = [64, 0], sizes = [32, 128], strides = [1, 1]} : vector<320x128xf32> to vector<32x128xf32>
    %87 = arith.truncf %86 : vector<32x128xf32> to vector<32x128xbf16>
    %cst_42 = arith.constant dense<0.000000e+00> : vector<32x256xf32>
    %88 = tpu.matmul %87, %85, %cst_42 {dimension_numbers = #tpu.dot_dimension_numbers<[1], [0], [0], [1], [0, 0, 1, 1], [], []>} : vector<32x128xbf16>, vector<128x256xbf16>, vector<32x256xf32> -> vector<32x256xf32>
    %89 = arith.addf %79, %88 : vector<32x256xf32>
    %90 = vector.extract_strided_slice %71 {offsets = [96, 0], sizes = [32, 128], strides = [1, 1]} : vector<320x128xf32> to vector<32x128xf32>
    %91 = arith.truncf %90 : vector<32x128xf32> to vector<32x128xbf16>
    %cst_43 = arith.constant dense<0.000000e+00> : vector<32x256xf32>
    %92 = tpu.matmul %91, %85, %cst_43 {dimension_numbers = #tpu.dot_dimension_numbers<[1], [0], [0], [1], [0, 0, 1, 1], [], []>} : vector<32x128xbf16>, vector<128x256xbf16>, vector<32x256xf32> -> vector<32x256xf32>
    %93 = arith.addf %83, %92 : vector<32x256xf32>
    %c2_44 = arith.constant 2 : index
    %c0_45 = arith.constant 0 : index
    %c0_46 = arith.constant 0 : index
    %94 = vector.load %arg4[%c2_44, %c0_45, %c0_46] : memref<5x128x256xbf16, #tpu.memory_space<vmem>>, vector<1x128x256xbf16>
    %95 = vector.shape_cast %94 : vector<1x128x256xbf16> to vector<128x256xbf16>
    %96 = vector.extract_strided_slice %71 {offsets = [128, 0], sizes = [32, 128], strides = [1, 1]} : vector<320x128xf32> to vector<32x128xf32>
    %97 = arith.truncf %96 : vector<32x128xf32> to vector<32x128xbf16>
    %cst_47 = arith.constant dense<0.000000e+00> : vector<32x256xf32>
    %98 = tpu.matmul %97, %95, %cst_47 {dimension_numbers = #tpu.dot_dimension_numbers<[1], [0], [0], [1], [0, 0, 1, 1], [], []>} : vector<32x128xbf16>, vector<128x256xbf16>, vector<32x256xf32> -> vector<32x256xf32>
    %99 = arith.addf %89, %98 : vector<32x256xf32>
    %100 = vector.extract_strided_slice %71 {offsets = [160, 0], sizes = [32, 128], strides = [1, 1]} : vector<320x128xf32> to vector<32x128xf32>
    %101 = arith.truncf %100 : vector<32x128xf32> to vector<32x128xbf16>
    %cst_48 = arith.constant dense<0.000000e+00> : vector<32x256xf32>
    %102 = tpu.matmul %101, %95, %cst_48 {dimension_numbers = #tpu.dot_dimension_numbers<[1], [0], [0], [1], [0, 0, 1, 1], [], []>} : vector<32x128xbf16>, vector<128x256xbf16>, vector<32x256xf32> -> vector<32x256xf32>
    %103 = arith.addf %93, %102 : vector<32x256xf32>
    %c3_49 = arith.constant 3 : index
    %c0_50 = arith.constant 0 : index
    %c0_51 = arith.constant 0 : index
    %104 = vector.load %arg4[%c3_49, %c0_50, %c0_51] : memref<5x128x256xbf16, #tpu.memory_space<vmem>>, vector<1x128x256xbf16>
    %105 = vector.shape_cast %104 : vector<1x128x256xbf16> to vector<128x256xbf16>
    %106 = vector.extract_strided_slice %71 {offsets = [192, 0], sizes = [32, 128], strides = [1, 1]} : vector<320x128xf32> to vector<32x128xf32>
    %107 = arith.truncf %106 : vector<32x128xf32> to vector<32x128xbf16>
    %cst_52 = arith.constant dense<0.000000e+00> : vector<32x256xf32>
    %108 = tpu.matmul %107, %105, %cst_52 {dimension_numbers = #tpu.dot_dimension_numbers<[1], [0], [0], [1], [0, 0, 1, 1], [], []>} : vector<32x128xbf16>, vector<128x256xbf16>, vector<32x256xf32> -> vector<32x256xf32>
    %109 = arith.addf %99, %108 : vector<32x256xf32>
    %110 = vector.extract_strided_slice %71 {offsets = [224, 0], sizes = [32, 128], strides = [1, 1]} : vector<320x128xf32> to vector<32x128xf32>
    %111 = arith.truncf %110 : vector<32x128xf32> to vector<32x128xbf16>
    %cst_53 = arith.constant dense<0.000000e+00> : vector<32x256xf32>
    %112 = tpu.matmul %111, %105, %cst_53 {dimension_numbers = #tpu.dot_dimension_numbers<[1], [0], [0], [1], [0, 0, 1, 1], [], []>} : vector<32x128xbf16>, vector<128x256xbf16>, vector<32x256xf32> -> vector<32x256xf32>
    %113 = arith.addf %103, %112 : vector<32x256xf32>
    %c4_54 = arith.constant 4 : index
    %c0_55 = arith.constant 0 : index
    %c0_56 = arith.constant 0 : index
    %114 = vector.load %arg4[%c4_54, %c0_55, %c0_56] : memref<5x128x256xbf16, #tpu.memory_space<vmem>>, vector<1x128x256xbf16>
    %115 = vector.shape_cast %114 : vector<1x128x256xbf16> to vector<128x256xbf16>
    %116 = vector.extract_strided_slice %71 {offsets = [256, 0], sizes = [32, 128], strides = [1, 1]} : vector<320x128xf32> to vector<32x128xf32>
    %117 = arith.truncf %116 : vector<32x128xf32> to vector<32x128xbf16>
    %cst_57 = arith.constant dense<0.000000e+00> : vector<32x256xf32>
    %118 = tpu.matmul %117, %115, %cst_57 {dimension_numbers = #tpu.dot_dimension_numbers<[1], [0], [0], [1], [0, 0, 1, 1], [], []>} : vector<32x128xbf16>, vector<128x256xbf16>, vector<32x256xf32> -> vector<32x256xf32>
    %119 = arith.addf %109, %118 : vector<32x256xf32>
    %120 = vector.extract_strided_slice %71 {offsets = [288, 0], sizes = [32, 128], strides = [1, 1]} : vector<320x128xf32> to vector<32x128xf32>
    %121 = arith.truncf %120 : vector<32x128xf32> to vector<32x128xbf16>
    %cst_58 = arith.constant dense<0.000000e+00> : vector<32x256xf32>
    %122 = tpu.matmul %121, %115, %cst_58 {dimension_numbers = #tpu.dot_dimension_numbers<[1], [0], [0], [1], [0, 0, 1, 1], [], []>} : vector<32x128xbf16>, vector<128x256xbf16>, vector<32x256xf32> -> vector<32x256xf32>
    %123 = arith.addf %113, %122 : vector<32x256xf32>
    %124 = vector.extract_strided_slice %119 {offsets = [0, 0], sizes = [32, 128], strides = [1, 1]} : vector<32x256xf32> to vector<32x128xf32>
    %125 = vector.extract_strided_slice %119 {offsets = [0, 128], sizes = [32, 128], strides = [1, 1]} : vector<32x256xf32> to vector<32x128xf32>
    %126 = arith.maximumf %124, %125 : vector<32x128xf32>
    %127 = vector.extract_strided_slice %123 {offsets = [0, 0], sizes = [32, 128], strides = [1, 1]} : vector<32x256xf32> to vector<32x128xf32>
    %128 = vector.extract_strided_slice %123 {offsets = [0, 128], sizes = [32, 128], strides = [1, 1]} : vector<32x256xf32> to vector<32x128xf32>
    %129 = arith.maximumf %127, %128 : vector<32x128xf32>
    %130 = arith.maximumf %126, %129 : vector<32x128xf32>
    %131 = vector.extract_strided_slice %0 {offsets = [1, 0], sizes = [1, 128], strides = [1, 1]} : vector<4x128xf32> to vector<1x128xf32>
    %132 = vector.broadcast %131 : vector<1x128xf32> to vector<32x128xf32>
    %133 = arith.addf %130, %132 : vector<32x128xf32>
    %cst_59 = arith.constant 0.000000e+00 : f32
    %134 = vector.broadcast %cst_59 : f32 to vector<32x128xf32>
    %135 = arith.maximumf %133, %134 : vector<32x128xf32>
    %cst_60 = arith.constant 0.000000e+00 : f32
    %136 = vector.broadcast %cst_60 : f32 to vector<8x128xf32>
    %137 = vector.extract_strided_slice %135 {offsets = [0, 0], sizes = [8, 128], strides = [1, 1]} : vector<32x128xf32> to vector<8x128xf32>
    %138 = arith.truncf %137 : vector<8x128xf32> to vector<8x128xbf16>
    %c0_61 = arith.constant 0 : index
    %c0_62 = arith.constant 0 : index
    %c0_63 = arith.constant 0 : index
    %139 = vector.load %arg5[%c0_61, %c0_62, %c0_63] : memref<5x128x128xbf16, #tpu.memory_space<vmem>>, vector<1x128x128xbf16>
    %140 = vector.shape_cast %139 : vector<1x128x128xbf16> to vector<128x128xbf16>
    %cst_64 = arith.constant dense<0.000000e+00> : vector<8x128xf32>
    %141 = tpu.matmul %138, %140, %cst_64 {dimension_numbers = #tpu.dot_dimension_numbers<[1], [0], [0], [1], [0, 0, 1, 1], [], []>} : vector<8x128xbf16>, vector<128x128xbf16>, vector<8x128xf32> -> vector<8x128xf32>
    %142 = arith.addf %136, %141 : vector<8x128xf32>
    %143 = vector.extract_strided_slice %135 {offsets = [8, 0], sizes = [8, 128], strides = [1, 1]} : vector<32x128xf32> to vector<8x128xf32>
    %144 = arith.truncf %143 : vector<8x128xf32> to vector<8x128xbf16>
    %c1_65 = arith.constant 1 : index
    %c0_66 = arith.constant 0 : index
    %c0_67 = arith.constant 0 : index
    %145 = vector.load %arg5[%c1_65, %c0_66, %c0_67] : memref<5x128x128xbf16, #tpu.memory_space<vmem>>, vector<1x128x128xbf16>
    %146 = vector.shape_cast %145 : vector<1x128x128xbf16> to vector<128x128xbf16>
    %cst_68 = arith.constant dense<0.000000e+00> : vector<8x128xf32>
    %147 = tpu.matmul %144, %146, %cst_68 {dimension_numbers = #tpu.dot_dimension_numbers<[1], [0], [0], [1], [0, 0, 1, 1], [], []>} : vector<8x128xbf16>, vector<128x128xbf16>, vector<8x128xf32> -> vector<8x128xf32>
    %148 = arith.addf %142, %147 : vector<8x128xf32>
    %149 = vector.extract_strided_slice %135 {offsets = [16, 0], sizes = [8, 128], strides = [1, 1]} : vector<32x128xf32> to vector<8x128xf32>
    %150 = arith.truncf %149 : vector<8x128xf32> to vector<8x128xbf16>
    %c2_69 = arith.constant 2 : index
    %c0_70 = arith.constant 0 : index
    %c0_71 = arith.constant 0 : index
    %151 = vector.load %arg5[%c2_69, %c0_70, %c0_71] : memref<5x128x128xbf16, #tpu.memory_space<vmem>>, vector<1x128x128xbf16>
    %152 = vector.shape_cast %151 : vector<1x128x128xbf16> to vector<128x128xbf16>
    %cst_72 = arith.constant dense<0.000000e+00> : vector<8x128xf32>
    %153 = tpu.matmul %150, %152, %cst_72 {dimension_numbers = #tpu.dot_dimension_numbers<[1], [0], [0], [1], [0, 0, 1, 1], [], []>} : vector<8x128xbf16>, vector<128x128xbf16>, vector<8x128xf32> -> vector<8x128xf32>
    %154 = arith.addf %148, %153 : vector<8x128xf32>
    %155 = vector.extract_strided_slice %135 {offsets = [24, 0], sizes = [8, 128], strides = [1, 1]} : vector<32x128xf32> to vector<8x128xf32>
    %156 = arith.truncf %155 : vector<8x128xf32> to vector<8x128xbf16>
    %c3_73 = arith.constant 3 : index
    %c0_74 = arith.constant 0 : index
    %c0_75 = arith.constant 0 : index
    %157 = vector.load %arg5[%c3_73, %c0_74, %c0_75] : memref<5x128x128xbf16, #tpu.memory_space<vmem>>, vector<1x128x128xbf16>
    %158 = vector.shape_cast %157 : vector<1x128x128xbf16> to vector<128x128xbf16>
    %cst_76 = arith.constant dense<0.000000e+00> : vector<8x128xf32>
    %159 = tpu.matmul %156, %158, %cst_76 {dimension_numbers = #tpu.dot_dimension_numbers<[1], [0], [0], [1], [0, 0, 1, 1], [], []>} : vector<8x128xbf16>, vector<128x128xbf16>, vector<8x128xf32> -> vector<8x128xf32>
    %160 = arith.addf %154, %159 : vector<8x128xf32>
    %161 = vector.extract_strided_slice %0 {offsets = [2, 0], sizes = [1, 128], strides = [1, 1]} : vector<4x128xf32> to vector<1x128xf32>
    %162 = vector.broadcast %161 : vector<1x128xf32> to vector<8x128xf32>
    %163 = arith.addf %160, %162 : vector<8x128xf32>
    %cst_77 = arith.constant 0.000000e+00 : f32
    %164 = vector.broadcast %cst_77 : f32 to vector<8x128xf32>
    %165 = arith.maximumf %163, %164 : vector<8x128xf32>
    %166 = arith.truncf %165 : vector<8x128xf32> to vector<8x128xbf16>
    %c4_78 = arith.constant 4 : index
    %c0_79 = arith.constant 0 : index
    %c0_80 = arith.constant 0 : index
    %167 = vector.load %arg5[%c4_78, %c0_79, %c0_80] : memref<5x128x128xbf16, #tpu.memory_space<vmem>>, vector<1x128x128xbf16>
    %168 = vector.shape_cast %167 : vector<1x128x128xbf16> to vector<128x128xbf16>
    %cst_81 = arith.constant dense<0.000000e+00> : vector<8x128xf32>
    %169 = tpu.matmul %166, %168, %cst_81 {dimension_numbers = #tpu.dot_dimension_numbers<[1], [0], [0], [1], [0, 0, 1, 1], [], []>} : vector<8x128xbf16>, vector<128x128xbf16>, vector<8x128xf32> -> vector<8x128xf32>
    %170 = vector.extract_strided_slice %0 {offsets = [3, 0], sizes = [1, 128], strides = [1, 1]} : vector<4x128xf32> to vector<1x128xf32>
    %171 = vector.broadcast %170 : vector<1x128xf32> to vector<8x128xf32>
    %172 = arith.addf %169, %171 : vector<8x128xf32>
    %173 = vector.extract_strided_slice %172 {offsets = [0, 0], sizes = [2, 10], strides = [1, 1]} : vector<8x128xf32> to vector<2x10xf32>
    %cst_82 = arith.constant dense<0xFF800000> : vector<2xf32>
    %174 = vector.multi_reduction <maximumf>, %173, %cst_82 [1] : vector<2x10xf32> to vector<2xf32>
    %175 = vector.shape_cast %174 : vector<2xf32> to vector<2x1xf32>
    %176 = vector.broadcast %175 : vector<2x1xf32> to vector<2x10xf32>
    %177 = arith.subf %173, %176 : vector<2x10xf32>
    %178 = math.exp %177 : vector<2x10xf32>
    %cst_83 = arith.constant dense<0.000000e+00> : vector<2xf32>
    %179 = vector.multi_reduction <add>, %178, %cst_83 [1] : vector<2x10xf32> to vector<2xf32>
    %180 = vector.shape_cast %179 : vector<2xf32> to vector<2x1xf32>
    %181 = math.log %180 : vector<2x1xf32>
    %182 = arith.addf %175, %181 : vector<2x1xf32>
    %183 = vector.broadcast %182 : vector<2x1xf32> to vector<2x10xf32>
    %184 = arith.subf %173, %183 : vector<2x10xf32>
    %c0_84 = arith.constant 0 : index
    %c0_85 = arith.constant 0 : index
    %185 = vector.load %arg7[%c0_84, %c0_85] : memref<2x10xf32, #tpu.memory_space<vmem>>, vector<2x10xf32>
    tpu.vector_store %arg7[%c0_84, %c0_85], %184 {strides = array<i32>} : memref<2x10xf32, #tpu.memory_space<vmem>>, vector<2x10xf32>,
    return
  }
}

</mosaic_0001>

<llo_original>
// kernel: _net_forward_impl.1
$region0: #{_net_forward_impl.1}
  #allocation0 [shape = 'u32[]', space=smem, size = 0x4, offset = 0x4, fixed_abs, tag = 'smem constant byte address 0x4 - core index']
  #allocation1 [shape = 'u32[144,128]{1,0:T(1,128)}', space=vmem, size = 0x12000, scoped, tag = 'internal scratch']
  %s0 = inlined_call_operand.vmem [shape: f32[56,28], index: 0, kind: input, shape index: {}]
  %s1 = inlined_call_operand.vmem [shape: bf16[240,56], index: 1, kind: input, shape index: {}]
  %s2 = inlined_call_operand.vmem [shape: bf16[320,24], index: 2, kind: input, shape index: {}]
  %s3 = inlined_call_operand.hbm [shape: bf16[5,28,256], index: 3, kind: input, shape index: {}]
  %s4 = inlined_call_operand.hbm [shape: bf16[5,128,256], index: 4, kind: input, shape index: {}]
  %s5 = inlined_call_operand.vmem [shape: bf16[5,128,128], index: 5, kind: input, shape index: {}]
  %s6 = inlined_call_operand.vmem [shape: f32[4,128], index: 6, kind: input, shape index: {}]
  %s7 = inlined_call_operand.hbm [shape: f32[2,10], index: 7, kind: output, shape index: {}]
  %s8 = sld [smem:[#allocation0]]
  $region46: #{_net_forward_impl.1} parent=0
    _
  %s10 = ssub.s32 1, %s8
  %s11 = scalar_select 0, %s10, %s8
  $region1: #{_net_forward_impl.1} parent=0
    #allocation2 [shape = 'u8[81920]{0}', space=vmem, size = 0x14000, scoped, tag = 'input window, operand 3, single buffered']
    #allocation3 [shape = 's32[1]{0}', space=sflag, size = 0x4, scoped, tag = 'scoped memory for _net_forward_impl.1']
    #allocation4 [shape = 's32[1]{0}', space=sflag, size = 0x4, scoped, tag = 'scoped memory for _net_forward_impl.1']
    #allocation5 [shape = 'u8[327680]{0}', space=vmem, size = 0x50000, scoped, tag = 'input window, operand 4, single buffered']
    #allocation6 [shape = 's32[1]{0}', space=sflag, size = 0x4, scoped, tag = 'scoped memory for _net_forward_impl.1']
    #allocation7 [shape = 'u8[1024]{0}', space=vmem, size = 0x400, scoped, tag = 'output window, operand 0, single buffered']
    %12 = vsyncpa [#allocation3], 0
    %13 = vsyncpa [#allocation6], 0
    %14 = vsyncpa [#allocation4], 0
    // Predicated region
    $region2: #{_net_forward_impl.1} parent=1 // pred_check
      _
    $region3: #{_net_forward_impl.1} parent=1 // pred_check_branch
      %16 = sbr.rel (0) target = $region5
    $region4: #{_net_forward_impl.1} parent=1 // pred_region
      _
    $region5: #{_net_forward_impl.1} parent=1 // pred_fallthru
      _
    // Predicated region
    $region6: #{_net_forward_impl.1} parent=1 // pred_check
      _
    $region7: #{_net_forward_impl.1} parent=1 // pred_check_branch
      %18 = sbr.rel (0) target = $region9
    $region8: #{_net_forward_impl.1} parent=1 // pred_region
      _
    $region9: #{_net_forward_impl.1} parent=1 // pred_fallthru
      _
    // Predicated region
    $region10: #{_net_forward_impl.1} parent=1 // pred_check
      _
    $region11: #{_net_forward_impl.1} parent=1 // pred_check_branch
      %20 = sbr.rel (0) target = $region13
    $region12: #{_net_forward_impl.1} parent=1 // pred_region
      _
    $region13: #{_net_forward_impl.1} parent=1 // pred_fallthru
      _
    // Predicated region
    $region14: #{_net_forward_impl.1} parent=1 // pred_check
      _
    $region15: #{_net_forward_impl.1} parent=1 // pred_check_branch
      %22 = sbr.rel (0) target = $region17
    $region16: #{_net_forward_impl.1} parent=1 // pred_region
      %s24 = ssub.s32 2560, 2560
      %25 = vsyncadd [#allocation3], %s24
      %s26 = sshll.u32 [#allocation2], 4
      %s27 = int_to_ptr.vmem [resolvable:$true] %s26
      %32 = dma.hbm_to_vmem [thread:$0]  %s3, 2560, %s27, [#allocation3], 128, 128, 8
    $region17: #{_net_forward_impl.1} parent=1 // pred_fallthru
      _
    // Predicated region
    $region18: #{_net_forward_impl.1} parent=1 // pred_check
      _
    $region19: #{_net_forward_impl.1} parent=1 // pred_check_branch
      %34 = sbr.rel (0) target = $region21
    $region20: #{_net_forward_impl.1} parent=1 // pred_region
      %s36 = ssub.s32 10240, 10240
      %37 = vsyncadd [#allocation6], %s36
      %s38 = sshll.u32 [#allocation5], 4
      %s39 = int_to_ptr.vmem [resolvable:$true] %s38
      %44 = dma.hbm_to_vmem [thread:$0]  %s4, 10240, %s39, [#allocation6], 128, 128, 8
    $region21: #{_net_forward_impl.1} parent=1 // pred_fallthru
      _
    // Predicated region
    $region22: #{_net_forward_impl.1} parent=1 // pred_check
      _
    $region23: #{_net_forward_impl.1} parent=1 // pred_check_branch
      %46 = sbr.rel (0) target = $region25
    $region24: #{_net_forward_impl.1} parent=1 // pred_region
      _
    $region25: #{_net_forward_impl.1} parent=1 // pred_fallthru
      _
    // Predicated region
    $region26: #{_net_forward_impl.1} parent=1 // pred_check
      _
    $region27: #{_net_forward_impl.1} parent=1 // pred_check_branch
      %48 = sbr.rel (0) target = $region29
    $region28: #{_net_forward_impl.1} parent=1 // pred_region
      _
    $region29: #{_net_forward_impl.1} parent=1 // pred_fallthru
      _
    // Predicated region
    $region30: #{_net_forward_impl.1} parent=1 // pred_check
      _
    $region31: #{_net_forward_impl.1} parent=1 // pred_check_branch
      %50 = sbr.rel (0) target = $region33
    $region32: #{_net_forward_impl.1} parent=1 // pred_region
      %51 = dma.done [#allocation3], 2560
    $region33: #{_net_forward_impl.1} parent=1 // pred_fallthru
      _
    // Predicated region
    $region34: #{_net_forward_impl.1} parent=1 // pred_check
      _
    $region35: #{_net_forward_impl.1} parent=1 // pred_check_branch
      %53 = sbr.rel (0) target = $region37
    $region36: #{_net_forward_impl.1} parent=1 // pred_region
      %54 = dma.done [#allocation6], 10240
    $region37: #{_net_forward_impl.1} parent=1 // pred_fallthru
      _
    %v56 = vld [vmem:[%s6] sm:$0xf]
    %v57 = vld [vmem:[%s0] sm:$0xff]
    %v58 = vld [vmem:[%s0 + $0x8] sm:$0xff]
    %v59 = vld [vmem:[%s0 + $0x10] sm:$0xff]
    %v60 = vld [vmem:[%s0 + $0x18] sm:$0xff]
    %v61 = vld [vmem:[%s0 + $0x20] sm:$0xff]
    %v62 = vld [vmem:[%s0 + $0x28] sm:$0xff]
    %v63 = vld [vmem:[%s0 + $0x30] sm:$0xff]
    %v64 = vpack.c.bf16 %v58, %v57
    %v65 = vpack.c.bf16 %v60, %v59
    %v66 = vpack.c.bf16 %v62, %v61
    %v67 = vpack.c.bf16 %v63, %v63
    %v68 = vld [vmem:[%s1] sm:$0xf]
    %v69 = vld [vmem:[%s1 + $0x4] sm:$0xf]
    %v70 = vld [vmem:[%s1 + $0x8] sm:$0xf]
    %v71 = vld [vmem:[%s1 + $0xc] sm:$0xf]
    %v72 = vld [vmem:[%s1 + $0x10] sm:$0xf]
    %v73 = vld [vmem:[%s1 + $0x14] sm:$0xf]
    %v74 = vld [vmem:[%s1 + $0x18] sm:$0xf]
    %v75 = vld [vmem:[%s1 + $0x1c] sm:$0xf]
    %v76 = vld [vmem:[%s1 + $0x20] sm:$0xf]
    %v77 = vld [vmem:[%s1 + $0x24] sm:$0xf]
    %v78 = vld [vmem:[%s1 + $0x28] sm:$0xf]
    %v79 = vld [vmem:[%s1 + $0x2c] sm:$0xf]
    %v80 = vld [vmem:[%s1 + $0x30] sm:$0xf]
    %v81 = vld [vmem:[%s1 + $0x34] sm:$0xf]
    %v82 = vld [vmem:[%s1 + $0x38] sm:$0xf]
    %v83 = vld [vmem:[%s1 + $0x3c] sm:$0xf]
    %v84 = vld [vmem:[%s1 + $0x40] sm:$0xf]
    %v85 = vld [vmem:[%s1 + $0x44] sm:$0xf]
    %v86 = vld [vmem:[%s1 + $0x48] sm:$0xf]
    %v87 = vld [vmem:[%s1 + $0x4c] sm:$0xf]
    %v88 = vld [vmem:[%s1 + $0x50] sm:$0xf]
    %v89 = vld [vmem:[%s1 + $0x54] sm:$0xf]
    %v90 = vld [vmem:[%s1 + $0x58] sm:$0xf]
    %v91 = vld [vmem:[%s1 + $0x5c] sm:$0xf]
    %v92 = vld [vmem:[%s1 + $0x60] sm:$0xf]
    %v93 = vld [vmem:[%s1 + $0x64] sm:$0xf]
    %v94 = vld [vmem:[%s1 + $0x68] sm:$0xf]
    %v95 = vld [vmem:[%s1 + $0x6c] sm:$0xf]
    %v96 = vld [vmem:[%s1 + $0x70] sm:$0xf]
    %v97 = vld [vmem:[%s1 + $0x74] sm:$0xf]
    %v128 = vunpack.c.l.b16 %v68
    %v129 = vunpack.c.l.b16 %v69
    %v130 = vunpack.c.l.b16 %v70
    %v131 = vunpack.c.l.b16 %v71
    %v132 = vunpack.c.l.b16 %v72
    %v133 = vunpack.c.l.b16 %v73
    %v134 = vunpack.c.l.b16 %v74
    %v135 = vunpack.c.l.b16 %v75
    %v136 = vunpack.c.l.b16 %v76
    %v137 = vunpack.c.l.b16 %v77
    %v138 = vunpack.c.l.b16 %v78
    %v139 = vunpack.c.l.b16 %v79
    %v140 = vunpack.c.l.b16 %v80
    %v141 = vunpack.c.l.b16 %v81
    %v142 = vunpack.c.l.b16 %v82
    %v143 = vunpack.c.l.b16 %v83
    %v144 = vunpack.c.l.b16 %v84
    %v145 = vunpack.c.l.b16 %v85
    %v146 = vunpack.c.l.b16 %v86
    %v147 = vunpack.c.l.b16 %v87
    %v148 = vunpack.c.l.b16 %v88
    %v149 = vunpack.c.l.b16 %v89
    %v150 = vunpack.c.l.b16 %v90
    %v151 = vunpack.c.l.b16 %v91
    %v152 = vunpack.c.l.b16 %v92
    %v153 = vunpack.c.l.b16 %v93
    %v154 = vunpack.c.l.b16 %v94
    %v155 = vunpack.c.l.b16 %v95
    %v156 = vunpack.c.l.b16 %v96
    %v157 = vunpack.c.l.b16 %v97
    %v158 = vpack.c.b16 %v129, %v128
    %v159 = vpack.c.b16 %v131, %v130
    %v160 = vpack.c.b16 %v133, %v132
    %v161 = vpack.c.b16 %v135, %v134
    %v162 = vpack.c.b16 %v137, %v136
    %v163 = vpack.c.b16 %v139, %v138
    %v164 = vpack.c.b16 %v141, %v140
    %v165 = vpack.c.b16 %v143, %v142
    %v166 = vpack.c.b16 %v145, %v144
    %v167 = vpack.c.b16 %v147, %v146
    %v168 = vpack.c.b16 %v149, %v148
    %v169 = vpack.c.b16 %v151, %v150
    %v170 = vpack.c.b16 %v153, %v152
    %v171 = vpack.c.b16 %v155, %v154
    %v172 = vpack.c.b16 %v157, %v156
    %vm173 = vcmask 457728
    %v175 = vsel %vm173, %v158, 0
    %v178 = vsel %vm173, %v159, 0
    %v181 = vsel %vm173, %v160, 0
    %v184 = vsel %vm173, %v161, 0
    %v187 = vsel %vm173, %v162, 0
    %v190 = vsel %vm173, %v163, 0
    %v193 = vsel %vm173, %v164, 0
    %v196 = vsel %vm173, %v165, 0
    %v199 = vsel %vm173, %v166, 0
    %v202 = vsel %vm173, %v167, 0
    %v205 = vsel %vm173, %v168, 0
    %v208 = vsel %vm173, %v169, 0
    %v211 = vsel %vm173, %v170, 0
    %v214 = vsel %vm173, %v171, 0
    %v217 = vsel %vm173, %v172, 0
    %vm219 = vcmask 1043456
    %v221 = vsel %vm219, %v67, 0
    %223 = vmatprep.subr.bf16.mxu0 0
    %224 = vmatpush1.bf16.msra.mxu0 %v64
    %225 = vmatprep.subr.bf16.mxu0 0
    %226 = vmatpush1.bf16.msra.mxu0 %v65
    %227 = vmatprep.subr.bf16.mxu0 0
    %228 = vmatpush1.bf16.msra.mxu0 %v66
    %229 = vmatprep.subr.bf16.mxu0 0
    %230 = vmatpush1.bf16.msra.mxu0 %v221
    %231 = vmatprep.subr.bf16.mxu0 0
    %232 = vmatpush1.bf16.msra.mxu0 0
    %233 = vmatprep.subr.bf16.mxu0 0
    %234 = vmatpush1.bf16.msra.mxu0 0
    %235 = vmatprep.subr.bf16.mxu0 0
    %236 = vmatpush1.bf16.msra.mxu0 0
    %237 = vmatprep.subr.bf16.mxu0 0
    %238 = vmatpush1.bf16.msra.mxu0 0
    %239 = vmatprep.subr.bf16.mxu0 0
    %240 = vmatpush1.bf16.msra.mxu0 0
    %241 = vmatprep.subr.bf16.mxu0 0
    %242 = vmatpush1.bf16.msra.mxu0 0
    %243 = vmatprep.subr.bf16.mxu0 0
    %244 = vmatpush1.bf16.msra.mxu0 0
    %245 = vmatprep.subr.bf16.mxu0 0
    %246 = vmatpush1.bf16.msra.mxu0 0
    %247 = vmatprep.subr.bf16.mxu0 0
    %248 = vmatpush1.bf16.msra.mxu0 0
    %249 = vmatprep.subr.bf16.mxu0 0
    %250 = vmatpush1.bf16.msra.mxu0 0
    %251 = vmatprep.subr.bf16.mxu0 0
    %252 = vmatpush1.bf16.msra.mxu0 0
    %253 = vmatprep.subr.bf16.mxu0 0
    %254 = vmatpush1.bf16.msra.mxu0 0
    %255 = vmatprep.mubr.bf16.mxu0 0
    %256 = vmatmul.mubr.bf16.gmra.mrb[0].mxu0 %v175
    %v257 = vpop.f32.mrb[0].mxu0
    %v258 = vadd.f32 0.0, %v257
    %v259 = vpop.f32.mrb[0].mxu0
    %v260 = vpop.f32.mrb[0].mxu0
    %v261 = vadd.f32 0.0, %v260
    %v262 = vpop.f32.mrb[0].mxu0
    %263 = vmatprep.mubr.bf16.mxu0 0
    %264 = vmatmul.mubr.bf16.gmra.mrb[0].mxu0 %v178
    %v265 = vpop.f32.mrb[0].mxu0
    %v266 = vadd.f32 0.0, %v265
    %v267 = vpop.f32.mrb[0].mxu0
    %v268 = vpop.f32.mrb[0].mxu0
    %v269 = vadd.f32 0.0, %v268
    %v270 = vpop.f32.mrb[0].mxu0
    %271 = vmatprep.mubr.bf16.mxu0 0
    %272 = vmatmul.mubr.bf16.gmra.mrb[0].mxu0 %v181
    %v273 = vpop.f32.mrb[0].mxu0
    %v274 = vadd.f32 0.0, %v273
    %v275 = vpop.f32.mrb[0].mxu0
    %v276 = vpop.f32.mrb[0].mxu0
    %v277 = vadd.f32 0.0, %v276
    %v278 = vpop.f32.mrb[0].mxu0
    %279 = vmatprep.mubr.bf16.mxu0 0
    %280 = vmatmul.mubr.bf16.gmra.mrb[0].mxu0 %v184
    %v281 = vpop.f32.mrb[0].mxu0
    %v282 = vadd.f32 0.0, %v281
    %v283 = vpop.f32.mrb[0].mxu0
    %v284 = vpop.f32.mrb[0].mxu0
    %v285 = vadd.f32 0.0, %v284
    %v286 = vpop.f32.mrb[0].mxu0
    %287 = vmatprep.mubr.bf16.mxu0 0
    %288 = vmatmul.mubr.bf16.gmra.mrb[0].mxu0 %v187
    %v289 = vpop.f32.mrb[0].mxu0
    %v290 = vadd.f32 0.0, %v289
    %v291 = vpop.f32.mrb[0].mxu0
    %v292 = vpop.f32.mrb[0].mxu0
    %v293 = vadd.f32 0.0, %v292
    %v294 = vpop.f32.mrb[0].mxu0
    %295 = vmatprep.mubr.bf16.mxu0 0
    %296 = vmatmul.mubr.bf16.gmra.mrb[0].mxu0 %v190
    %v297 = vpop.f32.mrb[0].mxu0
    %v298 = vadd.f32 0.0, %v297
    %v299 = vpop.f32.mrb[0].mxu0
    %v300 = vpop.f32.mrb[0].mxu0
    %v301 = vadd.f32 0.0, %v300
    %v302 = vpop.f32.mrb[0].mxu0
    %303 = vmatprep.mubr.bf16.mxu0 0
    %304 = vmatmul.mubr.bf16.gmra.mrb[0].mxu0 %v193
    %v305 = vpop.f32.mrb[0].mxu0
    %v306 = vadd.f32 0.0, %v305
    %v307 = vpop.f32.mrb[0].mxu0
    %v308 = vpop.f32.mrb[0].mxu0
    %v309 = vadd.f32 0.0, %v308
    %v310 = vpop.f32.mrb[0].mxu0
    %311 = vmatprep.mubr.bf16.mxu0 0
    %312 = vmatmul.mubr.bf16.gmra.mrb[0].mxu0 %v196
    %v313 = vpop.f32.mrb[0].mxu0
    %v314 = vadd.f32 0.0, %v313
    %v315 = vpop.f32.mrb[0].mxu0
    %v316 = vpop.f32.mrb[0].mxu0
    %v317 = vadd.f32 0.0, %v316
    %v318 = vpop.f32.mrb[0].mxu0
    %319 = vmatprep.mubr.bf16.mxu0 0
    %320 = vmatmul.mubr.bf16.gmra.mrb[0].mxu0 %v199
    %v321 = vpop.f32.mrb[0].mxu0
    %v322 = vadd.f32 0.0, %v321
    %v323 = vpop.f32.mrb[0].mxu0
    %v324 = vpop.f32.mrb[0].mxu0
    %v325 = vadd.f32 0.0, %v324
    %v326 = vpop.f32.mrb[0].mxu0
    %327 = vmatprep.mubr.bf16.mxu0 0
    %328 = vmatmul.mubr.bf16.gmra.mrb[0].mxu0 %v202
    %v329 = vpop.f32.mrb[0].mxu0
    %v330 = vadd.f32 0.0, %v329
    %v331 = vpop.f32.mrb[0].mxu0
    %v332 = vpop.f32.mrb[0].mxu0
    %v333 = vadd.f32 0.0, %v332
    %v334 = vpop.f32.mrb[0].mxu0
    %335 = vmatprep.mubr.bf16.mxu0 0
    %336 = vmatmul.mubr.bf16.gmra.mrb[0].mxu0 %v205
    %v337 = vpop.f32.mrb[0].mxu0
    %v338 = vadd.f32 0.0, %v337
    %v339 = vpop.f32.mrb[0].mxu0
    %v340 = vpop.f32.mrb[0].mxu0
    %v341 = vadd.f32 0.0, %v340
    %v342 = vpop.f32.mrb[0].mxu0
    %343 = vmatprep.mubr.bf16.mxu0 0
    %344 = vmatmul.mubr.bf16.gmra.mrb[0].mxu0 %v208
    %v345 = vpop.f32.mrb[0].mxu0
    %v346 = vadd.f32 0.0, %v345
    %v347 = vpop.f32.mrb[0].mxu0
    %v348 = vpop.f32.mrb[0].mxu0
    %v349 = vadd.f32 0.0, %v348
    %v350 = vpop.f32.mrb[0].mxu0
    %351 = vmatprep.mubr.bf16.mxu0 0
    %352 = vmatmul.mubr.bf16.gmra.mrb[0].mxu0 %v211
    %v353 = vpop.f32.mrb[0].mxu0
    %v354 = vadd.f32 0.0, %v353
    %v355 = vpop.f32.mrb[0].mxu0
    %v356 = vpop.f32.mrb[0].mxu0
    %v357 = vadd.f32 0.0, %v356
    %v358 = vpop.f32.mrb[0].mxu0
    %359 = vmatprep.mubr.bf16.mxu0 0
    %360 = vmatmul.mubr.bf16.gmra.mrb[0].mxu0 %v214
    %v361 = vpop.f32.mrb[0].mxu0
    %v362 = vadd.f32 0.0, %v361
    %v363 = vpop.f32.mrb[0].mxu0
    %v364 = vpop.f32.mrb[0].mxu0
    %v365 = vadd.f32 0.0, %v364
    %v366 = vpop.f32.mrb[0].mxu0
    %367 = vmatprep.mubr.bf16.mxu0 0
    %368 = vmatmul.mubr.bf16.gmra.mrb[0].mxu0 %v217
    %v369 = vpop.f32.mrb[0].mxu0
    %v370 = vadd.f32 0.0, %v369
    %v371 = vpop.f32.mrb[0].mxu0
    %v372 = vpop.f32.mrb[0].mxu0
    %v373 = vadd.f32 0.0, %v372
    %v374 = vpop.f32.mrb[0].mxu0
    %375 = vdwg.mxu0
    %v376 = vld [vmem:[#allocation2] sm:$0xff]
    %v377 = vld [vmem:[#allocation2 + $0x8] sm:$0xff]
    %v378 = vld [vmem:[#allocation2 + $0x10] sm:$0xff]
    %v379 = vld [vmem:[#allocation2 + $0x18] sm:$0x33]
    %v380 = vpack.c.bf16 %v261, %v258
    %v381 = vpack.c.bf16 %v266, %v266
    %v382 = vpack.c.bf16 %v274, %v269
    %v383 = vpack.c.bf16 %v277, %v277
    %s384 = scalar_lea.vmem [#allocation2], 32
    %v385 = vld [vmem:[%s384] sm:$0xff]
    %v386 = vld [vmem:[%s384 + $0x8] sm:$0xff]
    %v387 = vld [vmem:[%s384 + $0x10] sm:$0xff]
    %v388 = vld [vmem:[%s384 + $0x18] sm:$0x33]
    %v389 = vpack.c.bf16 %v285, %v282
    %v390 = vpack.c.bf16 %v290, %v290
    %v395 = vunpack.c.l.b16 %v385
    %v396 = vunpack.c.h.b16 %v385
    %v397 = vunpack.c.l.b16 %v386
    %v398 = vunpack.c.h.b16 %v386
    %v399 = vunpack.c.l.b16 %v387
    %v400 = vunpack.c.h.b16 %v387
    %v401 = vunpack.c.l.b16 %v388
    %v402 = vunpack.c.h.b16 %v388
    %v403 = vpack.c.b16 %v397, %v395
    %v404 = vpack.c.b16 %v398, %v396
    %v405 = vpack.c.b16 %v401, %v399
    %v406 = vpack.c.b16 %v402, %v400
    %vm409 = vcmask 228352
    %v411 = vsel %vm409, %v389, 0
    %v414 = vsel %vm409, %v390, 0
    %vm416 = vcmask 1045504
    %v418 = vsel %vm416, %v405, 0
    %v421 = vsel %vm416, %v406, 0
    %423 = vmatprep.subr.bf16.mxu0 %v404
    %424 = vmatpush1.bf16.msra.mxu0 %v403
    %425 = vmatprep.subr.bf16.mxu0 %v421
    %426 = vmatpush1.bf16.msra.mxu0 %v418
    %427 = vmatprep.subr.bf16.mxu0 0
    %428 = vmatpush1.bf16.msra.mxu0 0
    %429 = vmatprep.subr.bf16.mxu0 0
    %430 = vmatpush1.bf16.msra.mxu0 0
    %431 = vmatprep.subr.bf16.mxu0 0
    %432 = vmatpush1.bf16.msra.mxu0 0
    %433 = vmatprep.subr.bf16.mxu0 0
    %434 = vmatpush1.bf16.msra.mxu0 0
    %435 = vmatprep.subr.bf16.mxu0 0
    %436 = vmatpush1.bf16.msra.mxu0 0
    %437 = vmatprep.subr.bf16.mxu0 0
    %438 = vmatpush1.bf16.msra.mxu0 0
    %439 = vmatprep.subr.bf16.mxu0 0
    %440 = vmatpush1.bf16.msra.mxu0 0
    %441 = vmatprep.subr.bf16.mxu0 0
    %442 = vmatpush1.bf16.msra.mxu0 0
    %443 = vmatprep.subr.bf16.mxu0 0
    %444 = vmatpush1.bf16.msra.mxu0 0
    %445 = vmatprep.subr.bf16.mxu0 0
    %446 = vmatpush1.bf16.msra.mxu0 0
    %447 = vmatprep.subr.bf16.mxu0 0
    %448 = vmatpush1.bf16.msra.mxu0 0
    %449 = vmatprep.subr.bf16.mxu0 0
    %450 = vmatpush1.bf16.msra.mxu0 0
    %451 = vmatprep.subr.bf16.mxu0 0
    %452 = vmatpush1.bf16.msra.mxu0 0
    %453 = vmatprep.subr.bf16.mxu0 0
    %454 = vmatpush1.bf16.msra.mxu0 0
    %455 = vmatprep.mubr.bf16.mxu0 0
    %456 = vmatmul.mubr.bf16.gmra.mrb[0].mxu0 %v411
    %v457 = vpop.f32.mrb[0].mxu0
    %v458 = vadd.f32 0.0, %v457
    %v459 = vpop.f32.mrb[0].mxu0
    %v460 = vadd.f32 0.0, %v459
    %v461 = vpop.f32.mrb[0].mxu0
    %v462 = vadd.f32 0.0, %v461
    %v463 = vpop.f32.mrb[0].mxu0
    %v464 = vadd.f32 0.0, %v463
    %465 = vmatprep.mubr.bf16.mxu0 0
    %466 = vmatmul.mubr.bf16.gmra.mrb[0].mxu0 %v414
    %v467 = vpop.f32.mrb[0].mxu0
    %v468 = vadd.f32 0.0, %v467
    %v469 = vpop.f32.mrb[0].mxu0
    %v470 = vadd.f32 0.0, %v469
    %v471 = vpop.f32.mrb[0].mxu0
    %v472 = vpop.f32.mrb[0].mxu0
    %473 = vdwg.mxu0
    %v478 = vunpack.c.l.b16 %v376
    %v479 = vunpack.c.h.b16 %v376
    %v480 = vunpack.c.l.b16 %v377
    %v481 = vunpack.c.h.b16 %v377
    %v482 = vunpack.c.l.b16 %v378
    %v483 = vunpack.c.h.b16 %v378
    %v484 = vunpack.c.l.b16 %v379
    %v485 = vunpack.c.h.b16 %v379
    %v486 = vpack.c.b16 %v480, %v478
    %v487 = vpack.c.b16 %v481, %v479
    %v488 = vpack.c.b16 %v484, %v482
    %v489 = vpack.c.b16 %v485, %v483
    %v493 = vsel %vm409, %v380, 0
    %v496 = vsel %vm409, %v381, 0
    %v499 = vsel %vm416, %v488, 0
    %v502 = vsel %vm416, %v489, 0
    %504 = vmatprep.subr.bf16.mxu0 %v487
    %505 = vmatpush1.bf16.msra.mxu0 %v486
    %506 = vmatprep.subr.bf16.mxu0 %v502
    %507 = vmatpush1.bf16.msra.mxu0 %v499
    %508 = vmatprep.subr.bf16.mxu0 0
    %509 = vmatpush1.bf16.msra.mxu0 0
    %510 = vmatprep.subr.bf16.mxu0 0
    %511 = vmatpush1.bf16.msra.mxu0 0
    %512 = vmatprep.subr.bf16.mxu0 0
    %513 = vmatpush1.bf16.msra.mxu0 0
    %514 = vmatprep.subr.bf16.mxu0 0
    %515 = vmatpush1.bf16.msra.mxu0 0
    %516 = vmatprep.subr.bf16.mxu0 0
    %517 = vmatpush1.bf16.msra.mxu0 0
    %518 = vmatprep.subr.bf16.mxu0 0
    %519 = vmatpush1.bf16.msra.mxu0 0
    %520 = vmatprep.subr.bf16.mxu0 0
    %521 = vmatpush1.bf16.msra.mxu0 0
    %522 = vmatprep.subr.bf16.mxu0 0
    %523 = vmatpush1.bf16.msra.mxu0 0
    %524 = vmatprep.subr.bf16.mxu0 0
    %525 = vmatpush1.bf16.msra.mxu0 0
    %526 = vmatprep.subr.bf16.mxu0 0
    %527 = vmatpush1.bf16.msra.mxu0 0
    %528 = vmatprep.subr.bf16.mxu0 0
    %529 = vmatpush1.bf16.msra.mxu0 0
    %530 = vmatprep.subr.bf16.mxu0 0
    %531 = vmatpush1.bf16.msra.mxu0 0
    %532 = vmatprep.subr.bf16.mxu0 0
    %533 = vmatpush1.bf16.msra.mxu0 0
    %534 = vmatprep.subr.bf16.mxu0 0
    %535 = vmatpush1.bf16.msra.mxu0 0
    %536 = vmatprep.mubr.bf16.mxu0 0
    %537 = vmatmul.mubr.bf16.gmra.mrb[0].mxu0 %v493
    %v538 = vpop.f32.mrb[0].mxu0
    %v539 = vadd.f32 %v458, %v538
    %v540 = vpop.f32.mrb[0].mxu0
    %v541 = vadd.f32 %v460, %v540
    %v542 = vpop.f32.mrb[0].mxu0
    %v543 = vadd.f32 %v462, %v542
    %v544 = vpop.f32.mrb[0].mxu0
    %v545 = vadd.f32 %v464, %v544
    %546 = vmatprep.mubr.bf16.mxu0 0
    %547 = vmatmul.mubr.bf16.gmra.mrb[0].mxu0 %v496
    %v548 = vpop.f32.mrb[0].mxu0
    %v549 = vadd.f32 %v468, %v548
    %v550 = vpop.f32.mrb[0].mxu0
    %v551 = vadd.f32 %v470, %v550
    %v552 = vpop.f32.mrb[0].mxu0
    %v553 = vpop.f32.mrb[0].mxu0
    %554 = vdwg.mxu0
    %v555 = vpack.c.bf16 %v298, %v293
    %v556 = vpack.c.bf16 %v301, %v301
    %v558 = vsel %vm409, %v555, 0
    %v561 = vsel %vm409, %v556, 0
    %563 = vmatprep.subr.bf16.mxu0 %v404
    %564 = vmatpush1.bf16.msra.mxu0 %v403
    %565 = vmatprep.subr.bf16.mxu0 %v421
    %566 = vmatpush1.bf16.msra.mxu0 %v418
    %567 = vmatprep.subr.bf16.mxu0 0
    %568 = vmatpush1.bf16.msra.mxu0 0
    %569 = vmatprep.subr.bf16.mxu0 0
    %570 = vmatpush1.bf16.msra.mxu0 0
    %571 = vmatprep.subr.bf16.mxu0 0
    %572 = vmatpush1.bf16.msra.mxu0 0
    %573 = vmatprep.subr.bf16.mxu0 0
    %574 = vmatpush1.bf16.msra.mxu0 0
    %575 = vmatprep.subr.bf16.mxu0 0
    %576 = vmatpush1.bf16.msra.mxu0 0
    %577 = vmatprep.subr.bf16.mxu0 0
    %578 = vmatpush1.bf16.msra.mxu0 0
    %579 = vmatprep.subr.bf16.mxu0 0
    %580 = vmatpush1.bf16.msra.mxu0 0
    %581 = vmatprep.subr.bf16.mxu0 0
    %582 = vmatpush1.bf16.msra.mxu0 0
    %583 = vmatprep.subr.bf16.mxu0 0
    %584 = vmatpush1.bf16.msra.mxu0 0
    %585 = vmatprep.subr.bf16.mxu0 0
    %586 = vmatpush1.bf16.msra.mxu0 0
    %587 = vmatprep.subr.bf16.mxu0 0
    %588 = vmatpush1.bf16.msra.mxu0 0
    %589 = vmatprep.subr.bf16.mxu0 0
    %590 = vmatpush1.bf16.msra.mxu0 0
    %591 = vmatprep.subr.bf16.mxu0 0
    %592 = vmatpush1.bf16.msra.mxu0 0
    %593 = vmatprep.subr.bf16.mxu0 0
    %594 = vmatpush1.bf16.msra.mxu0 0
    %595 = vmatprep.mubr.bf16.mxu0 0
    %596 = vmatmul.mubr.bf16.gmra.mrb[0].mxu0 %v558
    %v597 = vpop.f32.mrb[0].mxu0
    %v598 = vadd.f32 0.0, %v597
    %v599 = vpop.f32.mrb[0].mxu0
    %v600 = vadd.f32 0.0, %v599
    %v601 = vpop.f32.mrb[0].mxu0
    %v602 = vadd.f32 0.0, %v601
    %v603 = vpop.f32.mrb[0].mxu0
    %v604 = vadd.f32 0.0, %v603
    %605 = vmatprep.mubr.bf16.mxu0 0
    %606 = vmatmul.mubr.bf16.gmra.mrb[0].mxu0 %v561
    %v607 = vpop.f32.mrb[0].mxu0
    %v608 = vadd.f32 0.0, %v607
    %v609 = vpop.f32.mrb[0].mxu0
    %v610 = vadd.f32 0.0, %v609
    %v611 = vpop.f32.mrb[0].mxu0
    %v612 = vpop.f32.mrb[0].mxu0
    %613 = vdwg.mxu0
    %v615 = vsel %vm409, %v382, 0
    %v618 = vsel %vm409, %v383, 0
    %620 = vmatprep.subr.bf16.mxu0 %v487
    %621 = vmatpush1.bf16.msra.mxu0 %v486
    %622 = vmatprep.subr.bf16.mxu0 %v502
    %623 = vmatpush1.bf16.msra.mxu0 %v499
    %624 = vmatprep.subr.bf16.mxu0 0
    %625 = vmatpush1.bf16.msra.mxu0 0
    %626 = vmatprep.subr.bf16.mxu0 0
    %627 = vmatpush1.bf16.msra.mxu0 0
    %628 = vmatprep.subr.bf16.mxu0 0
    %629 = vmatpush1.bf16.msra.mxu0 0
    %630 = vmatprep.subr.bf16.mxu0 0
    %631 = vmatpush1.bf16.msra.mxu0 0
    %632 = vmatprep.subr.bf16.mxu0 0
    %633 = vmatpush1.bf16.msra.mxu0 0
    %634 = vmatprep.subr.bf16.mxu0 0
    %635 = vmatpush1.bf16.msra.mxu0 0
    %636 = vmatprep.subr.bf16.mxu0 0
    %637 = vmatpush1.bf16.msra.mxu0 0
    %638 = vmatprep.subr.bf16.mxu0 0
    %639 = vmatpush1.bf16.msra.mxu0 0
    %640 = vmatprep.subr.bf16.mxu0 0
    %641 = vmatpush1.bf16.msra.mxu0 0
    %642 = vmatprep.subr.bf16.mxu0 0
    %643 = vmatpush1.bf16.msra.mxu0 0
    %644 = vmatprep.subr.bf16.mxu0 0
    %645 = vmatpush1.bf16.msra.mxu0 0
    %646 = vmatprep.subr.bf16.mxu0 0
    %647 = vmatpush1.bf16.msra.mxu0 0
    %648 = vmatprep.subr.bf16.mxu0 0
    %649 = vmatpush1.bf16.msra.mxu0 0
    %650 = vmatprep.subr.bf16.mxu0 0
    %651 = vmatpush1.bf16.msra.mxu0 0
    %652 = vmatprep.mubr.bf16.mxu0 0
    %653 = vmatmul.mubr.bf16.gmra.mrb[0].mxu0 %v615
    %v654 = vpop.f32.mrb[0].mxu0
    %v655 = vadd.f32 %v598, %v654
    %v656 = vpop.f32.mrb[0].mxu0
    %v657 = vadd.f32 %v600, %v656
    %v658 = vpop.f32.mrb[0].mxu0
    %v659 = vadd.f32 %v602, %v658
    %v660 = vpop.f32.mrb[0].mxu0
    %v661 = vadd.f32 %v604, %v660
    %662 = vmatprep.mubr.bf16.mxu0 0
    %663 = vmatmul.mubr.bf16.gmra.mrb[0].mxu0 %v618
    %v664 = vpop.f32.mrb[0].mxu0
    %v665 = vadd.f32 %v608, %v664
    %v666 = vpop.f32.mrb[0].mxu0
    %v667 = vadd.f32 %v610, %v666
    %v668 = vpop.f32.mrb[0].mxu0
    %v669 = vpop.f32.mrb[0].mxu0
    %670 = vdwg.mxu0
    %s671 = scalar_lea.vmem [#allocation2], 64
    %v672 = vld [vmem:[%s671] sm:$0xff]
    %v673 = vld [vmem:[%s671 + $0x8] sm:$0xff]
    %v674 = vld [vmem:[%s671 + $0x10] sm:$0xff]
    %v675 = vld [vmem:[%s671 + $0x18] sm:$0x33]
    %v676 = vpack.c.bf16 %v309, %v306
    %v677 = vpack.c.bf16 %v314, %v314
    %v682 = vunpack.c.l.b16 %v672
    %v683 = vunpack.c.h.b16 %v672
    %v684 = vunpack.c.l.b16 %v673
    %v685 = vunpack.c.h.b16 %v673
    %v686 = vunpack.c.l.b16 %v674
    %v687 = vunpack.c.h.b16 %v674
    %v688 = vunpack.c.l.b16 %v675
    %v689 = vunpack.c.h.b16 %v675
    %v690 = vpack.c.b16 %v684, %v682
    %v691 = vpack.c.b16 %v685, %v683
    %v692 = vpack.c.b16 %v688, %v686
    %v693 = vpack.c.b16 %v689, %v687
    %v697 = vsel %vm409, %v676, 0
    %v700 = vsel %vm409, %v677, 0
    %v703 = vsel %vm416, %v692, 0
    %v706 = vsel %vm416, %v693, 0
    %708 = vmatprep.subr.bf16.mxu0 %v691
    %709 = vmatpush1.bf16.msra.mxu0 %v690
    %710 = vmatprep.subr.bf16.mxu0 %v706
    %711 = vmatpush1.bf16.msra.mxu0 %v703
    %712 = vmatprep.subr.bf16.mxu0 0
    %713 = vmatpush1.bf16.msra.mxu0 0
    %714 = vmatprep.subr.bf16.mxu0 0
    %715 = vmatpush1.bf16.msra.mxu0 0
    %716 = vmatprep.subr.bf16.mxu0 0
    %717 = vmatpush1.bf16.msra.mxu0 0
    %718 = vmatprep.subr.bf16.mxu0 0
    %719 = vmatpush1.bf16.msra.mxu0 0
    %720 = vmatprep.subr.bf16.mxu0 0
    %721 = vmatpush1.bf16.msra.mxu0 0
    %722 = vmatprep.subr.bf16.mxu0 0
    %723 = vmatpush1.bf16.msra.mxu0 0
    %724 = vmatprep.subr.bf16.mxu0 0
    %725 = vmatpush1.bf16.msra.mxu0 0
    %726 = vmatprep.subr.bf16.mxu0 0
    %727 = vmatpush1.bf16.msra.mxu0 0
    %728 = vmatprep.subr.bf16.mxu0 0
    %729 = vmatpush1.bf16.msra.mxu0 0
    %730 = vmatprep.subr.bf16.mxu0 0
    %731 = vmatpush1.bf16.msra.mxu0 0
    %732 = vmatprep.subr.bf16.mxu0 0
    %733 = vmatpush1.bf16.msra.mxu0 0
    %734 = vmatprep.subr.bf16.mxu0 0
    %735 = vmatpush1.bf16.msra.mxu0 0
    %736 = vmatprep.subr.bf16.mxu0 0
    %737 = vmatpush1.bf16.msra.mxu0 0
    %738 = vmatprep.subr.bf16.mxu0 0
    %739 = vmatpush1.bf16.msra.mxu0 0
    %740 = vmatprep.mubr.bf16.mxu0 0
    %741 = vmatmul.mubr.bf16.gmra.mrb[0].mxu0 %v697
    %v742 = vpop.f32.mrb[0].mxu0
    %v743 = vadd.f32 0.0, %v742
    %v744 = vpop.f32.mrb[0].mxu0
    %v745 = vadd.f32 0.0, %v744
    %v746 = vpop.f32.mrb[0].mxu0
    %v747 = vadd.f32 0.0, %v746
    %v748 = vpop.f32.mrb[0].mxu0
    %v749 = vadd.f32 0.0, %v748
    %750 = vmatprep.mubr.bf16.mxu0 0
    %751 = vmatmul.mubr.bf16.gmra.mrb[0].mxu0 %v700
    %v752 = vpop.f32.mrb[0].mxu0
    %v753 = vadd.f32 0.0, %v752
    %v754 = vpop.f32.mrb[0].mxu0
    %v755 = vadd.f32 0.0, %v754
    %v756 = vpop.f32.mrb[0].mxu0
    %v757 = vpop.f32.mrb[0].mxu0
    %758 = vdwg.mxu0
    %v759 = vadd.f32 %v539, %v743
    %v760 = vadd.f32 %v541, %v745
    %v761 = vadd.f32 %v543, %v747
    %v762 = vadd.f32 %v545, %v749
    %v763 = vadd.f32 %v549, %v753
    %v764 = vadd.f32 %v551, %v755
    %v765 = vpack.c.bf16 %v322, %v317
    %v766 = vpack.c.bf16 %v325, %v325
    %v768 = vsel %vm409, %v765, 0
    %v771 = vsel %vm409, %v766, 0
    %773 = vmatprep.subr.bf16.mxu0 %v691
    %774 = vmatpush1.bf16.msra.mxu0 %v690
    %775 = vmatprep.subr.bf16.mxu0 %v706
    %776 = vmatpush1.bf16.msra.mxu0 %v703
    %777 = vmatprep.subr.bf16.mxu0 0
    %778 = vmatpush1.bf16.msra.mxu0 0
    %779 = vmatprep.subr.bf16.mxu0 0
    %780 = vmatpush1.bf16.msra.mxu0 0
    %781 = vmatprep.subr.bf16.mxu0 0
    %782 = vmatpush1.bf16.msra.mxu0 0
    %783 = vmatprep.subr.bf16.mxu0 0
    %784 = vmatpush1.bf16.msra.mxu0 0
    %785 = vmatprep.subr.bf16.mxu0 0
    %786 = vmatpush1.bf16.msra.mxu0 0
    %787 = vmatprep.subr.bf16.mxu0 0
    %788 = vmatpush1.bf16.msra.mxu0 0
    %789 = vmatprep.subr.bf16.mxu0 0
    %790 = vmatpush1.bf16.msra.mxu0 0
    %791 = vmatprep.subr.bf16.mxu0 0
    %792 = vmatpush1.bf16.msra.mxu0 0
    %793 = vmatprep.subr.bf16.mxu0 0
    %794 = vmatpush1.bf16.msra.mxu0 0
    %795 = vmatprep.subr.bf16.mxu0 0
    %796 = vmatpush1.bf16.msra.mxu0 0
    %797 = vmatprep.subr.bf16.mxu0 0
    %798 = vmatpush1.bf16.msra.mxu0 0
    %799 = vmatprep.subr.bf16.mxu0 0
    %800 = vmatpush1.bf16.msra.mxu0 0
    %801 = vmatprep.subr.bf16.mxu0 0
    %802 = vmatpush1.bf16.msra.mxu0 0
    %803 = vmatprep.subr.bf16.mxu0 0
    %804 = vmatpush1.bf16.msra.mxu0 0
    %805 = vmatprep.mubr.bf16.mxu0 0
    %806 = vmatmul.mubr.bf16.gmra.mrb[0].mxu0 %v768
    %v807 = vpop.f32.mrb[0].mxu0
    %v808 = vadd.f32 0.0, %v807
    %v809 = vpop.f32.mrb[0].mxu0
    %v810 = vadd.f32 0.0, %v809
    %v811 = vpop.f32.mrb[0].mxu0
    %v812 = vadd.f32 0.0, %v811
    %v813 = vpop.f32.mrb[0].mxu0
    %v814 = vadd.f32 0.0, %v813
    %815 = vmatprep.mubr.bf16.mxu0 0
    %816 = vmatmul.mubr.bf16.gmra.mrb[0].mxu0 %v771
    %v817 = vpop.f32.mrb[0].mxu0
    %v818 = vadd.f32 0.0, %v817
    %v819 = vpop.f32.mrb[0].mxu0
    %v820 = vadd.f32 0.0, %v819
    %v821 = vpop.f32.mrb[0].mxu0
    %v822 = vpop.f32.mrb[0].mxu0
    %823 = vdwg.mxu0
    %v824 = vadd.f32 %v655, %v808
    %v825 = vadd.f32 %v657, %v810
    %v826 = vadd.f32 %v659, %v812
    %v827 = vadd.f32 %v661, %v814
    %v828 = vadd.f32 %v665, %v818
    %v829 = vadd.f32 %v667, %v820
    %s830 = scalar_lea.vmem [#allocation2], 96
    %v831 = vld [vmem:[%s830] sm:$0xff]
    %v832 = vld [vmem:[%s830 + $0x8] sm:$0xff]
    %v833 = vld [vmem:[%s830 + $0x10] sm:$0xff]
    %v834 = vld [vmem:[%s830 + $0x18] sm:$0x33]
    %v835 = vpack.c.bf16 %v333, %v330
    %v836 = vpack.c.bf16 %v338, %v338
    %v841 = vunpack.c.l.b16 %v831
    %v842 = vunpack.c.h.b16 %v831
    %v843 = vunpack.c.l.b16 %v832
    %v844 = vunpack.c.h.b16 %v832
    %v845 = vunpack.c.l.b16 %v833
    %v846 = vunpack.c.h.b16 %v833
    %v847 = vunpack.c.l.b16 %v834
    %v848 = vunpack.c.h.b16 %v834
    %v849 = vpack.c.b16 %v843, %v841
    %v850 = vpack.c.b16 %v844, %v842
    %v851 = vpack.c.b16 %v847, %v845
    %v852 = vpack.c.b16 %v848, %v846
    %v856 = vsel %vm409, %v835, 0
    %v859 = vsel %vm409, %v836, 0
    %v862 = vsel %vm416, %v851, 0
    %v865 = vsel %vm416, %v852, 0
    %867 = vmatprep.subr.bf16.mxu0 %v850
    %868 = vmatpush1.bf16.msra.mxu0 %v849
    %869 = vmatprep.subr.bf16.mxu0 %v865
    %870 = vmatpush1.bf16.msra.mxu0 %v862
    %871 = vmatprep.subr.bf16.mxu0 0
    %872 = vmatpush1.bf16.msra.mxu0 0
    %873 = vmatprep.subr.bf16.mxu0 0
    %874 = vmatpush1.bf16.msra.mxu0 0
    %875 = vmatprep.subr.bf16.mxu0 0
    %876 = vmatpush1.bf16.msra.mxu0 0
    %877 = vmatprep.subr.bf16.mxu0 0
    %878 = vmatpush1.bf16.msra.mxu0 0
    %879 = vmatprep.subr.bf16.mxu0 0
    %880 = vmatpush1.bf16.msra.mxu0 0
    %881 = vmatprep.subr.bf16.mxu0 0
    %882 = vmatpush1.bf16.msra.mxu0 0
    %883 = vmatprep.subr.bf16.mxu0 0
    %884 = vmatpush1.bf16.msra.mxu0 0
    %885 = vmatprep.subr.bf16.mxu0 0
    %886 = vmatpush1.bf16.msra.mxu0 0
    %887 = vmatprep.subr.bf16.mxu0 0
    %888 = vmatpush1.bf16.msra.mxu0 0
    %889 = vmatprep.subr.bf16.mxu0 0
    %890 = vmatpush1.bf16.msra.mxu0 0
    %891 = vmatprep.subr.bf16.mxu0 0
    %892 = vmatpush1.bf16.msra.mxu0 0
    %893 = vmatprep.subr.bf16.mxu0 0
    %894 = vmatpush1.bf16.msra.mxu0 0
    %895 = vmatprep.subr.bf16.mxu0 0
    %896 = vmatpush1.bf16.msra.mxu0 0
    %897 = vmatprep.subr.bf16.mxu0 0
    %898 = vmatpush1.bf16.msra.mxu0 0
    %899 = vmatprep.mubr.bf16.mxu0 0
    %900 = vmatmul.mubr.bf16.gmra.mrb[0].mxu0 %v856
    %v901 = vpop.f32.mrb[0].mxu0
    %v902 = vadd.f32 0.0, %v901
    %v903 = vpop.f32.mrb[0].mxu0
    %v904 = vadd.f32 0.0, %v903
    %v905 = vpop.f32.mrb[0].mxu0
    %v906 = vadd.f32 0.0, %v905
    %v907 = vpop.f32.mrb[0].mxu0
    %v908 = vadd.f32 0.0, %v907
    %909 = vmatprep.mubr.bf16.mxu0 0
    %910 = vmatmul.mubr.bf16.gmra.mrb[0].mxu0 %v859
    %v911 = vpop.f32.mrb[0].mxu0
    %v912 = vadd.f32 0.0, %v911
    %v913 = vpop.f32.mrb[0].mxu0
    %v914 = vadd.f32 0.0, %v913
    %v915 = vpop.f32.mrb[0].mxu0
    %v916 = vpop.f32.mrb[0].mxu0
    %917 = vdwg.mxu0
    %v918 = vadd.f32 %v759, %v902
    %v919 = vadd.f32 %v760, %v904
    %v920 = vadd.f32 %v761, %v906
    %v921 = vadd.f32 %v762, %v908
    %v922 = vadd.f32 %v763, %v912
    %v923 = vadd.f32 %v764, %v914
    %v924 = vpack.c.bf16 %v346, %v341
    %v925 = vpack.c.bf16 %v349, %v349
    %v927 = vsel %vm409, %v924, 0
    %v930 = vsel %vm409, %v925, 0
    %932 = vmatprep.subr.bf16.mxu0 %v850
    %933 = vmatpush1.bf16.msra.mxu0 %v849
    %934 = vmatprep.subr.bf16.mxu0 %v865
    %935 = vmatpush1.bf16.msra.mxu0 %v862
    %936 = vmatprep.subr.bf16.mxu0 0
    %937 = vmatpush1.bf16.msra.mxu0 0
    %938 = vmatprep.subr.bf16.mxu0 0
    %939 = vmatpush1.bf16.msra.mxu0 0
    %940 = vmatprep.subr.bf16.mxu0 0
    %941 = vmatpush1.bf16.msra.mxu0 0
    %942 = vmatprep.subr.bf16.mxu0 0
    %943 = vmatpush1.bf16.msra.mxu0 0
    %944 = vmatprep.subr.bf16.mxu0 0
    %945 = vmatpush1.bf16.msra.mxu0 0
    %946 = vmatprep.subr.bf16.mxu0 0
    %947 = vmatpush1.bf16.msra.mxu0 0
    %948 = vmatprep.subr.bf16.mxu0 0
    %949 = vmatpush1.bf16.msra.mxu0 0
    %950 = vmatprep.subr.bf16.mxu0 0
    %951 = vmatpush1.bf16.msra.mxu0 0
    %952 = vmatprep.subr.bf16.mxu0 0
    %953 = vmatpush1.bf16.msra.mxu0 0
    %954 = vmatprep.subr.bf16.mxu0 0
    %955 = vmatpush1.bf16.msra.mxu0 0
    %956 = vmatprep.subr.bf16.mxu0 0
    %957 = vmatpush1.bf16.msra.mxu0 0
    %958 = vmatprep.subr.bf16.mxu0 0
    %959 = vmatpush1.bf16.msra.mxu0 0
    %960 = vmatprep.subr.bf16.mxu0 0
    %961 = vmatpush1.bf16.msra.mxu0 0
    %962 = vmatprep.subr.bf16.mxu0 0
    %963 = vmatpush1.bf16.msra.mxu0 0
    %964 = vmatprep.mubr.bf16.mxu0 0
    %965 = vmatmul.mubr.bf16.gmra.mrb[0].mxu0 %v927
    %v966 = vpop.f32.mrb[0].mxu0
    %v967 = vadd.f32 0.0, %v966
    %v968 = vpop.f32.mrb[0].mxu0
    %v969 = vadd.f32 0.0, %v968
    %v970 = vpop.f32.mrb[0].mxu0
    %v971 = vadd.f32 0.0, %v970
    %v972 = vpop.f32.mrb[0].mxu0
    %v973 = vadd.f32 0.0, %v972
    %974 = vmatprep.mubr.bf16.mxu0 0
    %975 = vmatmul.mubr.bf16.gmra.mrb[0].mxu0 %v930
    %v976 = vpop.f32.mrb[0].mxu0
    %v977 = vadd.f32 0.0, %v976
    %v978 = vpop.f32.mrb[0].mxu0
    %v979 = vadd.f32 0.0, %v978
    %v980 = vpop.f32.mrb[0].mxu0
    %v981 = vpop.f32.mrb[0].mxu0
    %982 = vdwg.mxu0
    %v983 = vadd.f32 %v824, %v967
    %v984 = vadd.f32 %v825, %v969
    %v985 = vadd.f32 %v826, %v971
    %v986 = vadd.f32 %v827, %v973
    %v987 = vadd.f32 %v828, %v977
    %v988 = vadd.f32 %v829, %v979
    %s989 = scalar_lea.vmem [#allocation2], 128
    %v990 = vld [vmem:[%s989] sm:$0xff]
    %v991 = vld [vmem:[%s989 + $0x8] sm:$0xff]
    %v992 = vld [vmem:[%s989 + $0x10] sm:$0xff]
    %v993 = vld [vmem:[%s989 + $0x18] sm:$0x33]
    %v994 = vpack.c.bf16 %v357, %v354
    %v995 = vpack.c.bf16 %v362, %v362
    %v1000 = vunpack.c.l.b16 %v990
    %v1001 = vunpack.c.h.b16 %v990
    %v1002 = vunpack.c.l.b16 %v991
    %v1003 = vunpack.c.h.b16 %v991
    %v1004 = vunpack.c.l.b16 %v992
    %v1005 = vunpack.c.h.b16 %v992
    %v1006 = vunpack.c.l.b16 %v993
    %v1007 = vunpack.c.h.b16 %v993
    %v1008 = vpack.c.b16 %v1002, %v1000
    %v1009 = vpack.c.b16 %v1003, %v1001
    %v1010 = vpack.c.b16 %v1006, %v1004
    %v1011 = vpack.c.b16 %v1007, %v1005
    %v1015 = vsel %vm409, %v994, 0
    %v1018 = vsel %vm409, %v995, 0
    %v1021 = vsel %vm416, %v1010, 0
    %v1024 = vsel %vm416, %v1011, 0
    %1026 = vmatprep.subr.bf16.mxu0 %v1009
    %1027 = vmatpush1.bf16.msra.mxu0 %v1008
    %1028 = vmatprep.subr.bf16.mxu0 %v1024
    %1029 = vmatpush1.bf16.msra.mxu0 %v1021
    %1030 = vmatprep.subr.bf16.mxu0 0
    %1031 = vmatpush1.bf16.msra.mxu0 0
    %1032 = vmatprep.subr.bf16.mxu0 0
    %1033 = vmatpush1.bf16.msra.mxu0 0
    %1034 = vmatprep.subr.bf16.mxu0 0
    %1035 = vmatpush1.bf16.msra.mxu0 0
    %1036 = vmatprep.subr.bf16.mxu0 0
    %1037 = vmatpush1.bf16.msra.mxu0 0
    %1038 = vmatprep.subr.bf16.mxu0 0
    %1039 = vmatpush1.bf16.msra.mxu0 0
    %1040 = vmatprep.subr.bf16.mxu0 0
    %1041 = vmatpush1.bf16.msra.mxu0 0
    %1042 = vmatprep.subr.bf16.mxu0 0
    %1043 = vmatpush1.bf16.msra.mxu0 0
    %1044 = vmatprep.subr.bf16.mxu0 0
    %1045 = vmatpush1.bf16.msra.mxu0 0
    %1046 = vmatprep.subr.bf16.mxu0 0
    %1047 = vmatpush1.bf16.msra.mxu0 0
    %1048 = vmatprep.subr.bf16.mxu0 0
    %1049 = vmatpush1.bf16.msra.mxu0 0
    %1050 = vmatprep.subr.bf16.mxu0 0
    %1051 = vmatpush1.bf16.msra.mxu0 0
    %1052 = vmatprep.subr.bf16.mxu0 0
    %1053 = vmatpush1.bf16.msra.mxu0 0
    %1054 = vmatprep.subr.bf16.mxu0 0
    %1055 = vmatpush1.bf16.msra.mxu0 0
    %1056 = vmatprep.subr.bf16.mxu0 0
    %1057 = vmatpush1.bf16.msra.mxu0 0
    %1058 = vmatprep.mubr.bf16.mxu0 0
    %1059 = vmatmul.mubr.bf16.gmra.mrb[0].mxu0 %v1015
    %v1060 = vpop.f32.mrb[0].mxu0
    %v1061 = vadd.f32 0.0, %v1060
    %v1062 = vpop.f32.mrb[0].mxu0
    %v1063 = vadd.f32 0.0, %v1062
    %v1064 = vpop.f32.mrb[0].mxu0
    %v1065 = vadd.f32 0.0, %v1064
    %v1066 = vpop.f32.mrb[0].mxu0
    %v1067 = vadd.f32 0.0, %v1066
    %1068 = vmatprep.mubr.bf16.mxu0 0
    %1069 = vmatmul.mubr.bf16.gmra.mrb[0].mxu0 %v1018
    %v1070 = vpop.f32.mrb[0].mxu0
    %v1071 = vadd.f32 0.0, %v1070
    %v1072 = vpop.f32.mrb[0].mxu0
    %v1073 = vadd.f32 0.0, %v1072
    %v1074 = vpop.f32.mrb[0].mxu0
    %v1075 = vpop.f32.mrb[0].mxu0
    %1076 = vdwg.mxu0
    %v1077 = vadd.f32 %v918, %v1061
    %v1078 = vadd.f32 %v919, %v1063
    %v1079 = vadd.f32 %v920, %v1065
    %v1080 = vadd.f32 %v921, %v1067
    %v1081 = vadd.f32 %v922, %v1071
    %v1082 = vadd.f32 %v923, %v1073
    %v1083 = vpack.c.bf16 %v370, %v365
    %v1084 = vpack.c.bf16 %v373, %v373
    %v1086 = vsel %vm409, %v1083, 0
    %v1089 = vsel %vm409, %v1084, 0
    %1091 = vmatprep.subr.bf16.mxu0 %v1009
    %1092 = vmatpush1.bf16.msra.mxu0 %v1008
    %1093 = vmatprep.subr.bf16.mxu0 %v1024
    %1094 = vmatpush1.bf16.msra.mxu0 %v1021
    %1095 = vmatprep.subr.bf16.mxu0 0
    %1096 = vmatpush1.bf16.msra.mxu0 0
    %1097 = vmatprep.subr.bf16.mxu0 0
    %1098 = vmatpush1.bf16.msra.mxu0 0
    %1099 = vmatprep.subr.bf16.mxu0 0
    %1100 = vmatpush1.bf16.msra.mxu0 0
    %1101 = vmatprep.subr.bf16.mxu0 0
    %1102 = vmatpush1.bf16.msra.mxu0 0
    %1103 = vmatprep.subr.bf16.mxu0 0
    %1104 = vmatpush1.bf16.msra.mxu0 0
    %1105 = vmatprep.subr.bf16.mxu0 0
    %1106 = vmatpush1.bf16.msra.mxu0 0
    %1107 = vmatprep.subr.bf16.mxu0 0
    %1108 = vmatpush1.bf16.msra.mxu0 0
    %1109 = vmatprep.subr.bf16.mxu0 0
    %1110 = vmatpush1.bf16.msra.mxu0 0
    %1111 = vmatprep.subr.bf16.mxu0 0
    %1112 = vmatpush1.bf16.msra.mxu0 0
    %1113 = vmatprep.subr.bf16.mxu0 0
    %1114 = vmatpush1.bf16.msra.mxu0 0
    %1115 = vmatprep.subr.bf16.mxu0 0
    %1116 = vmatpush1.bf16.msra.mxu0 0
    %1117 = vmatprep.subr.bf16.mxu0 0
    %1118 = vmatpush1.bf16.msra.mxu0 0
    %1119 = vmatprep.subr.bf16.mxu0 0
    %1120 = vmatpush1.bf16.msra.mxu0 0
    %1121 = vmatprep.subr.bf16.mxu0 0
    %1122 = vmatpush1.bf16.msra.mxu0 0
    %1123 = vmatprep.mubr.bf16.mxu0 0
    %1124 = vmatmul.mubr.bf16.gmra.mrb[0].mxu0 %v1086
    %v1125 = vpop.f32.mrb[0].mxu0
    %v1126 = vadd.f32 0.0, %v1125
    %v1127 = vpop.f32.mrb[0].mxu0
    %v1128 = vadd.f32 0.0, %v1127
    %v1129 = vpop.f32.mrb[0].mxu0
    %v1130 = vadd.f32 0.0, %v1129
    %v1131 = vpop.f32.mrb[0].mxu0
    %v1132 = vadd.f32 0.0, %v1131
    %1133 = vmatprep.mubr.bf16.mxu0 0
    %1134 = vmatmul.mubr.bf16.gmra.mrb[0].mxu0 %v1089
    %v1135 = vpop.f32.mrb[0].mxu0
    %v1136 = vadd.f32 0.0, %v1135
    %v1137 = vpop.f32.mrb[0].mxu0
    %v1138 = vadd.f32 0.0, %v1137
    %v1139 = vpop.f32.mrb[0].mxu0
    %v1140 = vpop.f32.mrb[0].mxu0
    %1141 = vdwg.mxu0
    %v1142 = vadd.f32 %v983, %v1126
    %v1143 = vadd.f32 %v984, %v1128
    %v1144 = vadd.f32 %v985, %v1130
    %v1145 = vadd.f32 %v986, %v1132
    %v1146 = vadd.f32 %v987, %v1136
    %v1147 = vadd.f32 %v988, %v1138
    %v1148 = vmax.f32 %v1077, %v1078
    %v1149 = vmax.f32 %v1079, %v1080
    %v1150 = vmax.f32 %v1081, %v1082
    %v1151 = vmax.f32 %v1142, %v1143
    %v1152 = vmax.f32 %v1144, %v1145
    %v1153 = vmax.f32 %v1146, %v1147
    %v1154 = vmax.f32 %v1148, %v1151
    %v1155 = vmax.f32 %v1149, %v1152
    %v1156 = vmax.f32 %v1150, %v1153
    %v1157 = vlaneseq
    %v1158 = vshrl.u32 %v1157, 7
    %v1159 = vsub.s32 0, %v1158
    %v1160 = vrot.slane %v56, %v1159
    %v1161 = vadd.f32 %v1154, %v1160
    %v1162 = vadd.f32 %v1155, %v1160
    %v1163 = vadd.f32 %v1156, %v1160
    %v1164 = vmax.f32 %v1161, 0.0
    %v1165 = vmax.f32 %v1162, 0.0
    %v1166 = vmax.f32 %v1163, 0.0
    %v1167 = vld [vmem:[%s2] sm:$0xf]
    %v1168 = vld [vmem:[%s2 + $0x4] sm:$0xf]
    %v1169 = vld [vmem:[%s2 + $0x8] sm:$0xf]
    %v1170 = vld [vmem:[%s2 + $0xc] sm:$0xf]
    %v1171 = vld [vmem:[%s2 + $0x10] sm:$0xf]
    %v1172 = vld [vmem:[%s2 + $0x14] sm:$0xf]
    %v1173 = vld [vmem:[%s2 + $0x18] sm:$0xf]
    %v1174 = vld [vmem:[%s2 + $0x1c] sm:$0xf]
    %v1175 = vld [vmem:[%s2 + $0x20] sm:$0xf]
    %v1176 = vld [vmem:[%s2 + $0x24] sm:$0xf]
    %v1177 = vld [vmem:[%s2 + $0x28] sm:$0xf]
    %v1178 = vld [vmem:[%s2 + $0x2c] sm:$0xf]
    %v1179 = vld [vmem:[%s2 + $0x30] sm:$0xf]
    %v1180 = vld [vmem:[%s2 + $0x34] sm:$0xf]
    %v1181 = vld [vmem:[%s2 + $0x38] sm:$0xf]
    %v1182 = vld [vmem:[%s2 + $0x3c] sm:$0xf]
    %v1183 = vld [vmem:[%s2 + $0x40] sm:$0xf]
    %v1184 = vld [vmem:[%s2 + $0x44] sm:$0xf]
    %v1185 = vld [vmem:[%s2 + $0x48] sm:$0xf]
    %v1186 = vld [vmem:[%s2 + $0x4c] sm:$0xf]
    %v1187 = vld [vmem:[%s2 + $0x50] sm:$0xf]
    %v1188 = vld [vmem:[%s2 + $0x54] sm:$0xf]
    %v1189 = vld [vmem:[%s2 + $0x58] sm:$0xf]
    %v1190 = vld [vmem:[%s2 + $0x5c] sm:$0xf]
    %v1191 = vld [vmem:[%s2 + $0x60] sm:$0xf]
    %v1192 = vld [vmem:[%s2 + $0x64] sm:$0xf]
    %v1193 = vld [vmem:[%s2 + $0x68] sm:$0xf]
    %v1194 = vld [vmem:[%s2 + $0x6c] sm:$0xf]
    %v1195 = vld [vmem:[%s2 + $0x70] sm:$0xf]
    %v1196 = vld [vmem:[%s2 + $0x74] sm:$0xf]
    %v1197 = vld [vmem:[%s2 + $0x78] sm:$0xf]
    %v1198 = vld [vmem:[%s2 + $0x7c] sm:$0xf]
    %v1199 = vld [vmem:[%s2 + $0x80] sm:$0xf]
    %v1200 = vld [vmem:[%s2 + $0x84] sm:$0xf]
    %v1201 = vld [vmem:[%s2 + $0x88] sm:$0xf]
    %v1202 = vld [vmem:[%s2 + $0x8c] sm:$0xf]
    %v1203 = vld [vmem:[%s2 + $0x90] sm:$0xf]
    %v1204 = vld [vmem:[%s2 + $0x94] sm:$0xf]
    %v1205 = vld [vmem:[%s2 + $0x98] sm:$0xf]
    %v1206 = vld [vmem:[%s2 + $0x9c] sm:$0xf]
    %v1207 = vpack.c.bf16 %v1165, %v1164
    %v1208 = vpack.c.bf16 %v1166, %v1166
    %v1249 = vunpack.c.l.b16 %v1167
    %v1250 = vunpack.c.l.b16 %v1168
    %v1251 = vunpack.c.l.b16 %v1169
    %v1252 = vunpack.c.l.b16 %v1170
    %v1253 = vunpack.c.l.b16 %v1171
    %v1254 = vunpack.c.l.b16 %v1172
    %v1255 = vunpack.c.l.b16 %v1173
    %v1256 = vunpack.c.l.b16 %v1174
    %v1257 = vunpack.c.l.b16 %v1175
    %v1258 = vunpack.c.l.b16 %v1176
    %v1259 = vunpack.c.l.b16 %v1177
    %v1260 = vunpack.c.l.b16 %v1178
    %v1261 = vunpack.c.l.b16 %v1179
    %v1262 = vunpack.c.l.b16 %v1180
    %v1263 = vunpack.c.l.b16 %v1181
    %v1264 = vunpack.c.l.b16 %v1182
    %v1265 = vunpack.c.l.b16 %v1183
    %v1266 = vunpack.c.l.b16 %v1184
    %v1267 = vunpack.c.l.b16 %v1185
    %v1268 = vunpack.c.l.b16 %v1186
    %v1269 = vunpack.c.l.b16 %v1187
    %v1270 = vunpack.c.l.b16 %v1188
    %v1271 = vunpack.c.l.b16 %v1189
    %v1272 = vunpack.c.l.b16 %v1190
    %v1273 = vunpack.c.l.b16 %v1191
    %v1274 = vunpack.c.l.b16 %v1192
    %v1275 = vunpack.c.l.b16 %v1193
    %v1276 = vunpack.c.l.b16 %v1194
    %v1277 = vunpack.c.l.b16 %v1195
    %v1278 = vunpack.c.l.b16 %v1196
    %v1279 = vunpack.c.l.b16 %v1197
    %v1280 = vunpack.c.l.b16 %v1198
    %v1281 = vunpack.c.l.b16 %v1199
    %v1282 = vunpack.c.l.b16 %v1200
    %v1283 = vunpack.c.l.b16 %v1201
    %v1284 = vunpack.c.l.b16 %v1202
    %v1285 = vunpack.c.l.b16 %v1203
    %v1286 = vunpack.c.l.b16 %v1204
    %v1287 = vunpack.c.l.b16 %v1205
    %v1288 = vunpack.c.l.b16 %v1206
    %v1289 = vpack.c.b16 %v1250, %v1249
    %v1290 = vpack.c.b16 %v1252, %v1251
    %v1291 = vpack.c.b16 %v1254, %v1253
    %v1292 = vpack.c.b16 %v1256, %v1255
    %v1293 = vpack.c.b16 %v1258, %v1257
    %v1294 = vpack.c.b16 %v1260, %v1259
    %v1295 = vpack.c.b16 %v1262, %v1261
    %v1296 = vpack.c.b16 %v1264, %v1263
    %v1297 = vpack.c.b16 %v1266, %v1265
    %v1298 = vpack.c.b16 %v1268, %v1267
    %v1299 = vpack.c.b16 %v1270, %v1269
    %v1300 = vpack.c.b16 %v1272, %v1271
    %v1301 = vpack.c.b16 %v1274, %v1273
    %v1302 = vpack.c.b16 %v1276, %v1275
    %v1303 = vpack.c.b16 %v1278, %v1277
    %v1304 = vpack.c.b16 %v1280, %v1279
    %v1305 = vpack.c.b16 %v1282, %v1281
    %v1306 = vpack.c.b16 %v1284, %v1283
    %v1307 = vpack.c.b16 %v1286, %v1285
    %v1308 = vpack.c.b16 %v1288, %v1287
    %vm1309 = vcmask 195584
    %v1311 = vsel %vm1309, %v1289, 0
    %v1314 = vsel %vm1309, %v1290, 0
    %v1317 = vsel %vm1309, %v1291, 0
    %v1320 = vsel %vm1309, %v1292, 0
    %v1323 = vsel %vm1309, %v1293, 0
    %v1326 = vsel %vm1309, %v1294, 0
    %v1329 = vsel %vm1309, %v1295, 0
    %v1332 = vsel %vm1309, %v1296, 0
    %v1335 = vsel %vm1309, %v1297, 0
    %v1338 = vsel %vm1309, %v1298, 0
    %v1341 = vsel %vm1309, %v1299, 0
    %v1344 = vsel %vm1309, %v1300, 0
    %v1347 = vsel %vm1309, %v1301, 0
    %v1350 = vsel %vm1309, %v1302, 0
    %v1353 = vsel %vm1309, %v1303, 0
    %v1356 = vsel %vm1309, %v1304, 0
    %v1359 = vsel %vm1309, %v1305, 0
    %v1362 = vsel %vm1309, %v1306, 0
    %v1365 = vsel %vm1309, %v1307, 0
    %v1368 = vsel %vm1309, %v1308, 0
    %v1371 = vsel %vm219, %v1208, 0
    %1373 = vmatprep.subr.bf16.mxu0 0
    %1374 = vmatpush1.bf16.msra.mxu0 %v1207
    %1375 = vmatprep.subr.bf16.mxu0 0
    %1376 = vmatpush1.bf16.msra.mxu0 %v1371
    %1377 = vmatprep.subr.bf16.mxu0 0
    %1378 = vmatpush1.bf16.msra.mxu0 0
    %1379 = vmatprep.subr.bf16.mxu0 0
    %1380 = vmatpush1.bf16.msra.mxu0 0
    %1381 = vmatprep.subr.bf16.mxu0 0
    %1382 = vmatpush1.bf16.msra.mxu0 0
    %1383 = vmatprep.subr.bf16.mxu0 0
    %1384 = vmatpush1.bf16.msra.mxu0 0
    %1385 = vmatprep.subr.bf16.mxu0 0
    %1386 = vmatpush1.bf16.msra.mxu0 0
    %1387 = vmatprep.subr.bf16.mxu0 0
    %1388 = vmatpush1.bf16.msra.mxu0 0
    %1389 = vmatprep.subr.bf16.mxu0 0
    %1390 = vmatpush1.bf16.msra.mxu0 0
    %1391 = vmatprep.subr.bf16.mxu0 0
    %1392 = vmatpush1.bf16.msra.mxu0 0
    %1393 = vmatprep.subr.bf16.mxu0 0
    %1394 = vmatpush1.bf16.msra.mxu0 0
    %1395 = vmatprep.subr.bf16.mxu0 0
    %1396 = vmatpush1.bf16.msra.mxu0 0
    %1397 = vmatprep.subr.bf16.mxu0 0
    %1398 = vmatpush1.bf16.msra.mxu0 0
    %1399 = vmatprep.subr.bf16.mxu0 0
    %1400 = vmatpush1.bf16.msra.mxu0 0
    %1401 = vmatprep.subr.bf16.mxu0 0
    %1402 = vmatpush1.bf16.msra.mxu0 0
    %1403 = vmatprep.subr.bf16.mxu0 0
    %1404 = vmatpush1.bf16.msra.mxu0 0
    %1405 = vmatprep.mubr.bf16.mxu0 0
    %1406 = vmatmul.mubr.bf16.gmra.mrb[0].mxu0 %v1311
    %v1407 = vpop.f32.mrb[0].mxu0
    %v1408 = vadd.f32 0.0, %v1407
    %v1409 = vpop.f32.mrb[0].mxu0
    %v1410 = vpop.f32.mrb[0].mxu0
    %v1411 = vadd.f32 0.0, %v1410
    %v1412 = vpop.f32.mrb[0].mxu0
    %1413 = vmatprep.mubr.bf16.mxu0 0
    %1414 = vmatmul.mubr.bf16.gmra.mrb[0].mxu0 %v1314
    %v1415 = vpop.f32.mrb[0].mxu0
    %v1416 = vadd.f32 0.0, %v1415
    %v1417 = vpop.f32.mrb[0].mxu0
    %v1418 = vpop.f32.mrb[0].mxu0
    %v1419 = vadd.f32 0.0, %v1418
    %v1420 = vpop.f32.mrb[0].mxu0
    %1421 = vmatprep.mubr.bf16.mxu0 0
    %1422 = vmatmul.mubr.bf16.gmra.mrb[0].mxu0 %v1317
    %v1423 = vpop.f32.mrb[0].mxu0
    %v1424 = vadd.f32 0.0, %v1423
    %v1425 = vpop.f32.mrb[0].mxu0
    %v1426 = vpop.f32.mrb[0].mxu0
    %v1427 = vadd.f32 0.0, %v1426
    %v1428 = vpop.f32.mrb[0].mxu0
    %1429 = vmatprep.mubr.bf16.mxu0 0
    %1430 = vmatmul.mubr.bf16.gmra.mrb[0].mxu0 %v1320
    %v1431 = vpop.f32.mrb[0].mxu0
    %v1432 = vadd.f32 0.0, %v1431
    %v1433 = vpop.f32.mrb[0].mxu0
    %v1434 = vpop.f32.mrb[0].mxu0
    %v1435 = vadd.f32 0.0, %v1434
    %v1436 = vpop.f32.mrb[0].mxu0
    %1437 = vmatprep.mubr.bf16.mxu0 0
    %1438 = vmatmul.mubr.bf16.gmra.mrb[0].mxu0 %v1323
    %v1439 = vpop.f32.mrb[0].mxu0
    %v1440 = vadd.f32 0.0, %v1439
    %v1441 = vpop.f32.mrb[0].mxu0
    %v1442 = vpop.f32.mrb[0].mxu0
    %v1443 = vadd.f32 0.0, %v1442
    %v1444 = vpop.f32.mrb[0].mxu0
    %1445 = vmatprep.mubr.bf16.mxu0 0
    %1446 = vmatmul.mubr.bf16.gmra.mrb[0].mxu0 %v1326
    %v1447 = vpop.f32.mrb[0].mxu0
    %v1448 = vadd.f32 0.0, %v1447
    %v1449 = vpop.f32.mrb[0].mxu0
    %v1450 = vpop.f32.mrb[0].mxu0
    %v1451 = vadd.f32 0.0, %v1450
    %v1452 = vpop.f32.mrb[0].mxu0
    %1453 = vmatprep.mubr.bf16.mxu0 0
    %1454 = vmatmul.mubr.bf16.gmra.mrb[0].mxu0 %v1329
    %v1455 = vpop.f32.mrb[0].mxu0
    %v1456 = vadd.f32 0.0, %v1455
    %v1457 = vpop.f32.mrb[0].mxu0
    %v1458 = vpop.f32.mrb[0].mxu0
    %v1459 = vadd.f32 0.0, %v1458
    %v1460 = vpop.f32.mrb[0].mxu0
    %1461 = vmatprep.mubr.bf16.mxu0 0
    %1462 = vmatmul.mubr.bf16.gmra.mrb[0].mxu0 %v1332
    %v1463 = vpop.f32.mrb[0].mxu0
    %v1464 = vadd.f32 0.0, %v1463
    %v1465 = vpop.f32.mrb[0].mxu0
    %v1466 = vpop.f32.mrb[0].mxu0
    %v1467 = vadd.f32 0.0, %v1466
    %v1468 = vpop.f32.mrb[0].mxu0
    %1469 = vmatprep.mubr.bf16.mxu0 0
    %1470 = vmatmul.mubr.bf16.gmra.mrb[0].mxu0 %v1335
    %v1471 = vpop.f32.mrb[0].mxu0
    %v1472 = vadd.f32 0.0, %v1471
    %v1473 = vpop.f32.mrb[0].mxu0
    %v1474 = vpop.f32.mrb[0].mxu0
    %v1475 = vadd.f32 0.0, %v1474
    %v1476 = vpop.f32.mrb[0].mxu0
    %1477 = vmatprep.mubr.bf16.mxu0 0
    %1478 = vmatmul.mubr.bf16.gmra.mrb[0].mxu0 %v1338
    %v1479 = vpop.f32.mrb[0].mxu0
    %v1480 = vadd.f32 0.0, %v1479
    %v1481 = vpop.f32.mrb[0].mxu0
    %v1482 = vpop.f32.mrb[0].mxu0
    %v1483 = vadd.f32 0.0, %v1482
    %v1484 = vpop.f32.mrb[0].mxu0
    %1485 = vmatprep.mubr.bf16.mxu0 0
    %1486 = vmatmul.mubr.bf16.gmra.mrb[0].mxu0 %v1341
    %v1487 = vpop.f32.mrb[0].mxu0
    %v1488 = vadd.f32 0.0, %v1487
    %v1489 = vpop.f32.mrb[0].mxu0
    %v1490 = vpop.f32.mrb[0].mxu0
    %v1491 = vadd.f32 0.0, %v1490
    %v1492 = vpop.f32.mrb[0].mxu0
    %1493 = vmatprep.mubr.bf16.mxu0 0
    %1494 = vmatmul.mubr.bf16.gmra.mrb[0].mxu0 %v1344
    %v1495 = vpop.f32.mrb[0].mxu0
    %v1496 = vadd.f32 0.0, %v1495
    %v1497 = vpop.f32.mrb[0].mxu0
    %v1498 = vpop.f32.mrb[0].mxu0
    %v1499 = vadd.f32 0.0, %v1498
    %v1500 = vpop.f32.mrb[0].mxu0
    %1501 = vmatprep.mubr.bf16.mxu0 0
    %1502 = vmatmul.mubr.bf16.gmra.mrb[0].mxu0 %v1347
    %v1503 = vpop.f32.mrb[0].mxu0
    %v1504 = vadd.f32 0.0, %v1503
    %v1505 = vpop.f32.mrb[0].mxu0
    %v1506 = vpop.f32.mrb[0].mxu0
    %v1507 = vadd.f32 0.0, %v1506
    %v1508 = vpop.f32.mrb[0].mxu0
    %1509 = vmatprep.mubr.bf16.mxu0 0
    %1510 = vmatmul.mubr.bf16.gmra.mrb[0].mxu0 %v1350
    %v1511 = vpop.f32.mrb[0].mxu0
    %v1512 = vadd.f32 0.0, %v1511
    %v1513 = vpop.f32.mrb[0].mxu0
    %v1514 = vpop.f32.mrb[0].mxu0
    %v1515 = vadd.f32 0.0, %v1514
    %v1516 = vpop.f32.mrb[0].mxu0
    %1517 = vmatprep.mubr.bf16.mxu0 0
    %1518 = vmatmul.mubr.bf16.gmra.mrb[0].mxu0 %v1353
    %v1519 = vpop.f32.mrb[0].mxu0
    %v1520 = vadd.f32 0.0, %v1519
    %v1521 = vpop.f32.mrb[0].mxu0
    %v1522 = vpop.f32.mrb[0].mxu0
    %v1523 = vadd.f32 0.0, %v1522
    %v1524 = vpop.f32.mrb[0].mxu0
    %1525 = vmatprep.mubr.bf16.mxu0 0
    %1526 = vmatmul.mubr.bf16.gmra.mrb[0].mxu0 %v1356
    %v1527 = vpop.f32.mrb[0].mxu0
    %v1528 = vadd.f32 0.0, %v1527
    %v1529 = vpop.f32.mrb[0].mxu0
    %v1530 = vpop.f32.mrb[0].mxu0
    %v1531 = vadd.f32 0.0, %v1530
    %v1532 = vpop.f32.mrb[0].mxu0
    %1533 = vmatprep.mubr.bf16.mxu0 0
    %1534 = vmatmul.mubr.bf16.gmra.mrb[0].mxu0 %v1359
    %v1535 = vpop.f32.mrb[0].mxu0
    %v1536 = vadd.f32 0.0, %v1535
    %v1537 = vpop.f32.mrb[0].mxu0
    %v1538 = vpop.f32.mrb[0].mxu0
    %v1539 = vadd.f32 0.0, %v1538
    %v1540 = vpop.f32.mrb[0].mxu0
    %1541 = vmatprep.mubr.bf16.mxu0 0
    %1542 = vmatmul.mubr.bf16.gmra.mrb[0].mxu0 %v1362
    %v1543 = vpop.f32.mrb[0].mxu0
    %v1544 = vadd.f32 0.0, %v1543
    %v1545 = vpop.f32.mrb[0].mxu0
    %v1546 = vpop.f32.mrb[0].mxu0
    %v1547 = vadd.f32 0.0, %v1546
    %v1548 = vpop.f32.mrb[0].mxu0
    %1549 = vmatprep.mubr.bf16.mxu0 0
    %1550 = vmatmul.mubr.bf16.gmra.mrb[0].mxu0 %v1365
    %v1551 = vpop.f32.mrb[0].mxu0
    %v1552 = vadd.f32 0.0, %v1551
    %v1553 = vpop.f32.mrb[0].mxu0
    %v1554 = vpop.f32.mrb[0].mxu0
    %v1555 = vadd.f32 0.0, %v1554
    %v1556 = vpop.f32.mrb[0].mxu0
    %1557 = vmatprep.mubr.bf16.mxu0 0
    %1558 = vmatmul.mubr.bf16.gmra.mrb[0].mxu0 %v1368
    %v1559 = vpop.f32.mrb[0].mxu0
    %v1560 = vadd.f32 0.0, %v1559
    %v1561 = vpop.f32.mrb[0].mxu0
    %v1562 = vpop.f32.mrb[0].mxu0
    %v1563 = vadd.f32 0.0, %v1562
    %v1564 = vpop.f32.mrb[0].mxu0
    %1565 = vdwg.mxu0
    %v1566 = vld [vmem:[#allocation5] sm:$0xff]
    %v1567 = vld [vmem:[#allocation5 + $0x8] sm:$0xff]
    %v1568 = vld [vmem:[#allocation5 + $0x10] sm:$0xff]
    %v1569 = vld [vmem:[#allocation5 + $0x18] sm:$0xff]
    %v1570 = vld [vmem:[#allocation5 + $0x20] sm:$0xff]
    %v1571 = vld [vmem:[#allocation5 + $0x28] sm:$0xff]
    %v1572 = vld [vmem:[#allocation5 + $0x30] sm:$0xff]
    %v1573 = vld [vmem:[#allocation5 + $0x38] sm:$0xff]
    %v1574 = vld [vmem:[#allocation5 + $0x40] sm:$0xff]
    %v1575 = vld [vmem:[#allocation5 + $0x48] sm:$0xff]
    %v1576 = vld [vmem:[#allocation5 + $0x50] sm:$0xff]
    %v1577 = vld [vmem:[#allocation5 + $0x58] sm:$0xff]
    %v1578 = vld [vmem:[#allocation5 + $0x60] sm:$0xff]
    %v1579 = vld [vmem:[#allocation5 + $0x68] sm:$0xff]
    %v1580 = vld [vmem:[#allocation5 + $0x70] sm:$0xff]
    %v1581 = vld [vmem:[#allocation5 + $0x78] sm:$0xff]
    %v1582 = vpack.c.bf16 %v1411, %v1408
    %v1583 = vpack.c.bf16 %v1419, %v1416
    %v1584 = vpack.c.bf16 %v1427, %v1424
    %v1585 = vpack.c.bf16 %v1435, %v1432
    %s1586 = scalar_lea.vmem [#allocation5], 128
    %v1587 = vld [vmem:[%s1586] sm:$0xff]
    %v1588 = vld [vmem:[%s1586 + $0x8] sm:$0xff]
    %v1589 = vld [vmem:[%s1586 + $0x10] sm:$0xff]
    %v1590 = vld [vmem:[%s1586 + $0x18] sm:$0xff]
    %v1591 = vld [vmem:[%s1586 + $0x20] sm:$0xff]
    %v1592 = vld [vmem:[%s1586 + $0x28] sm:$0xff]
    %v1593 = vld [vmem:[%s1586 + $0x30] sm:$0xff]
    %v1594 = vld [vmem:[%s1586 + $0x38] sm:$0xff]
    %v1595 = vld [vmem:[%s1586 + $0x40] sm:$0xff]
    %v1596 = vld [vmem:[%s1586 + $0x48] sm:$0xff]
    %v1597 = vld [vmem:[%s1586 + $0x50] sm:$0xff]
    %v1598 = vld [vmem:[%s1586 + $0x58] sm:$0xff]
    %v1599 = vld [vmem:[%s1586 + $0x60] sm:$0xff]
    %v1600 = vld [vmem:[%s1586 + $0x68] sm:$0xff]
    %v1601 = vld [vmem:[%s1586 + $0x70] sm:$0xff]
    %v1602 = vld [vmem:[%s1586 + $0x78] sm:$0xff]
    %v1603 = vpack.c.bf16 %v1443, %v1440
    %v1604 = vpack.c.bf16 %v1451, %v1448
    %v1621 = vunpack.c.l.b16 %v1587
    %v1622 = vunpack.c.h.b16 %v1587
    %v1623 = vunpack.c.l.b16 %v1588
    %v1624 = vunpack.c.h.b16 %v1588
    %v1625 = vunpack.c.l.b16 %v1589
    %v1626 = vunpack.c.h.b16 %v1589
    %v1627 = vunpack.c.l.b16 %v1590
    %v1628 = vunpack.c.h.b16 %v1590
    %v1629 = vunpack.c.l.b16 %v1591
    %v1630 = vunpack.c.h.b16 %v1591
    %v1631 = vunpack.c.l.b16 %v1592
    %v1632 = vunpack.c.h.b16 %v1592
    %v1633 = vunpack.c.l.b16 %v1593
    %v1634 = vunpack.c.h.b16 %v1593
    %v1635 = vunpack.c.l.b16 %v1594
    %v1636 = vunpack.c.h.b16 %v1594
    %v1637 = vunpack.c.l.b16 %v1595
    %v1638 = vunpack.c.h.b16 %v1595
    %v1639 = vunpack.c.l.b16 %v1596
    %v1640 = vunpack.c.h.b16 %v1596
    %v1641 = vunpack.c.l.b16 %v1597
    %v1642 = vunpack.c.h.b16 %v1597
    %v1643 = vunpack.c.l.b16 %v1598
    %v1644 = vunpack.c.h.b16 %v1598
    %v1645 = vunpack.c.l.b16 %v1599
    %v1646 = vunpack.c.h.b16 %v1599
    %v1647 = vunpack.c.l.b16 %v1600
    %v1648 = vunpack.c.h.b16 %v1600
    %v1649 = vunpack.c.l.b16 %v1601
    %v1650 = vunpack.c.h.b16 %v1601
    %v1651 = vunpack.c.l.b16 %v1602
    %v1652 = vunpack.c.h.b16 %v1602
    %v1653 = vpack.c.b16 %v1623, %v1621
    %v1654 = vpack.c.b16 %v1624, %v1622
    %v1655 = vpack.c.b16 %v1627, %v1625
    %v1656 = vpack.c.b16 %v1628, %v1626
    %v1657 = vpack.c.b16 %v1631, %v1629
    %v1658 = vpack.c.b16 %v1632, %v1630
    %v1659 = vpack.c.b16 %v1635, %v1633
    %v1660 = vpack.c.b16 %v1636, %v1634
    %v1661 = vpack.c.b16 %v1639, %v1637
    %v1662 = vpack.c.b16 %v1640, %v1638
    %v1663 = vpack.c.b16 %v1643, %v1641
    %v1664 = vpack.c.b16 %v1644, %v1642
    %v1665 = vpack.c.b16 %v1647, %v1645
    %v1666 = vpack.c.b16 %v1648, %v1646
    %v1667 = vpack.c.b16 %v1651, %v1649
    %v1668 = vpack.c.b16 %v1652, %v1650
    %1685 = vmatprep.subr.bf16.mxu0 %v1654
    %1686 = vmatpush1.bf16.msra.mxu0 %v1653
    %1687 = vmatprep.subr.bf16.mxu0 %v1656
    %1688 = vmatpush1.bf16.msra.mxu0 %v1655
    %1689 = vmatprep.subr.bf16.mxu0 %v1658
    %1690 = vmatpush1.bf16.msra.mxu0 %v1657
    %1691 = vmatprep.subr.bf16.mxu0 %v1660
    %1692 = vmatpush1.bf16.msra.mxu0 %v1659
    %1693 = vmatprep.subr.bf16.mxu0 %v1662
    %1694 = vmatpush1.bf16.msra.mxu0 %v1661
    %1695 = vmatprep.subr.bf16.mxu0 %v1664
    %1696 = vmatpush1.bf16.msra.mxu0 %v1663
    %1697 = vmatprep.subr.bf16.mxu0 %v1666
    %1698 = vmatpush1.bf16.msra.mxu0 %v1665
    %1699 = vmatprep.subr.bf16.mxu0 %v1668
    %1700 = vmatpush1.bf16.msra.mxu0 %v1667
    %1701 = vmatprep.subr.bf16.mxu0 0
    %1702 = vmatpush1.bf16.msra.mxu0 0
    %1703 = vmatprep.subr.bf16.mxu0 0
    %1704 = vmatpush1.bf16.msra.mxu0 0
    %1705 = vmatprep.subr.bf16.mxu0 0
    %1706 = vmatpush1.bf16.msra.mxu0 0
    %1707 = vmatprep.subr.bf16.mxu0 0
    %1708 = vmatpush1.bf16.msra.mxu0 0
    %1709 = vmatprep.subr.bf16.mxu0 0
    %1710 = vmatpush1.bf16.msra.mxu0 0
    %1711 = vmatprep.subr.bf16.mxu0 0
    %1712 = vmatpush1.bf16.msra.mxu0 0
    %1713 = vmatprep.subr.bf16.mxu0 0
    %1714 = vmatpush1.bf16.msra.mxu0 0
    %1715 = vmatprep.subr.bf16.mxu0 0
    %1716 = vmatpush1.bf16.msra.mxu0 0
    %1717 = vmatprep.mubr.bf16.mxu0 0
    %1718 = vmatmul.mubr.bf16.gmra.mrb[0].mxu0 %v1603
    %v1719 = vpop.f32.mrb[0].mxu0
    %v1720 = vadd.f32 0.0, %v1719
    %v1721 = vpop.f32.mrb[0].mxu0
    %v1722 = vadd.f32 0.0, %v1721
    %v1723 = vpop.f32.mrb[0].mxu0
    %v1724 = vadd.f32 0.0, %v1723
    %v1725 = vpop.f32.mrb[0].mxu0
    %v1726 = vadd.f32 0.0, %v1725
    %1727 = vmatprep.mubr.bf16.mxu0 0
    %1728 = vmatmul.mubr.bf16.gmra.mrb[0].mxu0 %v1604
    %v1729 = vpop.f32.mrb[0].mxu0
    %v1730 = vadd.f32 0.0, %v1729
    %v1731 = vpop.f32.mrb[0].mxu0
    %v1732 = vadd.f32 0.0, %v1731
    %v1733 = vpop.f32.mrb[0].mxu0
    %v1734 = vadd.f32 0.0, %v1733
    %v1735 = vpop.f32.mrb[0].mxu0
    %v1736 = vadd.f32 0.0, %v1735
    %1737 = vdwg.mxu0
    %v1754 = vunpack.c.l.b16 %v1566
    %v1755 = vunpack.c.h.b16 %v1566
    %v1756 = vunpack.c.l.b16 %v1567
    %v1757 = vunpack.c.h.b16 %v1567
    %v1758 = vunpack.c.l.b16 %v1568
    %v1759 = vunpack.c.h.b16 %v1568
    %v1760 = vunpack.c.l.b16 %v1569
    %v1761 = vunpack.c.h.b16 %v1569
    %v1762 = vunpack.c.l.b16 %v1570
    %v1763 = vunpack.c.h.b16 %v1570
    %v1764 = vunpack.c.l.b16 %v1571
    %v1765 = vunpack.c.h.b16 %v1571
    %v1766 = vunpack.c.l.b16 %v1572
    %v1767 = vunpack.c.h.b16 %v1572
    %v1768 = vunpack.c.l.b16 %v1573
    %v1769 = vunpack.c.h.b16 %v1573
    %v1770 = vunpack.c.l.b16 %v1574
    %v1771 = vunpack.c.h.b16 %v1574
    %v1772 = vunpack.c.l.b16 %v1575
    %v1773 = vunpack.c.h.b16 %v1575
    %v1774 = vunpack.c.l.b16 %v1576
    %v1775 = vunpack.c.h.b16 %v1576
    %v1776 = vunpack.c.l.b16 %v1577
    %v1777 = vunpack.c.h.b16 %v1577
    %v1778 = vunpack.c.l.b16 %v1578
    %v1779 = vunpack.c.h.b16 %v1578
    %v1780 = vunpack.c.l.b16 %v1579
    %v1781 = vunpack.c.h.b16 %v1579
    %v1782 = vunpack.c.l.b16 %v1580
    %v1783 = vunpack.c.h.b16 %v1580
    %v1784 = vunpack.c.l.b16 %v1581
    %v1785 = vunpack.c.h.b16 %v1581
    %v1786 = vpack.c.b16 %v1756, %v1754
    %v1787 = vpack.c.b16 %v1757, %v1755
    %v1788 = vpack.c.b16 %v1760, %v1758
    %v1789 = vpack.c.b16 %v1761, %v1759
    %v1790 = vpack.c.b16 %v1764, %v1762
    %v1791 = vpack.c.b16 %v1765, %v1763
    %v1792 = vpack.c.b16 %v1768, %v1766
    %v1793 = vpack.c.b16 %v1769, %v1767
    %v1794 = vpack.c.b16 %v1772, %v1770
    %v1795 = vpack.c.b16 %v1773, %v1771
    %v1796 = vpack.c.b16 %v1776, %v1774
    %v1797 = vpack.c.b16 %v1777, %v1775
    %v1798 = vpack.c.b16 %v1780, %v1778
    %v1799 = vpack.c.b16 %v1781, %v1779
    %v1800 = vpack.c.b16 %v1784, %v1782
    %v1801 = vpack.c.b16 %v1785, %v1783
    %1818 = vmatprep.subr.bf16.mxu0 %v1787
    %1819 = vmatpush1.bf16.msra.mxu0 %v1786
    %1820 = vmatprep.subr.bf16.mxu0 %v1789
    %1821 = vmatpush1.bf16.msra.mxu0 %v1788
    %1822 = vmatprep.subr.bf16.mxu0 %v1791
    %1823 = vmatpush1.bf16.msra.mxu0 %v1790
    %1824 = vmatprep.subr.bf16.mxu0 %v1793
    %1825 = vmatpush1.bf16.msra.mxu0 %v1792
    %1826 = vmatprep.subr.bf16.mxu0 %v1795
    %1827 = vmatpush1.bf16.msra.mxu0 %v1794
    %1828 = vmatprep.subr.bf16.mxu0 %v1797
    %1829 = vmatpush1.bf16.msra.mxu0 %v1796
    %1830 = vmatprep.subr.bf16.mxu0 %v1799
    %1831 = vmatpush1.bf16.msra.mxu0 %v1798
    %1832 = vmatprep.subr.bf16.mxu0 %v1801
    %1833 = vmatpush1.bf16.msra.mxu0 %v1800
    %1834 = vmatprep.subr.bf16.mxu0 0
    %1835 = vmatpush1.bf16.msra.mxu0 0
    %1836 = vmatprep.subr.bf16.mxu0 0
    %1837 = vmatpush1.bf16.msra.mxu0 0
    %1838 = vmatprep.subr.bf16.mxu0 0
    %1839 = vmatpush1.bf16.msra.mxu0 0
    %1840 = vmatprep.subr.bf16.mxu0 0
    %1841 = vmatpush1.bf16.msra.mxu0 0
    %1842 = vmatprep.subr.bf16.mxu0 0
    %1843 = vmatpush1.bf16.msra.mxu0 0
    %1844 = vmatprep.subr.bf16.mxu0 0
    %1845 = vmatpush1.bf16.msra.mxu0 0
    %1846 = vmatprep.subr.bf16.mxu0 0
    %1847 = vmatpush1.bf16.msra.mxu0 0
    %1848 = vmatprep.subr.bf16.mxu0 0
    %1849 = vmatpush1.bf16.msra.mxu0 0
    %1850 = vmatprep.mubr.bf16.mxu0 0
    %1851 = vmatmul.mubr.bf16.gmra.mrb[0].mxu0 %v1582
    %v1852 = vpop.f32.mrb[0].mxu0
    %v1853 = vadd.f32 %v1720, %v1852
    %v1854 = vpop.f32.mrb[0].mxu0
    %v1855 = vadd.f32 %v1722, %v1854
    %v1856 = vpop.f32.mrb[0].mxu0
    %v1857 = vadd.f32 %v1724, %v1856
    %v1858 = vpop.f32.mrb[0].mxu0
    %v1859 = vadd.f32 %v1726, %v1858
    %1860 = vmatprep.mubr.bf16.mxu0 0
    %1861 = vmatmul.mubr.bf16.gmra.mrb[0].mxu0 %v1583
    %v1862 = vpop.f32.mrb[0].mxu0
    %v1863 = vadd.f32 %v1730, %v1862
    %v1864 = vpop.f32.mrb[0].mxu0
    %v1865 = vadd.f32 %v1732, %v1864
    %v1866 = vpop.f32.mrb[0].mxu0
    %v1867 = vadd.f32 %v1734, %v1866
    %v1868 = vpop.f32.mrb[0].mxu0
    %v1869 = vadd.f32 %v1736, %v1868
    %1870 = vdwg.mxu0
    %v1871 = vpack.c.bf16 %v1459, %v1456
    %v1872 = vpack.c.bf16 %v1467, %v1464
    %1873 = vmatprep.subr.bf16.mxu0 %v1654
    %1874 = vmatpush1.bf16.msra.mxu0 %v1653
    %1875 = vmatprep.subr.bf16.mxu0 %v1656
    %1876 = vmatpush1.bf16.msra.mxu0 %v1655
    %1877 = vmatprep.subr.bf16.mxu0 %v1658
    %1878 = vmatpush1.bf16.msra.mxu0 %v1657
    %1879 = vmatprep.subr.bf16.mxu0 %v1660
    %1880 = vmatpush1.bf16.msra.mxu0 %v1659
    %1881 = vmatprep.subr.bf16.mxu0 %v1662
    %1882 = vmatpush1.bf16.msra.mxu0 %v1661
    %1883 = vmatprep.subr.bf16.mxu0 %v1664
    %1884 = vmatpush1.bf16.msra.mxu0 %v1663
    %1885 = vmatprep.subr.bf16.mxu0 %v1666
    %1886 = vmatpush1.bf16.msra.mxu0 %v1665
    %1887 = vmatprep.subr.bf16.mxu0 %v1668
    %1888 = vmatpush1.bf16.msra.mxu0 %v1667
    %1889 = vmatprep.subr.bf16.mxu0 0
    %1890 = vmatpush1.bf16.msra.mxu0 0
    %1891 = vmatprep.subr.bf16.mxu0 0
    %1892 = vmatpush1.bf16.msra.mxu0 0
    %1893 = vmatprep.subr.bf16.mxu0 0
    %1894 = vmatpush1.bf16.msra.mxu0 0
    %1895 = vmatprep.subr.bf16.mxu0 0
    %1896 = vmatpush1.bf16.msra.mxu0 0
    %1897 = vmatprep.subr.bf16.mxu0 0
    %1898 = vmatpush1.bf16.msra.mxu0 0
    %1899 = vmatprep.subr.bf16.mxu0 0
    %1900 = vmatpush1.bf16.msra.mxu0 0
    %1901 = vmatprep.subr.bf16.mxu0 0
    %1902 = vmatpush1.bf16.msra.mxu0 0
    %1903 = vmatprep.subr.bf16.mxu0 0
    %1904 = vmatpush1.bf16.msra.mxu0 0
    %1905 = vmatprep.mubr.bf16.mxu0 0
    %1906 = vmatmul.mubr.bf16.gmra.mrb[0].mxu0 %v1871
    %v1907 = vpop.f32.mrb[0].mxu0
    %v1908 = vadd.f32 0.0, %v1907
    %v1909 = vpop.f32.mrb[0].mxu0
    %v1910 = vadd.f32 0.0, %v1909
    %v1911 = vpop.f32.mrb[0].mxu0
    %v1912 = vadd.f32 0.0, %v1911
    %v1913 = vpop.f32.mrb[0].mxu0
    %v1914 = vadd.f32 0.0, %v1913
    %1915 = vmatprep.mubr.bf16.mxu0 0
    %1916 = vmatmul.mubr.bf16.gmra.mrb[0].mxu0 %v1872
    %v1917 = vpop.f32.mrb[0].mxu0
    %v1918 = vadd.f32 0.0, %v1917
    %v1919 = vpop.f32.mrb[0].mxu0
    %v1920 = vadd.f32 0.0, %v1919
    %v1921 = vpop.f32.mrb[0].mxu0
    %v1922 = vadd.f32 0.0, %v1921
    %v1923 = vpop.f32.mrb[0].mxu0
    %v1924 = vadd.f32 0.0, %v1923
    %1925 = vdwg.mxu0
    %1926 = vmatprep.subr.bf16.mxu0 %v1787
    %1927 = vmatpush1.bf16.msra.mxu0 %v1786
    %1928 = vmatprep.subr.bf16.mxu0 %v1789
    %1929 = vmatpush1.bf16.msra.mxu0 %v1788
    %1930 = vmatprep.subr.bf16.mxu0 %v1791
    %1931 = vmatpush1.bf16.msra.mxu0 %v1790
    %1932 = vmatprep.subr.bf16.mxu0 %v1793
    %1933 = vmatpush1.bf16.msra.mxu0 %v1792
    %1934 = vmatprep.subr.bf16.mxu0 %v1795
    %1935 = vmatpush1.bf16.msra.mxu0 %v1794
    %1936 = vmatprep.subr.bf16.mxu0 %v1797
    %1937 = vmatpush1.bf16.msra.mxu0 %v1796
    %1938 = vmatprep.subr.bf16.mxu0 %v1799
    %1939 = vmatpush1.bf16.msra.mxu0 %v1798
    %1940 = vmatprep.subr.bf16.mxu0 %v1801
    %1941 = vmatpush1.bf16.msra.mxu0 %v1800
    %1942 = vmatprep.subr.bf16.mxu0 0
    %1943 = vmatpush1.bf16.msra.mxu0 0
    %1944 = vmatprep.subr.bf16.mxu0 0
    %1945 = vmatpush1.bf16.msra.mxu0 0
    %1946 = vmatprep.subr.bf16.mxu0 0
    %1947 = vmatpush1.bf16.msra.mxu0 0
    %1948 = vmatprep.subr.bf16.mxu0 0
    %1949 = vmatpush1.bf16.msra.mxu0 0
    %1950 = vmatprep.subr.bf16.mxu0 0
    %1951 = vmatpush1.bf16.msra.mxu0 0
    %1952 = vmatprep.subr.bf16.mxu0 0
    %1953 = vmatpush1.bf16.msra.mxu0 0
    %1954 = vmatprep.subr.bf16.mxu0 0
    %1955 = vmatpush1.bf16.msra.mxu0 0
    %1956 = vmatprep.subr.bf16.mxu0 0
    %1957 = vmatpush1.bf16.msra.mxu0 0
    %1958 = vmatprep.mubr.bf16.mxu0 0
    %1959 = vmatmul.mubr.bf16.gmra.mrb[0].mxu0 %v1584
    %v1960 = vpop.f32.mrb[0].mxu0
    %v1961 = vadd.f32 %v1908, %v1960
    %v1962 = vpop.f32.mrb[0].mxu0
    %v1963 = vadd.f32 %v1910, %v1962
    %v1964 = vpop.f32.mrb[0].mxu0
    %v1965 = vadd.f32 %v1912, %v1964
    %v1966 = vpop.f32.mrb[0].mxu0
    %v1967 = vadd.f32 %v1914, %v1966
    %1968 = vmatprep.mubr.bf16.mxu0 0
    %1969 = vmatmul.mubr.bf16.gmra.mrb[0].mxu0 %v1585
    %v1970 = vpop.f32.mrb[0].mxu0
    %v1971 = vadd.f32 %v1918, %v1970
    %v1972 = vpop.f32.mrb[0].mxu0
    %v1973 = vadd.f32 %v1920, %v1972
    %v1974 = vpop.f32.mrb[0].mxu0
    %v1975 = vadd.f32 %v1922, %v1974
    %v1976 = vpop.f32.mrb[0].mxu0
    %v1977 = vadd.f32 %v1924, %v1976
    %1978 = vdwg.mxu0
    %s1979 = scalar_lea.vmem [#allocation5], 256
    %v1980 = vld [vmem:[%s1979] sm:$0xff]
    %v1981 = vld [vmem:[%s1979 + $0x8] sm:$0xff]
    %v1982 = vld [vmem:[%s1979 + $0x10] sm:$0xff]
    %v1983 = vld [vmem:[%s1979 + $0x18] sm:$0xff]
    %v1984 = vld [vmem:[%s1979 + $0x20] sm:$0xff]
    %v1985 = vld [vmem:[%s1979 + $0x28] sm:$0xff]
    %v1986 = vld [vmem:[%s1979 + $0x30] sm:$0xff]
    %v1987 = vld [vmem:[%s1979 + $0x38] sm:$0xff]
    %v1988 = vld [vmem:[%s1979 + $0x40] sm:$0xff]
    %v1989 = vld [vmem:[%s1979 + $0x48] sm:$0xff]
    %v1990 = vld [vmem:[%s1979 + $0x50] sm:$0xff]
    %v1991 = vld [vmem:[%s1979 + $0x58] sm:$0xff]
    %v1992 = vld [vmem:[%s1979 + $0x60] sm:$0xff]
    %v1993 = vld [vmem:[%s1979 + $0x68] sm:$0xff]
    %v1994 = vld [vmem:[%s1979 + $0x70] sm:$0xff]
    %v1995 = vld [vmem:[%s1979 + $0x78] sm:$0xff]
    %v1996 = vpack.c.bf16 %v1475, %v1472
    %v1997 = vpack.c.bf16 %v1483, %v1480
    %v2014 = vunpack.c.l.b16 %v1980
    %v2015 = vunpack.c.h.b16 %v1980
    %v2016 = vunpack.c.l.b16 %v1981
    %v2017 = vunpack.c.h.b16 %v1981
    %v2018 = vunpack.c.l.b16 %v1982
    %v2019 = vunpack.c.h.b16 %v1982
    %v2020 = vunpack.c.l.b16 %v1983
    %v2021 = vunpack.c.h.b16 %v1983
    %v2022 = vunpack.c.l.b16 %v1984
    %v2023 = vunpack.c.h.b16 %v1984
    %v2024 = vunpack.c.l.b16 %v1985
    %v2025 = vunpack.c.h.b16 %v1985
    %v2026 = vunpack.c.l.b16 %v1986
    %v2027 = vunpack.c.h.b16 %v1986
    %v2028 = vunpack.c.l.b16 %v1987
    %v2029 = vunpack.c.h.b16 %v1987
    %v2030 = vunpack.c.l.b16 %v1988
    %v2031 = vunpack.c.h.b16 %v1988
    %v2032 = vunpack.c.l.b16 %v1989
    %v2033 = vunpack.c.h.b16 %v1989
    %v2034 = vunpack.c.l.b16 %v1990
    %v2035 = vunpack.c.h.b16 %v1990
    %v2036 = vunpack.c.l.b16 %v1991
    %v2037 = vunpack.c.h.b16 %v1991
    %v2038 = vunpack.c.l.b16 %v1992
    %v2039 = vunpack.c.h.b16 %v1992
    %v2040 = vunpack.c.l.b16 %v1993
    %v2041 = vunpack.c.h.b16 %v1993
    %v2042 = vunpack.c.l.b16 %v1994
    %v2043 = vunpack.c.h.b16 %v1994
    %v2044 = vunpack.c.l.b16 %v1995
    %v2045 = vunpack.c.h.b16 %v1995
    %v2046 = vpack.c.b16 %v2016, %v2014
    %v2047 = vpack.c.b16 %v2017, %v2015
    %v2048 = vpack.c.b16 %v2020, %v2018
    %v2049 = vpack.c.b16 %v2021, %v2019
    %v2050 = vpack.c.b16 %v2024, %v2022
    %v2051 = vpack.c.b16 %v2025, %v2023
    %v2052 = vpack.c.b16 %v2028, %v2026
    %v2053 = vpack.c.b16 %v2029, %v2027
    %v2054 = vpack.c.b16 %v2032, %v2030
    %v2055 = vpack.c.b16 %v2033, %v2031
    %v2056 = vpack.c.b16 %v2036, %v2034
    %v2057 = vpack.c.b16 %v2037, %v2035
    %v2058 = vpack.c.b16 %v2040, %v2038
    %v2059 = vpack.c.b16 %v2041, %v2039
    %v2060 = vpack.c.b16 %v2044, %v2042
    %v2061 = vpack.c.b16 %v2045, %v2043
    %2078 = vmatprep.subr.bf16.mxu0 %v2047
    %2079 = vmatpush1.bf16.msra.mxu0 %v2046
    %2080 = vmatprep.subr.bf16.mxu0 %v2049
    %2081 = vmatpush1.bf16.msra.mxu0 %v2048
    %2082 = vmatprep.subr.bf16.mxu0 %v2051
    %2083 = vmatpush1.bf16.msra.mxu0 %v2050
    %2084 = vmatprep.subr.bf16.mxu0 %v2053
    %2085 = vmatpush1.bf16.msra.mxu0 %v2052
    %2086 = vmatprep.subr.bf16.mxu0 %v2055
    %2087 = vmatpush1.bf16.msra.mxu0 %v2054
    %2088 = vmatprep.subr.bf16.mxu0 %v2057
    %2089 = vmatpush1.bf16.msra.mxu0 %v2056
    %2090 = vmatprep.subr.bf16.mxu0 %v2059
    %2091 = vmatpush1.bf16.msra.mxu0 %v2058
    %2092 = vmatprep.subr.bf16.mxu0 %v2061
    %2093 = vmatpush1.bf16.msra.mxu0 %v2060
    %2094 = vmatprep.subr.bf16.mxu0 0
    %2095 = vmatpush1.bf16.msra.mxu0 0
    %2096 = vmatprep.subr.bf16.mxu0 0
    %2097 = vmatpush1.bf16.msra.mxu0 0
    %2098 = vmatprep.subr.bf16.mxu0 0
    %2099 = vmatpush1.bf16.msra.mxu0 0
    %2100 = vmatprep.subr.bf16.mxu0 0
    %2101 = vmatpush1.bf16.msra.mxu0 0
    %2102 = vmatprep.subr.bf16.mxu0 0
    %2103 = vmatpush1.bf16.msra.mxu0 0
    %2104 = vmatprep.subr.bf16.mxu0 0
    %2105 = vmatpush1.bf16.msra.mxu0 0
    %2106 = vmatprep.subr.bf16.mxu0 0
    %2107 = vmatpush1.bf16.msra.mxu0 0
    %2108 = vmatprep.subr.bf16.mxu0 0
    %2109 = vmatpush1.bf16.msra.mxu0 0
    %2110 = vmatprep.mubr.bf16.mxu0 0
    %2111 = vmatmul.mubr.bf16.gmra.mrb[0].mxu0 %v1996
    %v2112 = vpop.f32.mrb[0].mxu0
    %v2113 = vadd.f32 0.0, %v2112
    %v2114 = vpop.f32.mrb[0].mxu0
    %v2115 = vadd.f32 0.0, %v2114
    %v2116 = vpop.f32.mrb[0].mxu0
    %v2117 = vadd.f32 0.0, %v2116
    %v2118 = vpop.f32.mrb[0].mxu0
    %v2119 = vadd.f32 0.0, %v2118
    %2120 = vmatprep.mubr.bf16.mxu0 0
    %2121 = vmatmul.mubr.bf16.gmra.mrb[0].mxu0 %v1997
    %v2122 = vpop.f32.mrb[0].mxu0
    %v2123 = vadd.f32 0.0, %v2122
    %v2124 = vpop.f32.mrb[0].mxu0
    %v2125 = vadd.f32 0.0, %v2124
    %v2126 = vpop.f32.mrb[0].mxu0
    %v2127 = vadd.f32 0.0, %v2126
    %v2128 = vpop.f32.mrb[0].mxu0
    %v2129 = vadd.f32 0.0, %v2128
    %2130 = vdwg.mxu0
    %v2131 = vadd.f32 %v1853, %v2113
    %v2132 = vadd.f32 %v1855, %v2115
    %v2133 = vadd.f32 %v1857, %v2117
    %v2134 = vadd.f32 %v1859, %v2119
    %v2135 = vadd.f32 %v1863, %v2123
    %v2136 = vadd.f32 %v1865, %v2125
    %v2137 = vadd.f32 %v1867, %v2127
    %v2138 = vadd.f32 %v1869, %v2129
    %v2139 = vpack.c.bf16 %v1491, %v1488
    %v2140 = vpack.c.bf16 %v1499, %v1496
    %2141 = vmatprep.subr.bf16.mxu0 %v2047
    %2142 = vmatpush1.bf16.msra.mxu0 %v2046
    %2143 = vmatprep.subr.bf16.mxu0 %v2049
    %2144 = vmatpush1.bf16.msra.mxu0 %v2048
    %2145 = vmatprep.subr.bf16.mxu0 %v2051
    %2146 = vmatpush1.bf16.msra.mxu0 %v2050
    %2147 = vmatprep.subr.bf16.mxu0 %v2053
    %2148 = vmatpush1.bf16.msra.mxu0 %v2052
    %2149 = vmatprep.subr.bf16.mxu0 %v2055
    %2150 = vmatpush1.bf16.msra.mxu0 %v2054
    %2151 = vmatprep.subr.bf16.mxu0 %v2057
    %2152 = vmatpush1.bf16.msra.mxu0 %v2056
    %2153 = vmatprep.subr.bf16.mxu0 %v2059
    %2154 = vmatpush1.bf16.msra.mxu0 %v2058
    %2155 = vmatprep.subr.bf16.mxu0 %v2061
    %2156 = vmatpush1.bf16.msra.mxu0 %v2060
    %2157 = vmatprep.subr.bf16.mxu0 0
    %2158 = vmatpush1.bf16.msra.mxu0 0
    %2159 = vmatprep.subr.bf16.mxu0 0
    %2160 = vmatpush1.bf16.msra.mxu0 0
    %2161 = vmatprep.subr.bf16.mxu0 0
    %2162 = vmatpush1.bf16.msra.mxu0 0
    %2163 = vmatprep.subr.bf16.mxu0 0
    %2164 = vmatpush1.bf16.msra.mxu0 0
    %2165 = vmatprep.subr.bf16.mxu0 0
    %2166 = vmatpush1.bf16.msra.mxu0 0
    %2167 = vmatprep.subr.bf16.mxu0 0
    %2168 = vmatpush1.bf16.msra.mxu0 0
    %2169 = vmatprep.subr.bf16.mxu0 0
    %2170 = vmatpush1.bf16.msra.mxu0 0
    %2171 = vmatprep.subr.bf16.mxu0 0
    %2172 = vmatpush1.bf16.msra.mxu0 0
    %2173 = vmatprep.mubr.bf16.mxu0 0
    %2174 = vmatmul.mubr.bf16.gmra.mrb[0].mxu0 %v2139
    %v2175 = vpop.f32.mrb[0].mxu0
    %v2176 = vadd.f32 0.0, %v2175
    %v2177 = vpop.f32.mrb[0].mxu0
    %v2178 = vadd.f32 0.0, %v2177
    %v2179 = vpop.f32.mrb[0].mxu0
    %v2180 = vadd.f32 0.0, %v2179
    %v2181 = vpop.f32.mrb[0].mxu0
    %v2182 = vadd.f32 0.0, %v2181
    %2183 = vmatprep.mubr.bf16.mxu0 0
    %2184 = vmatmul.mubr.bf16.gmra.mrb[0].mxu0 %v2140
    %v2185 = vpop.f32.mrb[0].mxu0
    %v2186 = vadd.f32 0.0, %v2185
    %v2187 = vpop.f32.mrb[0].mxu0
    %v2188 = vadd.f32 0.0, %v2187
    %v2189 = vpop.f32.mrb[0].mxu0
    %v2190 = vadd.f32 0.0, %v2189
    %v2191 = vpop.f32.mrb[0].mxu0
    %v2192 = vadd.f32 0.0, %v2191
    %2193 = vdwg.mxu0
    %v2194 = vadd.f32 %v1961, %v2176
    %v2195 = vadd.f32 %v1963, %v2178
    %v2196 = vadd.f32 %v1965, %v2180
    %v2197 = vadd.f32 %v1967, %v2182
    %v2198 = vadd.f32 %v1971, %v2186
    %v2199 = vadd.f32 %v1973, %v2188
    %v2200 = vadd.f32 %v1975, %v2190
    %v2201 = vadd.f32 %v1977, %v2192
    %s2202 = scalar_lea.vmem [#allocation5], 384
    %v2203 = vld [vmem:[%s2202] sm:$0xff]
    %v2204 = vld [vmem:[%s2202 + $0x8] sm:$0xff]
    %v2205 = vld [vmem:[%s2202 + $0x10] sm:$0xff]
    %v2206 = vld [vmem:[%s2202 + $0x18] sm:$0xff]
    %v2207 = vld [vmem:[%s2202 + $0x20] sm:$0xff]
    %v2208 = vld [vmem:[%s2202 + $0x28] sm:$0xff]
    %v2209 = vld [vmem:[%s2202 + $0x30] sm:$0xff]
    %v2210 = vld [vmem:[%s2202 + $0x38] sm:$0xff]
    %v2211 = vld [vmem:[%s2202 + $0x40] sm:$0xff]
    %v2212 = vld [vmem:[%s2202 + $0x48] sm:$0xff]
    %v2213 = vld [vmem:[%s2202 + $0x50] sm:$0xff]
    %v2214 = vld [vmem:[%s2202 + $0x58] sm:$0xff]
    %v2215 = vld [vmem:[%s2202 + $0x60] sm:$0xff]
    %v2216 = vld [vmem:[%s2202 + $0x68] sm:$0xff]
    %v2217 = vld [vmem:[%s2202 + $0x70] sm:$0xff]
    %v2218 = vld [vmem:[%s2202 + $0x78] sm:$0xff]
    %v2219 = vpack.c.bf16 %v1507, %v1504
    %v2220 = vpack.c.bf16 %v1515, %v1512
    %v2237 = vunpack.c.l.b16 %v2203
    %v2238 = vunpack.c.h.b16 %v2203
    %v2239 = vunpack.c.l.b16 %v2204
    %v2240 = vunpack.c.h.b16 %v2204
    %v2241 = vunpack.c.l.b16 %v2205
    %v2242 = vunpack.c.h.b16 %v2205
    %v2243 = vunpack.c.l.b16 %v2206
    %v2244 = vunpack.c.h.b16 %v2206
    %v2245 = vunpack.c.l.b16 %v2207
    %v2246 = vunpack.c.h.b16 %v2207
    %v2247 = vunpack.c.l.b16 %v2208
    %v2248 = vunpack.c.h.b16 %v2208
    %v2249 = vunpack.c.l.b16 %v2209
    %v2250 = vunpack.c.h.b16 %v2209
    %v2251 = vunpack.c.l.b16 %v2210
    %v2252 = vunpack.c.h.b16 %v2210
    %v2253 = vunpack.c.l.b16 %v2211
    %v2254 = vunpack.c.h.b16 %v2211
    %v2255 = vunpack.c.l.b16 %v2212
    %v2256 = vunpack.c.h.b16 %v2212
    %v2257 = vunpack.c.l.b16 %v2213
    %v2258 = vunpack.c.h.b16 %v2213
    %v2259 = vunpack.c.l.b16 %v2214
    %v2260 = vunpack.c.h.b16 %v2214
    %v2261 = vunpack.c.l.b16 %v2215
    %v2262 = vunpack.c.h.b16 %v2215
    %v2263 = vunpack.c.l.b16 %v2216
    %v2264 = vunpack.c.h.b16 %v2216
    %v2265 = vunpack.c.l.b16 %v2217
    %v2266 = vunpack.c.h.b16 %v2217
    %v2267 = vunpack.c.l.b16 %v2218
    %v2268 = vunpack.c.h.b16 %v2218
    %v2269 = vpack.c.b16 %v2239, %v2237
    %v2270 = vpack.c.b16 %v2240, %v2238
    %v2271 = vpack.c.b16 %v2243, %v2241
    %v2272 = vpack.c.b16 %v2244, %v2242
    %v2273 = vpack.c.b16 %v2247, %v2245
    %v2274 = vpack.c.b16 %v2248, %v2246
    %v2275 = vpack.c.b16 %v2251, %v2249
    %v2276 = vpack.c.b16 %v2252, %v2250
    %v2277 = vpack.c.b16 %v2255, %v2253
    %v2278 = vpack.c.b16 %v2256, %v2254
    %v2279 = vpack.c.b16 %v2259, %v2257
    %v2280 = vpack.c.b16 %v2260, %v2258
    %v2281 = vpack.c.b16 %v2263, %v2261
    %v2282 = vpack.c.b16 %v2264, %v2262
    %v2283 = vpack.c.b16 %v2267, %v2265
    %v2284 = vpack.c.b16 %v2268, %v2266
    %2301 = vmatprep.subr.bf16.mxu0 %v2270
    %2302 = vmatpush1.bf16.msra.mxu0 %v2269
    %2303 = vmatprep.subr.bf16.mxu0 %v2272
    %2304 = vmatpush1.bf16.msra.mxu0 %v2271
    %2305 = vmatprep.subr.bf16.mxu0 %v2274
    %2306 = vmatpush1.bf16.msra.mxu0 %v2273
    %2307 = vmatprep.subr.bf16.mxu0 %v2276
    %2308 = vmatpush1.bf16.msra.mxu0 %v2275
    %2309 = vmatprep.subr.bf16.mxu0 %v2278
    %2310 = vmatpush1.bf16.msra.mxu0 %v2277
    %2311 = vmatprep.subr.bf16.mxu0 %v2280
    %2312 = vmatpush1.bf16.msra.mxu0 %v2279
    %2313 = vmatprep.subr.bf16.mxu0 %v2282
    %2314 = vmatpush1.bf16.msra.mxu0 %v2281
    %2315 = vmatprep.subr.bf16.mxu0 %v2284
    %2316 = vmatpush1.bf16.msra.mxu0 %v2283
    %2317 = vmatprep.subr.bf16.mxu0 0
    %2318 = vmatpush1.bf16.msra.mxu0 0
    %2319 = vmatprep.subr.bf16.mxu0 0
    %2320 = vmatpush1.bf16.msra.mxu0 0
    %2321 = vmatprep.subr.bf16.mxu0 0
    %2322 = vmatpush1.bf16.msra.mxu0 0
    %2323 = vmatprep.subr.bf16.mxu0 0
    %2324 = vmatpush1.bf16.msra.mxu0 0
    %2325 = vmatprep.subr.bf16.mxu0 0
    %2326 = vmatpush1.bf16.msra.mxu0 0
    %2327 = vmatprep.subr.bf16.mxu0 0
    %2328 = vmatpush1.bf16.msra.mxu0 0
    %2329 = vmatprep.subr.bf16.mxu0 0
    %2330 = vmatpush1.bf16.msra.mxu0 0
    %2331 = vmatprep.subr.bf16.mxu0 0
    %2332 = vmatpush1.bf16.msra.mxu0 0
    %2333 = vmatprep.mubr.bf16.mxu0 0
    %2334 = vmatmul.mubr.bf16.gmra.mrb[0].mxu0 %v2219
    %v2335 = vpop.f32.mrb[0].mxu0
    %v2336 = vadd.f32 0.0, %v2335
    %v2337 = vpop.f32.mrb[0].mxu0
    %v2338 = vadd.f32 0.0, %v2337
    %v2339 = vpop.f32.mrb[0].mxu0
    %v2340 = vadd.f32 0.0, %v2339
    %v2341 = vpop.f32.mrb[0].mxu0
    %v2342 = vadd.f32 0.0, %v2341
    %2343 = vmatprep.mubr.bf16.mxu0 0
    %2344 = vmatmul.mubr.bf16.gmra.mrb[0].mxu0 %v2220
    %v2345 = vpop.f32.mrb[0].mxu0
    %v2346 = vadd.f32 0.0, %v2345
    %v2347 = vpop.f32.mrb[0].mxu0
    %v2348 = vadd.f32 0.0, %v2347
    %v2349 = vpop.f32.mrb[0].mxu0
    %v2350 = vadd.f32 0.0, %v2349
    %v2351 = vpop.f32.mrb[0].mxu0
    %v2352 = vadd.f32 0.0, %v2351
    %2353 = vdwg.mxu0
    %v2354 = vadd.f32 %v2131, %v2336
    %v2355 = vadd.f32 %v2132, %v2338
    %v2356 = vadd.f32 %v2133, %v2340
    %v2357 = vadd.f32 %v2134, %v2342
    %v2358 = vadd.f32 %v2135, %v2346
    %v2359 = vadd.f32 %v2136, %v2348
    %v2360 = vadd.f32 %v2137, %v2350
    %v2361 = vadd.f32 %v2138, %v2352
    %v2362 = vpack.c.bf16 %v1523, %v1520
    %v2363 = vpack.c.bf16 %v1531, %v1528
    %2364 = vmatprep.subr.bf16.mxu0 %v2270
    %2365 = vmatpush1.bf16.msra.mxu0 %v2269
    %2366 = vmatprep.subr.bf16.mxu0 %v2272
    %2367 = vmatpush1.bf16.msra.mxu0 %v2271
    %2368 = vmatprep.subr.bf16.mxu0 %v2274
    %2369 = vmatpush1.bf16.msra.mxu0 %v2273
    %2370 = vmatprep.subr.bf16.mxu0 %v2276
    %2371 = vmatpush1.bf16.msra.mxu0 %v2275
    %2372 = vmatprep.subr.bf16.mxu0 %v2278
    %2373 = vmatpush1.bf16.msra.mxu0 %v2277
    %2374 = vmatprep.subr.bf16.mxu0 %v2280
    %2375 = vmatpush1.bf16.msra.mxu0 %v2279
    %2376 = vmatprep.subr.bf16.mxu0 %v2282
    %2377 = vmatpush1.bf16.msra.mxu0 %v2281
    %2378 = vmatprep.subr.bf16.mxu0 %v2284
    %2379 = vmatpush1.bf16.msra.mxu0 %v2283
    %2380 = vmatprep.subr.bf16.mxu0 0
    %2381 = vmatpush1.bf16.msra.mxu0 0
    %2382 = vmatprep.subr.bf16.mxu0 0
    %2383 = vmatpush1.bf16.msra.mxu0 0
    %2384 = vmatprep.subr.bf16.mxu0 0
    %2385 = vmatpush1.bf16.msra.mxu0 0
    %2386 = vmatprep.subr.bf16.mxu0 0
    %2387 = vmatpush1.bf16.msra.mxu0 0
    %2388 = vmatprep.subr.bf16.mxu0 0
    %2389 = vmatpush1.bf16.msra.mxu0 0
    %2390 = vmatprep.subr.bf16.mxu0 0
    %2391 = vmatpush1.bf16.msra.mxu0 0
    %2392 = vmatprep.subr.bf16.mxu0 0
    %2393 = vmatpush1.bf16.msra.mxu0 0
    %2394 = vmatprep.subr.bf16.mxu0 0
    %2395 = vmatpush1.bf16.msra.mxu0 0
    %2396 = vmatprep.mubr.bf16.mxu0 0
    %2397 = vmatmul.mubr.bf16.gmra.mrb[0].mxu0 %v2362
    %v2398 = vpop.f32.mrb[0].mxu0
    %v2399 = vadd.f32 0.0, %v2398
    %v2400 = vpop.f32.mrb[0].mxu0
    %v2401 = vadd.f32 0.0, %v2400
    %v2402 = vpop.f32.mrb[0].mxu0
    %v2403 = vadd.f32 0.0, %v2402
    %v2404 = vpop.f32.mrb[0].mxu0
    %v2405 = vadd.f32 0.0, %v2404
    %2406 = vmatprep.mubr.bf16.mxu0 0
    %2407 = vmatmul.mubr.bf16.gmra.mrb[0].mxu0 %v2363
    %v2408 = vpop.f32.mrb[0].mxu0
    %v2409 = vadd.f32 0.0, %v2408
    %v2410 = vpop.f32.mrb[0].mxu0
    %v2411 = vadd.f32 0.0, %v2410
    %v2412 = vpop.f32.mrb[0].mxu0
    %v2413 = vadd.f32 0.0, %v2412
    %v2414 = vpop.f32.mrb[0].mxu0
    %v2415 = vadd.f32 0.0, %v2414
    %2416 = vdwg.mxu0
    %v2417 = vadd.f32 %v2194, %v2399
    %v2418 = vadd.f32 %v2195, %v2401
    %v2419 = vadd.f32 %v2196, %v2403
    %v2420 = vadd.f32 %v2197, %v2405
    %v2421 = vadd.f32 %v2198, %v2409
    %v2422 = vadd.f32 %v2199, %v2411
    %v2423 = vadd.f32 %v2200, %v2413
    %v2424 = vadd.f32 %v2201, %v2415
    %s2425 = scalar_lea.vmem [#allocation5], 512
    %v2426 = vld [vmem:[%s2425] sm:$0xff]
    %v2427 = vld [vmem:[%s2425 + $0x8] sm:$0xff]
    %v2428 = vld [vmem:[%s2425 + $0x10] sm:$0xff]
    %v2429 = vld [vmem:[%s2425 + $0x18] sm:$0xff]
    %v2430 = vld [vmem:[%s2425 + $0x20] sm:$0xff]
    %v2431 = vld [vmem:[%s2425 + $0x28] sm:$0xff]
    %v2432 = vld [vmem:[%s2425 + $0x30] sm:$0xff]
    %v2433 = vld [vmem:[%s2425 + $0x38] sm:$0xff]
    %v2434 = vld [vmem:[%s2425 + $0x40] sm:$0xff]
    %v2435 = vld [vmem:[%s2425 + $0x48] sm:$0xff]
    %v2436 = vld [vmem:[%s2425 + $0x50] sm:$0xff]
    %v2437 = vld [vmem:[%s2425 + $0x58] sm:$0xff]
    %v2438 = vld [vmem:[%s2425 + $0x60] sm:$0xff]
    %v2439 = vld [vmem:[%s2425 + $0x68] sm:$0xff]
    %v2440 = vld [vmem:[%s2425 + $0x70] sm:$0xff]
    %v2441 = vld [vmem:[%s2425 + $0x78] sm:$0xff]
    %v2442 = vpack.c.bf16 %v1539, %v1536
    %v2443 = vpack.c.bf16 %v1547, %v1544
    %v2460 = vunpack.c.l.b16 %v2426
    %v2461 = vunpack.c.h.b16 %v2426
    %v2462 = vunpack.c.l.b16 %v2427
    %v2463 = vunpack.c.h.b16 %v2427
    %v2464 = vunpack.c.l.b16 %v2428
    %v2465 = vunpack.c.h.b16 %v2428
    %v2466 = vunpack.c.l.b16 %v2429
    %v2467 = vunpack.c.h.b16 %v2429
    %v2468 = vunpack.c.l.b16 %v2430
    %v2469 = vunpack.c.h.b16 %v2430
    %v2470 = vunpack.c.l.b16 %v2431
    %v2471 = vunpack.c.h.b16 %v2431
    %v2472 = vunpack.c.l.b16 %v2432
    %v2473 = vunpack.c.h.b16 %v2432
    %v2474 = vunpack.c.l.b16 %v2433
    %v2475 = vunpack.c.h.b16 %v2433
    %v2476 = vunpack.c.l.b16 %v2434
    %v2477 = vunpack.c.h.b16 %v2434
    %v2478 = vunpack.c.l.b16 %v2435
    %v2479 = vunpack.c.h.b16 %v2435
    %v2480 = vunpack.c.l.b16 %v2436
    %v2481 = vunpack.c.h.b16 %v2436
    %v2482 = vunpack.c.l.b16 %v2437
    %v2483 = vunpack.c.h.b16 %v2437
    %v2484 = vunpack.c.l.b16 %v2438
    %v2485 = vunpack.c.h.b16 %v2438
    %v2486 = vunpack.c.l.b16 %v2439
    %v2487 = vunpack.c.h.b16 %v2439
    %v2488 = vunpack.c.l.b16 %v2440
    %v2489 = vunpack.c.h.b16 %v2440
    %v2490 = vunpack.c.l.b16 %v2441
    %v2491 = vunpack.c.h.b16 %v2441
    %v2492 = vpack.c.b16 %v2462, %v2460
    %v2493 = vpack.c.b16 %v2463, %v2461
    %v2494 = vpack.c.b16 %v2466, %v2464
    %v2495 = vpack.c.b16 %v2467, %v2465
    %v2496 = vpack.c.b16 %v2470, %v2468
    %v2497 = vpack.c.b16 %v2471, %v2469
    %v2498 = vpack.c.b16 %v2474, %v2472
    %v2499 = vpack.c.b16 %v2475, %v2473
    %v2500 = vpack.c.b16 %v2478, %v2476
    %v2501 = vpack.c.b16 %v2479, %v2477
    %v2502 = vpack.c.b16 %v2482, %v2480
    %v2503 = vpack.c.b16 %v2483, %v2481
    %v2504 = vpack.c.b16 %v2486, %v2484
    %v2505 = vpack.c.b16 %v2487, %v2485
    %v2506 = vpack.c.b16 %v2490, %v2488
    %v2507 = vpack.c.b16 %v2491, %v2489
    %2524 = vmatprep.subr.bf16.mxu0 %v2493
    %2525 = vmatpush1.bf16.msra.mxu0 %v2492
    %2526 = vmatprep.subr.bf16.mxu0 %v2495
    %2527 = vmatpush1.bf16.msra.mxu0 %v2494
    %2528 = vmatprep.subr.bf16.mxu0 %v2497
    %2529 = vmatpush1.bf16.msra.mxu0 %v2496
    %2530 = vmatprep.subr.bf16.mxu0 %v2499
    %2531 = vmatpush1.bf16.msra.mxu0 %v2498
    %2532 = vmatprep.subr.bf16.mxu0 %v2501
    %2533 = vmatpush1.bf16.msra.mxu0 %v2500
    %2534 = vmatprep.subr.bf16.mxu0 %v2503
    %2535 = vmatpush1.bf16.msra.mxu0 %v2502
    %2536 = vmatprep.subr.bf16.mxu0 %v2505
    %2537 = vmatpush1.bf16.msra.mxu0 %v2504
    %2538 = vmatprep.subr.bf16.mxu0 %v2507
    %2539 = vmatpush1.bf16.msra.mxu0 %v2506
    %2540 = vmatprep.subr.bf16.mxu0 0
    %2541 = vmatpush1.bf16.msra.mxu0 0
    %2542 = vmatprep.subr.bf16.mxu0 0
    %2543 = vmatpush1.bf16.msra.mxu0 0
    %2544 = vmatprep.subr.bf16.mxu0 0
    %2545 = vmatpush1.bf16.msra.mxu0 0
    %2546 = vmatprep.subr.bf16.mxu0 0
    %2547 = vmatpush1.bf16.msra.mxu0 0
    %2548 = vmatprep.subr.bf16.mxu0 0
    %2549 = vmatpush1.bf16.msra.mxu0 0
    %2550 = vmatprep.subr.bf16.mxu0 0
    %2551 = vmatpush1.bf16.msra.mxu0 0
    %2552 = vmatprep.subr.bf16.mxu0 0
    %2553 = vmatpush1.bf16.msra.mxu0 0
    %2554 = vmatprep.subr.bf16.mxu0 0
    %2555 = vmatpush1.bf16.msra.mxu0 0
    %2556 = vmatprep.mubr.bf16.mxu0 0
    %2557 = vmatmul.mubr.bf16.gmra.mrb[0].mxu0 %v2442
    %v2558 = vpop.f32.mrb[0].mxu0
    %v2559 = vadd.f32 0.0, %v2558
    %v2560 = vpop.f32.mrb[0].mxu0
    %v2561 = vadd.f32 0.0, %v2560
    %v2562 = vpop.f32.mrb[0].mxu0
    %v2563 = vadd.f32 0.0, %v2562
    %v2564 = vpop.f32.mrb[0].mxu0
    %v2565 = vadd.f32 0.0, %v2564
    %2566 = vmatprep.mubr.bf16.mxu0 0
    %2567 = vmatmul.mubr.bf16.gmra.mrb[0].mxu0 %v2443
    %v2568 = vpop.f32.mrb[0].mxu0
    %v2569 = vadd.f32 0.0, %v2568
    %v2570 = vpop.f32.mrb[0].mxu0
    %v2571 = vadd.f32 0.0, %v2570
    %v2572 = vpop.f32.mrb[0].mxu0
    %v2573 = vadd.f32 0.0, %v2572
    %v2574 = vpop.f32.mrb[0].mxu0
    %v2575 = vadd.f32 0.0, %v2574
    %2576 = vdwg.mxu0
    %v2577 = vadd.f32 %v2354, %v2559
    %v2578 = vadd.f32 %v2355, %v2561
    %v2579 = vadd.f32 %v2356, %v2563
    %v2580 = vadd.f32 %v2357, %v2565
    %v2581 = vadd.f32 %v2358, %v2569
    %v2582 = vadd.f32 %v2359, %v2571
    %v2583 = vadd.f32 %v2360, %v2573
    %v2584 = vadd.f32 %v2361, %v2575
    %v2585 = vpack.c.bf16 %v1555, %v1552
    %v2586 = vpack.c.bf16 %v1563, %v1560
    %2587 = vmatprep.subr.bf16.mxu0 %v2493
    %2588 = vmatpush1.bf16.msra.mxu0 %v2492
    %2589 = vmatprep.subr.bf16.mxu0 %v2495
    %2590 = vmatpush1.bf16.msra.mxu0 %v2494
    %2591 = vmatprep.subr.bf16.mxu0 %v2497
    %2592 = vmatpush1.bf16.msra.mxu0 %v2496
    %2593 = vmatprep.subr.bf16.mxu0 %v2499
    %2594 = vmatpush1.bf16.msra.mxu0 %v2498
    %2595 = vmatprep.subr.bf16.mxu0 %v2501
    %2596 = vmatpush1.bf16.msra.mxu0 %v2500
    %2597 = vmatprep.subr.bf16.mxu0 %v2503
    %2598 = vmatpush1.bf16.msra.mxu0 %v2502
    %2599 = vmatprep.subr.bf16.mxu0 %v2505
    %2600 = vmatpush1.bf16.msra.mxu0 %v2504
    %2601 = vmatprep.subr.bf16.mxu0 %v2507
    %2602 = vmatpush1.bf16.msra.mxu0 %v2506
    %2603 = vmatprep.subr.bf16.mxu0 0
    %2604 = vmatpush1.bf16.msra.mxu0 0
    %2605 = vmatprep.subr.bf16.mxu0 0
    %2606 = vmatpush1.bf16.msra.mxu0 0
    %2607 = vmatprep.subr.bf16.mxu0 0
    %2608 = vmatpush1.bf16.msra.mxu0 0
    %2609 = vmatprep.subr.bf16.mxu0 0
    %2610 = vmatpush1.bf16.msra.mxu0 0
    %2611 = vmatprep.subr.bf16.mxu0 0
    %2612 = vmatpush1.bf16.msra.mxu0 0
    %2613 = vmatprep.subr.bf16.mxu0 0
    %2614 = vmatpush1.bf16.msra.mxu0 0
    %2615 = vmatprep.subr.bf16.mxu0 0
    %2616 = vmatpush1.bf16.msra.mxu0 0
    %2617 = vmatprep.subr.bf16.mxu0 0
    %2618 = vmatpush1.bf16.msra.mxu0 0
    %2619 = vmatprep.mubr.bf16.mxu0 0
    %2620 = vmatmul.mubr.bf16.gmra.mrb[0].mxu0 %v2585
    %v2621 = vpop.f32.mrb[0].mxu0
    %v2622 = vadd.f32 0.0, %v2621
    %v2623 = vpop.f32.mrb[0].mxu0
    %v2624 = vadd.f32 0.0, %v2623
    %v2625 = vpop.f32.mrb[0].mxu0
    %v2626 = vadd.f32 0.0, %v2625
    %v2627 = vpop.f32.mrb[0].mxu0
    %v2628 = vadd.f32 0.0, %v2627
    %2629 = vmatprep.mubr.bf16.mxu0 0
    %2630 = vmatmul.mubr.bf16.gmra.mrb[0].mxu0 %v2586
    %v2631 = vpop.f32.mrb[0].mxu0
    %v2632 = vadd.f32 0.0, %v2631
    %v2633 = vpop.f32.mrb[0].mxu0
    %v2634 = vadd.f32 0.0, %v2633
    %v2635 = vpop.f32.mrb[0].mxu0
    %v2636 = vadd.f32 0.0, %v2635
    %v2637 = vpop.f32.mrb[0].mxu0
    %v2638 = vadd.f32 0.0, %v2637
    %2639 = vdwg.mxu0
    %v2640 = vadd.f32 %v2417, %v2622
    %v2641 = vadd.f32 %v2418, %v2624
    %v2642 = vadd.f32 %v2419, %v2626
    %v2643 = vadd.f32 %v2420, %v2628
    %v2644 = vadd.f32 %v2421, %v2632
    %v2645 = vadd.f32 %v2422, %v2634
    %v2646 = vadd.f32 %v2423, %v2636
    %v2647 = vadd.f32 %v2424, %v2638
    %v2648 = vmax.f32 %v2577, %v2578
    %v2649 = vmax.f32 %v2579, %v2580
    %v2650 = vmax.f32 %v2581, %v2582
    %v2651 = vmax.f32 %v2583, %v2584
    %v2652 = vmax.f32 %v2640, %v2641
    %v2653 = vmax.f32 %v2642, %v2643
    %v2654 = vmax.f32 %v2644, %v2645
    %v2655 = vmax.f32 %v2646, %v2647
    %v2656 = vmax.f32 %v2648, %v2652
    %v2657 = vmax.f32 %v2649, %v2653
    %v2658 = vmax.f32 %v2650, %v2654
    %v2659 = vmax.f32 %v2651, %v2655
    %v2660 = vlaneseq
    %v2661 = vshrl.u32 %v2660, 7
    %v2662 = vsub.s32 1, %v2661
    %v2663 = vrot.slane %v56, %v2662
    %v2664 = vadd.f32 %v2656, %v2663
    %v2665 = vadd.f32 %v2657, %v2663
    %v2666 = vadd.f32 %v2658, %v2663
    %v2667 = vadd.f32 %v2659, %v2663
    %v2668 = vmax.f32 %v2664, 0.0
    %v2669 = vmax.f32 %v2665, 0.0
    %v2670 = vmax.f32 %v2666, 0.0
    %v2671 = vmax.f32 %v2667, 0.0
    %v2672 = vpack.c.bf16 %v2668, %v2668
    %v2673 = vld [vmem:[%s5] sm:$0xf]
    %v2674 = vld [vmem:[%s5 + $0x4] sm:$0xf]
    %v2675 = vld [vmem:[%s5 + $0x8] sm:$0xf]
    %v2676 = vld [vmem:[%s5 + $0xc] sm:$0xf]
    %v2677 = vld [vmem:[%s5 + $0x10] sm:$0xf]
    %v2678 = vld [vmem:[%s5 + $0x14] sm:$0xf]
    %v2679 = vld [vmem:[%s5 + $0x18] sm:$0xf]
    %v2680 = vld [vmem:[%s5 + $0x1c] sm:$0xf]
    %v2681 = vld [vmem:[%s5 + $0x20] sm:$0xf]
    %v2682 = vld [vmem:[%s5 + $0x24] sm:$0xf]
    %v2683 = vld [vmem:[%s5 + $0x28] sm:$0xf]
    %v2684 = vld [vmem:[%s5 + $0x2c] sm:$0xf]
    %v2685 = vld [vmem:[%s5 + $0x30] sm:$0xf]
    %v2686 = vld [vmem:[%s5 + $0x34] sm:$0xf]
    %v2687 = vld [vmem:[%s5 + $0x38] sm:$0xf]
    %v2688 = vld [vmem:[%s5 + $0x3c] sm:$0xf]
    %v2689 = vpack.c.bf16 %v2669, %v2669
    %s2690 = scalar_lea.vmem %s5, 64
    %v2691 = vld [vmem:[%s2690] sm:$0xf]
    %v2692 = vld [vmem:[%s2690 + $0x4] sm:$0xf]
    %v2693 = vld [vmem:[%s2690 + $0x8] sm:$0xf]
    %v2694 = vld [vmem:[%s2690 + $0xc] sm:$0xf]
    %v2695 = vld [vmem:[%s2690 + $0x10] sm:$0xf]
    %v2696 = vld [vmem:[%s2690 + $0x14] sm:$0xf]
    %v2697 = vld [vmem:[%s2690 + $0x18] sm:$0xf]
    %v2698 = vld [vmem:[%s2690 + $0x1c] sm:$0xf]
    %v2699 = vld [vmem:[%s2690 + $0x20] sm:$0xf]
    %v2700 = vld [vmem:[%s2690 + $0x24] sm:$0xf]
    %v2701 = vld [vmem:[%s2690 + $0x28] sm:$0xf]
    %v2702 = vld [vmem:[%s2690 + $0x2c] sm:$0xf]
    %v2703 = vld [vmem:[%s2690 + $0x30] sm:$0xf]
    %v2704 = vld [vmem:[%s2690 + $0x34] sm:$0xf]
    %v2705 = vld [vmem:[%s2690 + $0x38] sm:$0xf]
    %v2706 = vld [vmem:[%s2690 + $0x3c] sm:$0xf]
    %v2723 = vunpack.c.l.b16 %v2691
    %v2724 = vunpack.c.l.b16 %v2692
    %v2725 = vunpack.c.l.b16 %v2693
    %v2726 = vunpack.c.l.b16 %v2694
    %v2727 = vunpack.c.l.b16 %v2695
    %v2728 = vunpack.c.l.b16 %v2696
    %v2729 = vunpack.c.l.b16 %v2697
    %v2730 = vunpack.c.l.b16 %v2698
    %v2731 = vunpack.c.l.b16 %v2699
    %v2732 = vunpack.c.l.b16 %v2700
    %v2733 = vunpack.c.l.b16 %v2701
    %v2734 = vunpack.c.l.b16 %v2702
    %v2735 = vunpack.c.l.b16 %v2703
    %v2736 = vunpack.c.l.b16 %v2704
    %v2737 = vunpack.c.l.b16 %v2705
    %v2738 = vunpack.c.l.b16 %v2706
    %v2739 = vpack.c.b16 %v2724, %v2723
    %v2740 = vpack.c.b16 %v2726, %v2725
    %v2741 = vpack.c.b16 %v2728, %v2727
    %v2742 = vpack.c.b16 %v2730, %v2729
    %v2743 = vpack.c.b16 %v2732, %v2731
    %v2744 = vpack.c.b16 %v2734, %v2733
    %v2745 = vpack.c.b16 %v2736, %v2735
    %v2746 = vpack.c.b16 %v2738, %v2737
    %2755 = vmatprep.subr.bf16.mxu0 0
    %2756 = vmatpush1.bf16.msra.mxu0 %v2739
    %2757 = vmatprep.subr.bf16.mxu0 0
    %2758 = vmatpush1.bf16.msra.mxu0 %v2740
    %2759 = vmatprep.subr.bf16.mxu0 0
    %2760 = vmatpush1.bf16.msra.mxu0 %v2741
    %2761 = vmatprep.subr.bf16.mxu0 0
    %2762 = vmatpush1.bf16.msra.mxu0 %v2742
    %2763 = vmatprep.subr.bf16.mxu0 0
    %2764 = vmatpush1.bf16.msra.mxu0 %v2743
    %2765 = vmatprep.subr.bf16.mxu0 0
    %2766 = vmatpush1.bf16.msra.mxu0 %v2744
    %2767 = vmatprep.subr.bf16.mxu0 0
    %2768 = vmatpush1.bf16.msra.mxu0 %v2745
    %2769 = vmatprep.subr.bf16.mxu0 0
    %2770 = vmatpush1.bf16.msra.mxu0 %v2746
    %2771 = vmatprep.subr.bf16.mxu0 0
    %2772 = vmatpush1.bf16.msra.mxu0 0
    %2773 = vmatprep.subr.bf16.mxu0 0
    %2774 = vmatpush1.bf16.msra.mxu0 0
    %2775 = vmatprep.subr.bf16.mxu0 0
    %2776 = vmatpush1.bf16.msra.mxu0 0
    %2777 = vmatprep.subr.bf16.mxu0 0
    %2778 = vmatpush1.bf16.msra.mxu0 0
    %2779 = vmatprep.subr.bf16.mxu0 0
    %2780 = vmatpush1.bf16.msra.mxu0 0
    %2781 = vmatprep.subr.bf16.mxu0 0
    %2782 = vmatpush1.bf16.msra.mxu0 0
    %2783 = vmatprep.subr.bf16.mxu0 0
    %2784 = vmatpush1.bf16.msra.mxu0 0
    %2785 = vmatprep.subr.bf16.mxu0 0
    %2786 = vmatpush1.bf16.msra.mxu0 0
    %2787 = vmatprep.mubr.bf16.mxu0 0
    %2788 = vmatmul.mubr.bf16.gmra.mrb[0].mxu0 %v2689
    %v2789 = vpop.f32.mrb[0].mxu0
    %v2790 = vadd.f32 0.0, %v2789
    %v2791 = vpop.f32.mrb[0].mxu0
    %v2792 = vpop.f32.mrb[0].mxu0
    %v2793 = vpop.f32.mrb[0].mxu0
    %2794 = vdwg.mxu0
    %v2811 = vunpack.c.l.b16 %v2673
    %v2812 = vunpack.c.l.b16 %v2674
    %v2813 = vunpack.c.l.b16 %v2675
    %v2814 = vunpack.c.l.b16 %v2676
    %v2815 = vunpack.c.l.b16 %v2677
    %v2816 = vunpack.c.l.b16 %v2678
    %v2817 = vunpack.c.l.b16 %v2679
    %v2818 = vunpack.c.l.b16 %v2680
    %v2819 = vunpack.c.l.b16 %v2681
    %v2820 = vunpack.c.l.b16 %v2682
    %v2821 = vunpack.c.l.b16 %v2683
    %v2822 = vunpack.c.l.b16 %v2684
    %v2823 = vunpack.c.l.b16 %v2685
    %v2824 = vunpack.c.l.b16 %v2686
    %v2825 = vunpack.c.l.b16 %v2687
    %v2826 = vunpack.c.l.b16 %v2688
    %v2827 = vpack.c.b16 %v2812, %v2811
    %v2828 = vpack.c.b16 %v2814, %v2813
    %v2829 = vpack.c.b16 %v2816, %v2815
    %v2830 = vpack.c.b16 %v2818, %v2817
    %v2831 = vpack.c.b16 %v2820, %v2819
    %v2832 = vpack.c.b16 %v2822, %v2821
    %v2833 = vpack.c.b16 %v2824, %v2823
    %v2834 = vpack.c.b16 %v2826, %v2825
    %2843 = vmatprep.subr.bf16.mxu0 0
    %2844 = vmatpush1.bf16.msra.mxu0 %v2827
    %2845 = vmatprep.subr.bf16.mxu0 0
    %2846 = vmatpush1.bf16.msra.mxu0 %v2828
    %2847 = vmatprep.subr.bf16.mxu0 0
    %2848 = vmatpush1.bf16.msra.mxu0 %v2829
    %2849 = vmatprep.subr.bf16.mxu0 0
    %2850 = vmatpush1.bf16.msra.mxu0 %v2830
    %2851 = vmatprep.subr.bf16.mxu0 0
    %2852 = vmatpush1.bf16.msra.mxu0 %v2831
    %2853 = vmatprep.subr.bf16.mxu0 0
    %2854 = vmatpush1.bf16.msra.mxu0 %v2832
    %2855 = vmatprep.subr.bf16.mxu0 0
    %2856 = vmatpush1.bf16.msra.mxu0 %v2833
    %2857 = vmatprep.subr.bf16.mxu0 0
    %2858 = vmatpush1.bf16.msra.mxu0 %v2834
    %2859 = vmatprep.subr.bf16.mxu0 0
    %2860 = vmatpush1.bf16.msra.mxu0 0
    %2861 = vmatprep.subr.bf16.mxu0 0
    %2862 = vmatpush1.bf16.msra.mxu0 0
    %2863 = vmatprep.subr.bf16.mxu0 0
    %2864 = vmatpush1.bf16.msra.mxu0 0
    %2865 = vmatprep.subr.bf16.mxu0 0
    %2866 = vmatpush1.bf16.msra.mxu0 0
    %2867 = vmatprep.subr.bf16.mxu0 0
    %2868 = vmatpush1.bf16.msra.mxu0 0
    %2869 = vmatprep.subr.bf16.mxu0 0
    %2870 = vmatpush1.bf16.msra.mxu0 0
    %2871 = vmatprep.subr.bf16.mxu0 0
    %2872 = vmatpush1.bf16.msra.mxu0 0
    %2873 = vmatprep.subr.bf16.mxu0 0
    %2874 = vmatpush1.bf16.msra.mxu0 0
    %2875 = vmatprep.mubr.bf16.mxu0 0
    %2876 = vmatmul.mubr.bf16.gmra.mrb[0].mxu0 %v2672
    %v2877 = vpop.f32.mrb[0].mxu0
    %v2878 = vadd.f32 %v2790, %v2877
    %v2879 = vpop.f32.mrb[0].mxu0
    %v2880 = vpop.f32.mrb[0].mxu0
    %v2881 = vpop.f32.mrb[0].mxu0
    %2882 = vdwg.mxu0
    %v2883 = vpack.c.bf16 %v2670, %v2670
    %s2884 = scalar_lea.vmem %s5, 128
    %v2885 = vld [vmem:[%s2884] sm:$0xf]
    %v2886 = vld [vmem:[%s2884 + $0x4] sm:$0xf]
    %v2887 = vld [vmem:[%s2884 + $0x8] sm:$0xf]
    %v2888 = vld [vmem:[%s2884 + $0xc] sm:$0xf]
    %v2889 = vld [vmem:[%s2884 + $0x10] sm:$0xf]
    %v2890 = vld [vmem:[%s2884 + $0x14] sm:$0xf]
    %v2891 = vld [vmem:[%s2884 + $0x18] sm:$0xf]
    %v2892 = vld [vmem:[%s2884 + $0x1c] sm:$0xf]
    %v2893 = vld [vmem:[%s2884 + $0x20] sm:$0xf]
    %v2894 = vld [vmem:[%s2884 + $0x24] sm:$0xf]
    %v2895 = vld [vmem:[%s2884 + $0x28] sm:$0xf]
    %v2896 = vld [vmem:[%s2884 + $0x2c] sm:$0xf]
    %v2897 = vld [vmem:[%s2884 + $0x30] sm:$0xf]
    %v2898 = vld [vmem:[%s2884 + $0x34] sm:$0xf]
    %v2899 = vld [vmem:[%s2884 + $0x38] sm:$0xf]
    %v2900 = vld [vmem:[%s2884 + $0x3c] sm:$0xf]
    %v2917 = vunpack.c.l.b16 %v2885
    %v2918 = vunpack.c.l.b16 %v2886
    %v2919 = vunpack.c.l.b16 %v2887
    %v2920 = vunpack.c.l.b16 %v2888
    %v2921 = vunpack.c.l.b16 %v2889
    %v2922 = vunpack.c.l.b16 %v2890
    %v2923 = vunpack.c.l.b16 %v2891
    %v2924 = vunpack.c.l.b16 %v2892
    %v2925 = vunpack.c.l.b16 %v2893
    %v2926 = vunpack.c.l.b16 %v2894
    %v2927 = vunpack.c.l.b16 %v2895
    %v2928 = vunpack.c.l.b16 %v2896
    %v2929 = vunpack.c.l.b16 %v2897
    %v2930 = vunpack.c.l.b16 %v2898
    %v2931 = vunpack.c.l.b16 %v2899
    %v2932 = vunpack.c.l.b16 %v2900
    %v2933 = vpack.c.b16 %v2918, %v2917
    %v2934 = vpack.c.b16 %v2920, %v2919
    %v2935 = vpack.c.b16 %v2922, %v2921
    %v2936 = vpack.c.b16 %v2924, %v2923
    %v2937 = vpack.c.b16 %v2926, %v2925
    %v2938 = vpack.c.b16 %v2928, %v2927
    %v2939 = vpack.c.b16 %v2930, %v2929
    %v2940 = vpack.c.b16 %v2932, %v2931
    %2949 = vmatprep.subr.bf16.mxu0 0
    %2950 = vmatpush1.bf16.msra.mxu0 %v2933
    %2951 = vmatprep.subr.bf16.mxu0 0
    %2952 = vmatpush1.bf16.msra.mxu0 %v2934
    %2953 = vmatprep.subr.bf16.mxu0 0
    %2954 = vmatpush1.bf16.msra.mxu0 %v2935
    %2955 = vmatprep.subr.bf16.mxu0 0
    %2956 = vmatpush1.bf16.msra.mxu0 %v2936
    %2957 = vmatprep.subr.bf16.mxu0 0
    %2958 = vmatpush1.bf16.msra.mxu0 %v2937
    %2959 = vmatprep.subr.bf16.mxu0 0
    %2960 = vmatpush1.bf16.msra.mxu0 %v2938
    %2961 = vmatprep.subr.bf16.mxu0 0
    %2962 = vmatpush1.bf16.msra.mxu0 %v2939
    %2963 = vmatprep.subr.bf16.mxu0 0
    %2964 = vmatpush1.bf16.msra.mxu0 %v2940
    %2965 = vmatprep.subr.bf16.mxu0 0
    %2966 = vmatpush1.bf16.msra.mxu0 0
    %2967 = vmatprep.subr.bf16.mxu0 0
    %2968 = vmatpush1.bf16.msra.mxu0 0
    %2969 = vmatprep.subr.bf16.mxu0 0
    %2970 = vmatpush1.bf16.msra.mxu0 0
    %2971 = vmatprep.subr.bf16.mxu0 0
    %2972 = vmatpush1.bf16.msra.mxu0 0
    %2973 = vmatprep.subr.bf16.mxu0 0
    %2974 = vmatpush1.bf16.msra.mxu0 0
    %2975 = vmatprep.subr.bf16.mxu0 0
    %2976 = vmatpush1.bf16.msra.mxu0 0
    %2977 = vmatprep.subr.bf16.mxu0 0
    %2978 = vmatpush1.bf16.msra.mxu0 0
    %2979 = vmatprep.subr.bf16.mxu0 0
    %2980 = vmatpush1.bf16.msra.mxu0 0
    %2981 = vmatprep.mubr.bf16.mxu0 0
    %2982 = vmatmul.mubr.bf16.gmra.mrb[0].mxu0 %v2883
    %v2983 = vpop.f32.mrb[0].mxu0
    %v2984 = vadd.f32 0.0, %v2983
    %v2985 = vpop.f32.mrb[0].mxu0
    %v2986 = vpop.f32.mrb[0].mxu0
    %v2987 = vpop.f32.mrb[0].mxu0
    %2988 = vdwg.mxu0
    %v2989 = vadd.f32 %v2878, %v2984
    %v2990 = vpack.c.bf16 %v2671, %v2671
    %s2991 = scalar_lea.vmem %s5, 192
    %v2992 = vld [vmem:[%s2991] sm:$0xf]
    %v2993 = vld [vmem:[%s2991 + $0x4] sm:$0xf]
    %v2994 = vld [vmem:[%s2991 + $0x8] sm:$0xf]
    %v2995 = vld [vmem:[%s2991 + $0xc] sm:$0xf]
    %v2996 = vld [vmem:[%s2991 + $0x10] sm:$0xf]
    %v2997 = vld [vmem:[%s2991 + $0x14] sm:$0xf]
    %v2998 = vld [vmem:[%s2991 + $0x18] sm:$0xf]
    %v2999 = vld [vmem:[%s2991 + $0x1c] sm:$0xf]
    %v3000 = vld [vmem:[%s2991 + $0x20] sm:$0xf]
    %v3001 = vld [vmem:[%s2991 + $0x24] sm:$0xf]
    %v3002 = vld [vmem:[%s2991 + $0x28] sm:$0xf]
    %v3003 = vld [vmem:[%s2991 + $0x2c] sm:$0xf]
    %v3004 = vld [vmem:[%s2991 + $0x30] sm:$0xf]
    %v3005 = vld [vmem:[%s2991 + $0x34] sm:$0xf]
    %v3006 = vld [vmem:[%s2991 + $0x38] sm:$0xf]
    %v3007 = vld [vmem:[%s2991 + $0x3c] sm:$0xf]
    %v3024 = vunpack.c.l.b16 %v2992
    %v3025 = vunpack.c.l.b16 %v2993
    %v3026 = vunpack.c.l.b16 %v2994
    %v3027 = vunpack.c.l.b16 %v2995
    %v3028 = vunpack.c.l.b16 %v2996
    %v3029 = vunpack.c.l.b16 %v2997
    %v3030 = vunpack.c.l.b16 %v2998
    %v3031 = vunpack.c.l.b16 %v2999
    %v3032 = vunpack.c.l.b16 %v3000
    %v3033 = vunpack.c.l.b16 %v3001
    %v3034 = vunpack.c.l.b16 %v3002
    %v3035 = vunpack.c.l.b16 %v3003
    %v3036 = vunpack.c.l.b16 %v3004
    %v3037 = vunpack.c.l.b16 %v3005
    %v3038 = vunpack.c.l.b16 %v3006
    %v3039 = vunpack.c.l.b16 %v3007
    %v3040 = vpack.c.b16 %v3025, %v3024
    %v3041 = vpack.c.b16 %v3027, %v3026
    %v3042 = vpack.c.b16 %v3029, %v3028
    %v3043 = vpack.c.b16 %v3031, %v3030
    %v3044 = vpack.c.b16 %v3033, %v3032
    %v3045 = vpack.c.b16 %v3035, %v3034
    %v3046 = vpack.c.b16 %v3037, %v3036
    %v3047 = vpack.c.b16 %v3039, %v3038
    %3056 = vmatprep.subr.bf16.mxu0 0
    %3057 = vmatpush1.bf16.msra.mxu0 %v3040
    %3058 = vmatprep.subr.bf16.mxu0 0
    %3059 = vmatpush1.bf16.msra.mxu0 %v3041
    %3060 = vmatprep.subr.bf16.mxu0 0
    %3061 = vmatpush1.bf16.msra.mxu0 %v3042
    %3062 = vmatprep.subr.bf16.mxu0 0
    %3063 = vmatpush1.bf16.msra.mxu0 %v3043
    %3064 = vmatprep.subr.bf16.mxu0 0
    %3065 = vmatpush1.bf16.msra.mxu0 %v3044
    %3066 = vmatprep.subr.bf16.mxu0 0
    %3067 = vmatpush1.bf16.msra.mxu0 %v3045
    %3068 = vmatprep.subr.bf16.mxu0 0
    %3069 = vmatpush1.bf16.msra.mxu0 %v3046
    %3070 = vmatprep.subr.bf16.mxu0 0
    %3071 = vmatpush1.bf16.msra.mxu0 %v3047
    %3072 = vmatprep.subr.bf16.mxu0 0
    %3073 = vmatpush1.bf16.msra.mxu0 0
    %3074 = vmatprep.subr.bf16.mxu0 0
    %3075 = vmatpush1.bf16.msra.mxu0 0
    %3076 = vmatprep.subr.bf16.mxu0 0
    %3077 = vmatpush1.bf16.msra.mxu0 0
    %3078 = vmatprep.subr.bf16.mxu0 0
    %3079 = vmatpush1.bf16.msra.mxu0 0
    %3080 = vmatprep.subr.bf16.mxu0 0
    %3081 = vmatpush1.bf16.msra.mxu0 0
    %3082 = vmatprep.subr.bf16.mxu0 0
    %3083 = vmatpush1.bf16.msra.mxu0 0
    %3084 = vmatprep.subr.bf16.mxu0 0
    %3085 = vmatpush1.bf16.msra.mxu0 0
    %3086 = vmatprep.subr.bf16.mxu0 0
    %3087 = vmatpush1.bf16.msra.mxu0 0
    %3088 = vmatprep.mubr.bf16.mxu0 0
    %3089 = vmatmul.mubr.bf16.gmra.mrb[0].mxu0 %v2990
    %v3090 = vpop.f32.mrb[0].mxu0
    %v3091 = vadd.f32 0.0, %v3090
    %v3092 = vpop.f32.mrb[0].mxu0
    %v3093 = vpop.f32.mrb[0].mxu0
    %v3094 = vpop.f32.mrb[0].mxu0
    %3095 = vdwg.mxu0
    %v3096 = vadd.f32 %v2989, %v3091
    %v3097 = vlaneseq
    %v3098 = vshrl.u32 %v3097, 7
    %v3099 = vsub.s32 2, %v3098
    %v3100 = vrot.slane %v56, %v3099
    %v3101 = vadd.f32 %v3096, %v3100
    %v3102 = vmax.f32 %v3101, 0.0
    %v3103 = vpack.c.bf16 %v3102, %v3102
    %s3104 = scalar_lea.vmem %s5, 256
    %v3105 = vld [vmem:[%s3104] sm:$0xf]
    %v3106 = vld [vmem:[%s3104 + $0x4] sm:$0xf]
    %v3107 = vld [vmem:[%s3104 + $0x8] sm:$0xf]
    %v3108 = vld [vmem:[%s3104 + $0xc] sm:$0xf]
    %v3109 = vld [vmem:[%s3104 + $0x10] sm:$0xf]
    %v3110 = vld [vmem:[%s3104 + $0x14] sm:$0xf]
    %v3111 = vld [vmem:[%s3104 + $0x18] sm:$0xf]
    %v3112 = vld [vmem:[%s3104 + $0x1c] sm:$0xf]
    %v3113 = vld [vmem:[%s3104 + $0x20] sm:$0xf]
    %v3114 = vld [vmem:[%s3104 + $0x24] sm:$0xf]
    %v3115 = vld [vmem:[%s3104 + $0x28] sm:$0xf]
    %v3116 = vld [vmem:[%s3104 + $0x2c] sm:$0xf]
    %v3117 = vld [vmem:[%s3104 + $0x30] sm:$0xf]
    %v3118 = vld [vmem:[%s3104 + $0x34] sm:$0xf]
    %v3119 = vld [vmem:[%s3104 + $0x38] sm:$0xf]
    %v3120 = vld [vmem:[%s3104 + $0x3c] sm:$0xf]
    %v3121 = vlaneseq
    %v3122 = vshrl.u32 %v3121, 7
    %v3123 = vsub.s32 3, %v3122
    %v3124 = vrot.slane %v56, %v3123
    %v3141 = vunpack.c.l.b16 %v3105
    %v3142 = vunpack.c.l.b16 %v3106
    %v3143 = vunpack.c.l.b16 %v3107
    %v3144 = vunpack.c.l.b16 %v3108
    %v3145 = vunpack.c.l.b16 %v3109
    %v3146 = vunpack.c.l.b16 %v3110
    %v3147 = vunpack.c.l.b16 %v3111
    %v3148 = vunpack.c.l.b16 %v3112
    %v3149 = vunpack.c.l.b16 %v3113
    %v3150 = vunpack.c.l.b16 %v3114
    %v3151 = vunpack.c.l.b16 %v3115
    %v3152 = vunpack.c.l.b16 %v3116
    %v3153 = vunpack.c.l.b16 %v3117
    %v3154 = vunpack.c.l.b16 %v3118
    %v3155 = vunpack.c.l.b16 %v3119
    %v3156 = vunpack.c.l.b16 %v3120
    %v3157 = vpack.c.b16 %v3142, %v3141
    %v3158 = vpack.c.b16 %v3144, %v3143
    %v3159 = vpack.c.b16 %v3146, %v3145
    %v3160 = vpack.c.b16 %v3148, %v3147
    %v3161 = vpack.c.b16 %v3150, %v3149
    %v3162 = vpack.c.b16 %v3152, %v3151
    %v3163 = vpack.c.b16 %v3154, %v3153
    %v3164 = vpack.c.b16 %v3156, %v3155
    %3173 = vmatprep.subr.bf16.mxu0 0
    %3174 = vmatpush1.bf16.msra.mxu0 %v3157
    %3175 = vmatprep.subr.bf16.mxu0 0
    %3176 = vmatpush1.bf16.msra.mxu0 %v3158
    %3177 = vmatprep.subr.bf16.mxu0 0
    %3178 = vmatpush1.bf16.msra.mxu0 %v3159
    %3179 = vmatprep.subr.bf16.mxu0 0
    %3180 = vmatpush1.bf16.msra.mxu0 %v3160
    %3181 = vmatprep.subr.bf16.mxu0 0
    %3182 = vmatpush1.bf16.msra.mxu0 %v3161
    %3183 = vmatprep.subr.bf16.mxu0 0
    %3184 = vmatpush1.bf16.msra.mxu0 %v3162
    %3185 = vmatprep.subr.bf16.mxu0 0
    %3186 = vmatpush1.bf16.msra.mxu0 %v3163
    %3187 = vmatprep.subr.bf16.mxu0 0
    %3188 = vmatpush1.bf16.msra.mxu0 %v3164
    %3189 = vmatprep.subr.bf16.mxu0 0
    %3190 = vmatpush1.bf16.msra.mxu0 0
    %3191 = vmatprep.subr.bf16.mxu0 0
    %3192 = vmatpush1.bf16.msra.mxu0 0
    %3193 = vmatprep.subr.bf16.mxu0 0
    %3194 = vmatpush1.bf16.msra.mxu0 0
    %3195 = vmatprep.subr.bf16.mxu0 0
    %3196 = vmatpush1.bf16.msra.mxu0 0
    %3197 = vmatprep.subr.bf16.mxu0 0
    %3198 = vmatpush1.bf16.msra.mxu0 0
    %3199 = vmatprep.subr.bf16.mxu0 0
    %3200 = vmatpush1.bf16.msra.mxu0 0
    %3201 = vmatprep.subr.bf16.mxu0 0
    %3202 = vmatpush1.bf16.msra.mxu0 0
    %3203 = vmatprep.subr.bf16.mxu0 0
    %3204 = vmatpush1.bf16.msra.mxu0 0
    %3205 = vmatprep.mubr.bf16.mxu0 0
    %3206 = vmatmul.mubr.bf16.gmra.mrb[0].mxu0 %v3103
    %v3207 = vpop.f32.mrb[0].mxu0
    %v3208 = vadd.f32 %v3124, %v3207
    %v3209 = vpop.f32.mrb[0].mxu0
    %v3210 = vpop.f32.mrb[0].mxu0
    %v3211 = vpop.f32.mrb[0].mxu0
    %3212 = vdwg.mxu0
    %vm3213 = vcmask 74752
    %v3214 = vsel %vm3213, %v3208, -inf
    %3215 = vmax.xlane.f32.xlu0 %v3214
    %v3216 = vpop.xlane.xlu0 %3215
    %v3217 = vsub.f32 %v3208, %v3216
    %v3218 = vmul.f32 %v3217, 1.442695
    %v3219 = vpow.pop %v3218
    %v3220 = vsel %vm3213, %v3219, 0.0
    %3221 = vadd.xlane.f32.xlu0 %v3220
    %v3222 = vpop.xlane.xlu0 %3221
    %v3223 = vlog2.pop %v3222
    %v3224 = vmul.f32 %v3223, 0.6931472
    %v3225 = vadd.f32 %v3216, %v3224
    %v3226 = vsub.f32 %v3208, %v3225
    %3227 = vst.msk [vmem:[#allocation7] sm:$0x3] %vm3213, %v3226
    // Predicated region
    $region38: #{_net_forward_impl.1} parent=1 // pred_check
      _
    $region39: #{_net_forward_impl.1} parent=1 // pred_check_branch
      %3229 = sbr.rel (0) target = $region41
    $region40: #{_net_forward_impl.1} parent=1 // pred_region
      %s3231 = ssub.s32 32, 32
      %3232 = vsyncadd [#allocation4], %s3231
      %s3234 = sshll.u32 [#allocation7], 4
      %s3235 = int_to_ptr.vmem [resolvable:$true] %s3234
      %3237 = dma.vmem_to_hbm [thread:$0]  %s3235, 32, %s7, [#allocation4]
    $region41: #{_net_forward_impl.1} parent=1 // pred_fallthru
      _
    // Predicated region
    $region42: #{_net_forward_impl.1} parent=1 // pred_check
      _
    $region43: #{_net_forward_impl.1} parent=1 // pred_check_branch
      %3239 = sbr.rel (0) target = $region45
    $region44: #{_net_forward_impl.1} parent=1 // pred_region
      %3240 = dma.done [#allocation4], 32
    $region45: #{_net_forward_impl.1} parent=1 // pred_fallthru
      _
    %3241 = vsyncpa [#allocation3], 1
    %3242 = vsyncpa [#allocation6], 1
    %3243 = vsyncpa [#allocation4], 1

</llo_original>
